<compile_context>
chip_gen: v7x
topology: tpu7x:2x2x1
jax: 0.10.0
libtpu: 0.0.40
codegen_flags: <defaults>
</compile_context>

<pallas_src>
import jax
import jax.numpy as jnp
from jax.experimental import pallas as pl
from jax.experimental.pallas import tpu as pltpu


def basic_block_kernel(x_ref, w1_ref, b1_ref, w2_ref, b2_ref, o_ref, pbuf_ref):
    # x_ref  : (1, H, W, C)      f32  unpadded NHWC input (also the residual)
    # w1/w2  : (3, 3*C, C)       bf16 per-kh weights, kw taps stacked along K,
    #                                 BN scale pre-folded into output channels
    # b1/b2  : (1, C)            f32  folded BN bias
    # o_ref  : (1, H, W, C)      f32  output image (unpadded channels)
    # pbuf_ref: VMEM (3, H+2, Wp, C) bf16 — group g holds the zero-padded conv
    #           input shifted left by g columns: pbuf[g, i, j] == Ppad[i, j+g].
    _, H, W, C = x_ref.shape
    Wp = pbuf_ref.shape[2]
    K = 3 * C

    # --- zero only the cells the fills never overwrite (done every step so
    #     each grid point is independent / megacore-safe) ---
    zrow = jnp.zeros((1, Wp, C), jnp.bfloat16)
    zcol = jnp.zeros((H, 1, C), jnp.bfloat16)
    for g in range(3):
        pbuf_ref[g, 0:1, :, :] = zrow              # top halo row
        pbuf_ref[g, H + 1:H + 2, :, :] = zrow      # bottom halo row
    pbuf_ref[0, 1:1 + H, 0:1, :] = zcol            # left edge of kw=0 group
    pbuf_ref[2, 1:1 + H, W - 1:W, :] = zcol        # right edge of kw=2 group

    def fill(img):
        # img: (H, W, C) bf16.  Full-width stores only (one tiny column slice
        # for the kw=2 group); interior of every read cell is overwritten.
        pbuf_ref[0, 1:1 + H, 1:1 + W, :] = img             # shift right by 1
        pbuf_ref[1, 1:1 + H, 0:W, :] = img                 # aligned
        pbuf_ref[2, 1:1 + H, 0:W - 1, :] = img[:, 1:W, :]  # shift left by 1

    def conv3x3(w_ref):
        # One MXU matmul per kernel row kh: LHS (H*W, 3C) is built from three
        # contiguous leading-axis slices of pbuf (no shifted patch copies),
        # RHS (3C, C) has the three kw taps concatenated along K.
        # Partials are accumulated as values (no VMEM accumulator RMW).
        acc = None
        for kh in range(3):
            lhs = jnp.concatenate(
                [pbuf_ref[0, kh:kh + H, 0:W, :],
                 pbuf_ref[1, kh:kh + H, 0:W, :],
                 pbuf_ref[2, kh:kh + H, 0:W, :]],
                axis=-1).reshape(H * W, K)
            part = jnp.dot(lhs, w_ref[kh],
                           preferred_element_type=jnp.float32)
            acc = part if acc is None else acc + part
        return acc                                          # (H*W, C) f32

    x = x_ref[0]                                            # (H, W, C) f32

    # ---- conv1 (BN1 scale folded into w1) -> +bias -> relu ----
    fill(x.astype(jnp.bfloat16))
    y1 = jnp.maximum(conv3x3(w1_ref) + b1_ref[0], 0.0)      # (H*W, C) f32

    # ---- conv2 (BN2 scale folded into w2) -> +bias -> +identity -> relu ----
    fill(y1.reshape(H, W, C).astype(jnp.bfloat16))
    y2 = conv3x3(w2_ref) + b2_ref[0]
    out = jnp.maximum(y2 + x.reshape(H * W, C), 0.0)        # exact f32 residual
    o_ref[0] = out.reshape(H, W, C).astype(o_ref.dtype)


def basic_block(x_nchw, w1_oihw, scale1, bias1, w2_oihw, scale2, bias2):
    """Pallas BasicBlock forward. x_nchw: (N, C, H, W) float32; returns NCHW.

    For repeated blocks, pre-pack the weights once (prep_w below) and keep
    activations NHWC end-to-end — the NCHW<->NHWC transposes here exist only
    to match the PyTorch interface.
    """
    N, C, H, W = x_nchw.shape
    assert w1_oihw.shape[0] == C and w2_oihw.shape[0] == C, \
        "downsample=None requires inplanes == planes"
    Wp = ((W + 2 + 7) // 8) * 8          # scratch column extent (sublane-friendly)

    x = jnp.transpose(x_nchw, (0, 2, 3, 1)).astype(jnp.float32)   # NHWC, no pad

    def prep_w(w_oihw, scale):
        # OIHW -> HWIO, fold BN scale into output channels, stack the three kw
        # taps along the contraction dim: (3, 3*C, C), bf16 for the MXU.
        w = jnp.transpose(w_oihw, (2, 3, 1, 0)).astype(jnp.float32)
        w = w * scale.astype(jnp.float32)[None, None, None, :]
        return w.reshape(3, 3 * C, C).astype(jnp.bfloat16)

    w1 = prep_w(w1_oihw, scale1)
    w2 = prep_w(w2_oihw, scale2)
    b1 = bias1.astype(jnp.float32).reshape(1, C)
    b2 = bias2.astype(jnp.float32).reshape(1, C)

    cost = pl.CostEstimate(
        flops=int(2 * 2 * N * H * W * 9 * C * C),             # two 3x3 convs
        transcendentals=0,
        bytes_accessed=int(2 * x.size * 4 + (w1.size + w2.size) * 2
                           + (b1.size + b2.size) * 4),
    )

    out_nhwc = pl.pallas_call(
        basic_block_kernel,
        out_shape=jax.ShapeDtypeStruct((N, H, W, C), jnp.float32),
        grid_spec=pltpu.PrefetchScalarGridSpec(
            num_scalar_prefetch=0,
            grid=(N,),
            in_specs=[
                pl.BlockSpec((1, H, W, C), lambda n: (n, 0, 0, 0)),
                pl.BlockSpec((3, 3 * C, C), lambda n: (0, 0, 0)),
                pl.BlockSpec((1, C), lambda n: (0, 0)),
                pl.BlockSpec((3, 3 * C, C), lambda n: (0, 0, 0)),
                pl.BlockSpec((1, C), lambda n: (0, 0)),
            ],
            out_specs=pl.BlockSpec((1, H, W, C), lambda n: (n, 0, 0, 0)),
            scratch_shapes=[
                pltpu.VMEM((3, H + 2, Wp, C), jnp.bfloat16),  # kw-group buffer
            ],
        ),
        compiler_params=pltpu.CompilerParams(
            dimension_semantics=("parallel",)),
        cost_estimate=cost,
    )(x, w1, b1, w2, b2)

    return jnp.transpose(out_nhwc, (0, 3, 1, 2))              # back to NCHW


def ref_forward(x, w1, s1, b1, w2, s2, b2):
    """Pure-JAX f32 reference (NCHW) of the same BasicBlock forward."""
    dn = ('NCHW', 'OIHW', 'NCHW')
    y = jax.lax.conv_general_dilated(x, w1, (1, 1), ((1, 1), (1, 1)),
                                     dimension_numbers=dn)
    y = y * s1[None, :, None, None] + b1[None, :, None, None]
    y = jnp.maximum(y, 0.0)
    y = jax.lax.conv_general_dilated(y, w2, (1, 1), ((1, 1), (1, 1)),
                                     dimension_numbers=dn)
    y = y * s2[None, :, None, None] + b2[None, :, None, None]
    return jnp.maximum(y + x, 0.0)


if __name__ == "__main__":
    key = jax.random.PRNGKey(0)
    ks = jax.random.split(key, 8)

    N, C, H, W = 2, 8, 16, 16          # inplanes == planes == 8, stride 1
    eps = 1e-5

    x = jax.random.normal(ks[0], (N, C, H, W), jnp.float32)

    # conv weights (PyTorch OIHW layout), deterministic init
    w1 = jax.random.normal(ks[1], (C, C, 3, 3), jnp.float32) * 0.1
    w2 = jax.random.normal(ks[2], (C, C, 3, 3), jnp.float32) * 0.1

    # BatchNorm parameters + running stats (eval-mode semantics)
    gamma1 = 1.0 + 0.1 * jax.random.normal(ks[3], (C,), jnp.float32)
    beta1  = 0.1 * jax.random.normal(ks[4], (C,), jnp.float32)
    rmean1 = 0.05 * jax.random.normal(ks[5], (C,), jnp.float32)
    rvar1  = 1.0 + 0.1 * jnp.abs(jax.random.normal(ks[6], (C,), jnp.float32))
    gamma2 = 1.0 + 0.05 * jnp.arange(C, dtype=jnp.float32)
    beta2  = 0.02 * jnp.arange(C, dtype=jnp.float32)
    rmean2 = jnp.zeros((C,), jnp.float32)
    rvar2  = jnp.ones((C,), jnp.float32)

    # fold BN into per-channel scale/bias
    s1 = gamma1 / jnp.sqrt(rvar1 + eps)
    b1 = beta1 - rmean1 * s1
    s2 = gamma2 / jnp.sqrt(rvar2 + eps)
    b2 = beta2 - rmean2 * s2

    out = jax.jit(basic_block)(x, w1, s1, b1, w2, s2, b2)
    out = jax.block_until_ready(out)

    ref = ref_forward(x, w1, s1, b1, w2, s2, b2)
    assert out.shape == (N, C, H, W)
    # bf16 MXU inputs with f32 accumulation -> loosen tolerance vs f32 reference
    assert jnp.allclose(out, ref, atol=5e-2, rtol=5e-2), \
        f"max abs err {jnp.max(jnp.abs(out - ref))}"

    print("KERNEL_OK")
</pallas_src>

<mosaic_0001>
module attributes {stable_mosaic.version = 11 : i64} {
  func.func @basic_block_kernel(%arg0: i32, %arg1: memref<1x16x16x8xf32, #tpu.memory_space<vmem>>, %arg2: memref<3x24x8xbf16, #tpu.memory_space<vmem>>, %arg3: memref<1x8xf32, #tpu.memory_space<vmem>>, %arg4: memref<3x24x8xbf16, #tpu.memory_space<vmem>>, %arg5: memref<1x8xf32, #tpu.memory_space<vmem>>, %arg6: memref<1x16x16x8xf32, #tpu.memory_space<vmem>>, %arg7: memref<3x18x24x8xbf16, #tpu.memory_space<vmem>>) attributes {dimension_semantics = [#tpu.dimension_semantics<parallel>], iteration_bounds = array<i64: 2>, scalar_prefetch = 0 : i64, scratch_operands = 1 : i64, tpu.core_type = #tpu.core_type<tc>, window_params = [{transform_indices = @transform_0, window_bounds = array<i64: 1, 16, 16, 8>}, {pipeline_mode = #tpu.pipeline_mode<synchronous>, transform_indices = @transform_1, window_bounds = array<i64: 3, 24, 8>}, {pipeline_mode = #tpu.pipeline_mode<synchronous>, transform_indices = @transform_2, window_bounds = array<i64: 1, 8>}, {pipeline_mode = #tpu.pipeline_mode<synchronous>, transform_indices = @transform_3, window_bounds = array<i64: 3, 24, 8>}, {pipeline_mode = #tpu.pipeline_mode<synchronous>, transform_indices = @transform_4, window_bounds = array<i64: 1, 8>}, {transform_indices = @transform_5, window_bounds = array<i64: 1, 16, 16, 8>}]} {
    %cst = arith.constant 0.000000e+00 : bf16
    %0 = vector.broadcast %cst : bf16 to vector<1x24x8xbf16>
    %cst_0 = arith.constant 0.000000e+00 : bf16
    %1 = vector.broadcast %cst_0 : bf16 to vector<16x1x8xbf16>
    %c0 = arith.constant 0 : index
    %c0_1 = arith.constant 0 : index
    %c0_2 = arith.constant 0 : index
    %c0_3 = arith.constant 0 : index
    %2 = vector.load %arg7[%c0, %c0_1, %c0_2, %c0_3] : memref<3x18x24x8xbf16, #tpu.memory_space<vmem>>, vector<1x1x24x8xbf16>
    %3 = vector.shape_cast %2 : vector<1x1x24x8xbf16> to vector<1x24x8xbf16>
    %4 = vector.shape_cast %0 : vector<1x24x8xbf16> to vector<1x1x24x8xbf16>
    tpu.vector_store %arg7[%c0, %c0_1, %c0_2, %c0_3], %4 {strides = array<i32>} : memref<3x18x24x8xbf16, #tpu.memory_space<vmem>>, vector<1x1x24x8xbf16>,
    %c0_4 = arith.constant 0 : index
    %c17 = arith.constant 17 : index
    %c0_5 = arith.constant 0 : index
    %c0_6 = arith.constant 0 : index
    %5 = vector.load %arg7[%c0_4, %c17, %c0_5, %c0_6] : memref<3x18x24x8xbf16, #tpu.memory_space<vmem>>, vector<1x1x24x8xbf16>
    %6 = vector.shape_cast %5 : vector<1x1x24x8xbf16> to vector<1x24x8xbf16>
    %7 = vector.shape_cast %0 : vector<1x24x8xbf16> to vector<1x1x24x8xbf16>
    tpu.vector_store %arg7[%c0_4, %c17, %c0_5, %c0_6], %7 {strides = array<i32>} : memref<3x18x24x8xbf16, #tpu.memory_space<vmem>>, vector<1x1x24x8xbf16>,
    %c1 = arith.constant 1 : index
    %c0_7 = arith.constant 0 : index
    %c0_8 = arith.constant 0 : index
    %c0_9 = arith.constant 0 : index
    %8 = vector.load %arg7[%c1, %c0_7, %c0_8, %c0_9] : memref<3x18x24x8xbf16, #tpu.memory_space<vmem>>, vector<1x1x24x8xbf16>
    %9 = vector.shape_cast %8 : vector<1x1x24x8xbf16> to vector<1x24x8xbf16>
    %10 = vector.shape_cast %0 : vector<1x24x8xbf16> to vector<1x1x24x8xbf16>
    tpu.vector_store %arg7[%c1, %c0_7, %c0_8, %c0_9], %10 {strides = array<i32>} : memref<3x18x24x8xbf16, #tpu.memory_space<vmem>>, vector<1x1x24x8xbf16>,
    %c1_10 = arith.constant 1 : index
    %c17_11 = arith.constant 17 : index
    %c0_12 = arith.constant 0 : index
    %c0_13 = arith.constant 0 : index
    %11 = vector.load %arg7[%c1_10, %c17_11, %c0_12, %c0_13] : memref<3x18x24x8xbf16, #tpu.memory_space<vmem>>, vector<1x1x24x8xbf16>
    %12 = vector.shape_cast %11 : vector<1x1x24x8xbf16> to vector<1x24x8xbf16>
    %13 = vector.shape_cast %0 : vector<1x24x8xbf16> to vector<1x1x24x8xbf16>
    tpu.vector_store %arg7[%c1_10, %c17_11, %c0_12, %c0_13], %13 {strides = array<i32>} : memref<3x18x24x8xbf16, #tpu.memory_space<vmem>>, vector<1x1x24x8xbf16>,
    %c2 = arith.constant 2 : index
    %c0_14 = arith.constant 0 : index
    %c0_15 = arith.constant 0 : index
    %c0_16 = arith.constant 0 : index
    %14 = vector.load %arg7[%c2, %c0_14, %c0_15, %c0_16] : memref<3x18x24x8xbf16, #tpu.memory_space<vmem>>, vector<1x1x24x8xbf16>
    %15 = vector.shape_cast %14 : vector<1x1x24x8xbf16> to vector<1x24x8xbf16>
    %16 = vector.shape_cast %0 : vector<1x24x8xbf16> to vector<1x1x24x8xbf16>
    tpu.vector_store %arg7[%c2, %c0_14, %c0_15, %c0_16], %16 {strides = array<i32>} : memref<3x18x24x8xbf16, #tpu.memory_space<vmem>>, vector<1x1x24x8xbf16>,
    %c2_17 = arith.constant 2 : index
    %c17_18 = arith.constant 17 : index
    %c0_19 = arith.constant 0 : index
    %c0_20 = arith.constant 0 : index
    %17 = vector.load %arg7[%c2_17, %c17_18, %c0_19, %c0_20] : memref<3x18x24x8xbf16, #tpu.memory_space<vmem>>, vector<1x1x24x8xbf16>
    %18 = vector.shape_cast %17 : vector<1x1x24x8xbf16> to vector<1x24x8xbf16>
    %19 = vector.shape_cast %0 : vector<1x24x8xbf16> to vector<1x1x24x8xbf16>
    tpu.vector_store %arg7[%c2_17, %c17_18, %c0_19, %c0_20], %19 {strides = array<i32>} : memref<3x18x24x8xbf16, #tpu.memory_space<vmem>>, vector<1x1x24x8xbf16>,
    %c0_21 = arith.constant 0 : index
    %c1_22 = arith.constant 1 : index
    %c0_23 = arith.constant 0 : index
    %c0_24 = arith.constant 0 : index
    %20 = vector.load %arg7[%c0_21, %c1_22, %c0_23, %c0_24] : memref<3x18x24x8xbf16, #tpu.memory_space<vmem>>, vector<1x16x1x8xbf16>
    %21 = vector.shape_cast %20 : vector<1x16x1x8xbf16> to vector<16x1x8xbf16>
    %22 = vector.shape_cast %1 : vector<16x1x8xbf16> to vector<1x16x1x8xbf16>
    tpu.vector_store %arg7[%c0_21, %c1_22, %c0_23, %c0_24], %22 {strides = array<i32>} : memref<3x18x24x8xbf16, #tpu.memory_space<vmem>>, vector<1x16x1x8xbf16>,
    %c2_25 = arith.constant 2 : index
    %c1_26 = arith.constant 1 : index
    %c15 = arith.constant 15 : index
    %c0_27 = arith.constant 0 : index
    %23 = vector.load %arg7[%c2_25, %c1_26, %c15, %c0_27] : memref<3x18x24x8xbf16, #tpu.memory_space<vmem>>, vector<1x16x1x8xbf16>
    %24 = vector.shape_cast %23 : vector<1x16x1x8xbf16> to vector<16x1x8xbf16>
    %25 = vector.shape_cast %1 : vector<16x1x8xbf16> to vector<1x16x1x8xbf16>
    tpu.vector_store %arg7[%c2_25, %c1_26, %c15, %c0_27], %25 {strides = array<i32>} : memref<3x18x24x8xbf16, #tpu.memory_space<vmem>>, vector<1x16x1x8xbf16>,
    %c0_28 = arith.constant 0 : index
    %c0_29 = arith.constant 0 : index
    %c0_30 = arith.constant 0 : index
    %c0_31 = arith.constant 0 : index
    %26 = vector.load %arg1[%c0_28, %c0_29, %c0_30, %c0_31] : memref<1x16x16x8xf32, #tpu.memory_space<vmem>>, vector<1x16x16x8xf32>
    %27 = vector.shape_cast %26 : vector<1x16x16x8xf32> to vector<16x16x8xf32>
    %28 = arith.truncf %27 : vector<16x16x8xf32> to vector<16x16x8xbf16>
    %c0_32 = arith.constant 0 : index
    %c1_33 = arith.constant 1 : index
    %c1_34 = arith.constant 1 : index
    %c0_35 = arith.constant 0 : index
    %29 = vector.load %arg7[%c0_32, %c1_33, %c1_34, %c0_35] : memref<3x18x24x8xbf16, #tpu.memory_space<vmem>>, vector<1x16x16x8xbf16>
    %30 = vector.shape_cast %29 : vector<1x16x16x8xbf16> to vector<16x16x8xbf16>
    %31 = vector.shape_cast %28 : vector<16x16x8xbf16> to vector<1x16x16x8xbf16>
    tpu.vector_store %arg7[%c0_32, %c1_33, %c1_34, %c0_35], %31 {strides = array<i32>} : memref<3x18x24x8xbf16, #tpu.memory_space<vmem>>, vector<1x16x16x8xbf16>,
    %c1_36 = arith.constant 1 : index
    %c1_37 = arith.constant 1 : index
    %c0_38 = arith.constant 0 : index
    %c0_39 = arith.constant 0 : index
    %32 = vector.load %arg7[%c1_36, %c1_37, %c0_38, %c0_39] : memref<3x18x24x8xbf16, #tpu.memory_space<vmem>>, vector<1x16x16x8xbf16>
    %33 = vector.shape_cast %32 : vector<1x16x16x8xbf16> to vector<16x16x8xbf16>
    %34 = vector.shape_cast %28 : vector<16x16x8xbf16> to vector<1x16x16x8xbf16>
    tpu.vector_store %arg7[%c1_36, %c1_37, %c0_38, %c0_39], %34 {strides = array<i32>} : memref<3x18x24x8xbf16, #tpu.memory_space<vmem>>, vector<1x16x16x8xbf16>,
    %35 = vector.extract_strided_slice %28 {offsets = [0, 1, 0], sizes = [16, 15, 8], strides = [1, 1, 1]} : vector<16x16x8xbf16> to vector<16x15x8xbf16>
    %c2_40 = arith.constant 2 : index
    %c1_41 = arith.constant 1 : index
    %c0_42 = arith.constant 0 : index
    %c0_43 = arith.constant 0 : index
    %36 = vector.load %arg7[%c2_40, %c1_41, %c0_42, %c0_43] : memref<3x18x24x8xbf16, #tpu.memory_space<vmem>>, vector<1x16x15x8xbf16>
    %37 = vector.shape_cast %36 : vector<1x16x15x8xbf16> to vector<16x15x8xbf16>
    %38 = vector.shape_cast %35 : vector<16x15x8xbf16> to vector<1x16x15x8xbf16>
    tpu.vector_store %arg7[%c2_40, %c1_41, %c0_42, %c0_43], %38 {strides = array<i32>} : memref<3x18x24x8xbf16, #tpu.memory_space<vmem>>, vector<1x16x15x8xbf16>,
    %c0_44 = arith.constant 0 : index
    %c0_45 = arith.constant 0 : index
    %c0_46 = arith.constant 0 : index
    %c0_47 = arith.constant 0 : index
    %39 = vector.load %arg7[%c0_44, %c0_45, %c0_46, %c0_47] : memref<3x18x24x8xbf16, #tpu.memory_space<vmem>>, vector<1x16x16x8xbf16>
    %40 = vector.shape_cast %39 : vector<1x16x16x8xbf16> to vector<16x16x8xbf16>
    %c1_48 = arith.constant 1 : index
    %c0_49 = arith.constant 0 : index
    %c0_50 = arith.constant 0 : index
    %c0_51 = arith.constant 0 : index
    %41 = vector.load %arg7[%c1_48, %c0_49, %c0_50, %c0_51] : memref<3x18x24x8xbf16, #tpu.memory_space<vmem>>, vector<1x16x16x8xbf16>
    %42 = vector.shape_cast %41 : vector<1x16x16x8xbf16> to vector<16x16x8xbf16>
    %c2_52 = arith.constant 2 : index
    %c0_53 = arith.constant 0 : index
    %c0_54 = arith.constant 0 : index
    %c0_55 = arith.constant 0 : index
    %43 = vector.load %arg7[%c2_52, %c0_53, %c0_54, %c0_55] : memref<3x18x24x8xbf16, #tpu.memory_space<vmem>>, vector<1x16x16x8xbf16>
    %44 = vector.shape_cast %43 : vector<1x16x16x8xbf16> to vector<16x16x8xbf16>
    %45 = tpu.concatenate %40, %42, %44 in 2 : vector<16x16x8xbf16>, vector<16x16x8xbf16>, vector<16x16x8xbf16> -> vector<16x16x24xbf16>
    %46 = vector.shape_cast %45 : vector<16x16x24xbf16> to vector<256x24xbf16>
    %c0_56 = arith.constant 0 : index
    %c0_57 = arith.constant 0 : index
    %c0_58 = arith.constant 0 : index
    %47 = vector.load %arg2[%c0_56, %c0_57, %c0_58] : memref<3x24x8xbf16, #tpu.memory_space<vmem>>, vector<1x24x8xbf16>
    %48 = vector.shape_cast %47 : vector<1x24x8xbf16> to vector<24x8xbf16>
    %cst_59 = arith.constant dense<0.000000e+00> : vector<256x8xf32>
    %49 = tpu.matmul %46, %48, %cst_59 {dimension_numbers = #tpu.dot_dimension_numbers<[1], [0], [0], [1], [0, 0, 1, 1], [], []>} : vector<256x24xbf16>, vector<24x8xbf16>, vector<256x8xf32> -> vector<256x8xf32>
    %c0_60 = arith.constant 0 : index
    %c1_61 = arith.constant 1 : index
    %c0_62 = arith.constant 0 : index
    %c0_63 = arith.constant 0 : index
    %50 = vector.load %arg7[%c0_60, %c1_61, %c0_62, %c0_63] : memref<3x18x24x8xbf16, #tpu.memory_space<vmem>>, vector<1x16x16x8xbf16>
    %51 = vector.shape_cast %50 : vector<1x16x16x8xbf16> to vector<16x16x8xbf16>
    %c1_64 = arith.constant 1 : index
    %c1_65 = arith.constant 1 : index
    %c0_66 = arith.constant 0 : index
    %c0_67 = arith.constant 0 : index
    %52 = vector.load %arg7[%c1_64, %c1_65, %c0_66, %c0_67] : memref<3x18x24x8xbf16, #tpu.memory_space<vmem>>, vector<1x16x16x8xbf16>
    %53 = vector.shape_cast %52 : vector<1x16x16x8xbf16> to vector<16x16x8xbf16>
    %c2_68 = arith.constant 2 : index
    %c1_69 = arith.constant 1 : index
    %c0_70 = arith.constant 0 : index
    %c0_71 = arith.constant 0 : index
    %54 = vector.load %arg7[%c2_68, %c1_69, %c0_70, %c0_71] : memref<3x18x24x8xbf16, #tpu.memory_space<vmem>>, vector<1x16x16x8xbf16>
    %55 = vector.shape_cast %54 : vector<1x16x16x8xbf16> to vector<16x16x8xbf16>
    %56 = tpu.concatenate %51, %53, %55 in 2 : vector<16x16x8xbf16>, vector<16x16x8xbf16>, vector<16x16x8xbf16> -> vector<16x16x24xbf16>
    %57 = vector.shape_cast %56 : vector<16x16x24xbf16> to vector<256x24xbf16>
    %c1_72 = arith.constant 1 : index
    %c0_73 = arith.constant 0 : index
    %c0_74 = arith.constant 0 : index
    %58 = vector.load %arg2[%c1_72, %c0_73, %c0_74] : memref<3x24x8xbf16, #tpu.memory_space<vmem>>, vector<1x24x8xbf16>
    %59 = vector.shape_cast %58 : vector<1x24x8xbf16> to vector<24x8xbf16>
    %cst_75 = arith.constant dense<0.000000e+00> : vector<256x8xf32>
    %60 = tpu.matmul %57, %59, %cst_75 {dimension_numbers = #tpu.dot_dimension_numbers<[1], [0], [0], [1], [0, 0, 1, 1], [], []>} : vector<256x24xbf16>, vector<24x8xbf16>, vector<256x8xf32> -> vector<256x8xf32>
    %61 = arith.addf %49, %60 : vector<256x8xf32>
    %c0_76 = arith.constant 0 : index
    %c2_77 = arith.constant 2 : index
    %c0_78 = arith.constant 0 : index
    %c0_79 = arith.constant 0 : index
    %62 = vector.load %arg7[%c0_76, %c2_77, %c0_78, %c0_79] : memref<3x18x24x8xbf16, #tpu.memory_space<vmem>>, vector<1x16x16x8xbf16>
    %63 = vector.shape_cast %62 : vector<1x16x16x8xbf16> to vector<16x16x8xbf16>
    %c1_80 = arith.constant 1 : index
    %c2_81 = arith.constant 2 : index
    %c0_82 = arith.constant 0 : index
    %c0_83 = arith.constant 0 : index
    %64 = vector.load %arg7[%c1_80, %c2_81, %c0_82, %c0_83] : memref<3x18x24x8xbf16, #tpu.memory_space<vmem>>, vector<1x16x16x8xbf16>
    %65 = vector.shape_cast %64 : vector<1x16x16x8xbf16> to vector<16x16x8xbf16>
    %c2_84 = arith.constant 2 : index
    %c2_85 = arith.constant 2 : index
    %c0_86 = arith.constant 0 : index
    %c0_87 = arith.constant 0 : index
    %66 = vector.load %arg7[%c2_84, %c2_85, %c0_86, %c0_87] : memref<3x18x24x8xbf16, #tpu.memory_space<vmem>>, vector<1x16x16x8xbf16>
    %67 = vector.shape_cast %66 : vector<1x16x16x8xbf16> to vector<16x16x8xbf16>
    %68 = tpu.concatenate %63, %65, %67 in 2 : vector<16x16x8xbf16>, vector<16x16x8xbf16>, vector<16x16x8xbf16> -> vector<16x16x24xbf16>
    %69 = vector.shape_cast %68 : vector<16x16x24xbf16> to vector<256x24xbf16>
    %c2_88 = arith.constant 2 : index
    %c0_89 = arith.constant 0 : index
    %c0_90 = arith.constant 0 : index
    %70 = vector.load %arg2[%c2_88, %c0_89, %c0_90] : memref<3x24x8xbf16, #tpu.memory_space<vmem>>, vector<1x24x8xbf16>
    %71 = vector.shape_cast %70 : vector<1x24x8xbf16> to vector<24x8xbf16>
    %cst_91 = arith.constant dense<0.000000e+00> : vector<256x8xf32>
    %72 = tpu.matmul %69, %71, %cst_91 {dimension_numbers = #tpu.dot_dimension_numbers<[1], [0], [0], [1], [0, 0, 1, 1], [], []>} : vector<256x24xbf16>, vector<24x8xbf16>, vector<256x8xf32> -> vector<256x8xf32>
    %73 = arith.addf %61, %72 : vector<256x8xf32>
    %c0_92 = arith.constant 0 : index
    %c0_93 = arith.constant 0 : index
    %74 = vector.load %arg3[%c0_92, %c0_93] : memref<1x8xf32, #tpu.memory_space<vmem>>, vector<1x8xf32>
    %75 = vector.shape_cast %74 : vector<1x8xf32> to vector<8xf32>
    %76 = vector.shape_cast %75 : vector<8xf32> to vector<1x8xf32>
    %77 = vector.broadcast %76 : vector<1x8xf32> to vector<256x8xf32>
    %78 = arith.addf %73, %77 : vector<256x8xf32>
    %cst_94 = arith.constant 0.000000e+00 : f32
    %79 = vector.broadcast %cst_94 : f32 to vector<256x8xf32>
    %80 = arith.maximumf %78, %79 : vector<256x8xf32>
    %81 = vector.shape_cast %80 : vector<256x8xf32> to vector<16x16x8xf32>
    %82 = arith.truncf %81 : vector<16x16x8xf32> to vector<16x16x8xbf16>
    %c0_95 = arith.constant 0 : index
    %c1_96 = arith.constant 1 : index
    %c1_97 = arith.constant 1 : index
    %c0_98 = arith.constant 0 : index
    %83 = vector.load %arg7[%c0_95, %c1_96, %c1_97, %c0_98] : memref<3x18x24x8xbf16, #tpu.memory_space<vmem>>, vector<1x16x16x8xbf16>
    %84 = vector.shape_cast %83 : vector<1x16x16x8xbf16> to vector<16x16x8xbf16>
    %85 = vector.shape_cast %82 : vector<16x16x8xbf16> to vector<1x16x16x8xbf16>
    tpu.vector_store %arg7[%c0_95, %c1_96, %c1_97, %c0_98], %85 {strides = array<i32>} : memref<3x18x24x8xbf16, #tpu.memory_space<vmem>>, vector<1x16x16x8xbf16>,
    %c1_99 = arith.constant 1 : index
    %c1_100 = arith.constant 1 : index
    %c0_101 = arith.constant 0 : index
    %c0_102 = arith.constant 0 : index
    %86 = vector.load %arg7[%c1_99, %c1_100, %c0_101, %c0_102] : memref<3x18x24x8xbf16, #tpu.memory_space<vmem>>, vector<1x16x16x8xbf16>
    %87 = vector.shape_cast %86 : vector<1x16x16x8xbf16> to vector<16x16x8xbf16>
    %88 = vector.shape_cast %82 : vector<16x16x8xbf16> to vector<1x16x16x8xbf16>
    tpu.vector_store %arg7[%c1_99, %c1_100, %c0_101, %c0_102], %88 {strides = array<i32>} : memref<3x18x24x8xbf16, #tpu.memory_space<vmem>>, vector<1x16x16x8xbf16>,
    %89 = vector.extract_strided_slice %82 {offsets = [0, 1, 0], sizes = [16, 15, 8], strides = [1, 1, 1]} : vector<16x16x8xbf16> to vector<16x15x8xbf16>
    %c2_103 = arith.constant 2 : index
    %c1_104 = arith.constant 1 : index
    %c0_105 = arith.constant 0 : index
    %c0_106 = arith.constant 0 : index
    %90 = vector.load %arg7[%c2_103, %c1_104, %c0_105, %c0_106] : memref<3x18x24x8xbf16, #tpu.memory_space<vmem>>, vector<1x16x15x8xbf16>
    %91 = vector.shape_cast %90 : vector<1x16x15x8xbf16> to vector<16x15x8xbf16>
    %92 = vector.shape_cast %89 : vector<16x15x8xbf16> to vector<1x16x15x8xbf16>
    tpu.vector_store %arg7[%c2_103, %c1_104, %c0_105, %c0_106], %92 {strides = array<i32>} : memref<3x18x24x8xbf16, #tpu.memory_space<vmem>>, vector<1x16x15x8xbf16>,
    %c0_107 = arith.constant 0 : index
    %c0_108 = arith.constant 0 : index
    %c0_109 = arith.constant 0 : index
    %c0_110 = arith.constant 0 : index
    %93 = vector.load %arg7[%c0_107, %c0_108, %c0_109, %c0_110] : memref<3x18x24x8xbf16, #tpu.memory_space<vmem>>, vector<1x16x16x8xbf16>
    %94 = vector.shape_cast %93 : vector<1x16x16x8xbf16> to vector<16x16x8xbf16>
    %c1_111 = arith.constant 1 : index
    %c0_112 = arith.constant 0 : index
    %c0_113 = arith.constant 0 : index
    %c0_114 = arith.constant 0 : index
    %95 = vector.load %arg7[%c1_111, %c0_112, %c0_113, %c0_114] : memref<3x18x24x8xbf16, #tpu.memory_space<vmem>>, vector<1x16x16x8xbf16>
    %96 = vector.shape_cast %95 : vector<1x16x16x8xbf16> to vector<16x16x8xbf16>
    %c2_115 = arith.constant 2 : index
    %c0_116 = arith.constant 0 : index
    %c0_117 = arith.constant 0 : index
    %c0_118 = arith.constant 0 : index
    %97 = vector.load %arg7[%c2_115, %c0_116, %c0_117, %c0_118] : memref<3x18x24x8xbf16, #tpu.memory_space<vmem>>, vector<1x16x16x8xbf16>
    %98 = vector.shape_cast %97 : vector<1x16x16x8xbf16> to vector<16x16x8xbf16>
    %99 = tpu.concatenate %94, %96, %98 in 2 : vector<16x16x8xbf16>, vector<16x16x8xbf16>, vector<16x16x8xbf16> -> vector<16x16x24xbf16>
    %100 = vector.shape_cast %99 : vector<16x16x24xbf16> to vector<256x24xbf16>
    %c0_119 = arith.constant 0 : index
    %c0_120 = arith.constant 0 : index
    %c0_121 = arith.constant 0 : index
    %101 = vector.load %arg4[%c0_119, %c0_120, %c0_121] : memref<3x24x8xbf16, #tpu.memory_space<vmem>>, vector<1x24x8xbf16>
    %102 = vector.shape_cast %101 : vector<1x24x8xbf16> to vector<24x8xbf16>
    %cst_122 = arith.constant dense<0.000000e+00> : vector<256x8xf32>
    %103 = tpu.matmul %100, %102, %cst_122 {dimension_numbers = #tpu.dot_dimension_numbers<[1], [0], [0], [1], [0, 0, 1, 1], [], []>} : vector<256x24xbf16>, vector<24x8xbf16>, vector<256x8xf32> -> vector<256x8xf32>
    %c0_123 = arith.constant 0 : index
    %c1_124 = arith.constant 1 : index
    %c0_125 = arith.constant 0 : index
    %c0_126 = arith.constant 0 : index
    %104 = vector.load %arg7[%c0_123, %c1_124, %c0_125, %c0_126] : memref<3x18x24x8xbf16, #tpu.memory_space<vmem>>, vector<1x16x16x8xbf16>
    %105 = vector.shape_cast %104 : vector<1x16x16x8xbf16> to vector<16x16x8xbf16>
    %c1_127 = arith.constant 1 : index
    %c1_128 = arith.constant 1 : index
    %c0_129 = arith.constant 0 : index
    %c0_130 = arith.constant 0 : index
    %106 = vector.load %arg7[%c1_127, %c1_128, %c0_129, %c0_130] : memref<3x18x24x8xbf16, #tpu.memory_space<vmem>>, vector<1x16x16x8xbf16>
    %107 = vector.shape_cast %106 : vector<1x16x16x8xbf16> to vector<16x16x8xbf16>
    %c2_131 = arith.constant 2 : index
    %c1_132 = arith.constant 1 : index
    %c0_133 = arith.constant 0 : index
    %c0_134 = arith.constant 0 : index
    %108 = vector.load %arg7[%c2_131, %c1_132, %c0_133, %c0_134] : memref<3x18x24x8xbf16, #tpu.memory_space<vmem>>, vector<1x16x16x8xbf16>
    %109 = vector.shape_cast %108 : vector<1x16x16x8xbf16> to vector<16x16x8xbf16>
    %110 = tpu.concatenate %105, %107, %109 in 2 : vector<16x16x8xbf16>, vector<16x16x8xbf16>, vector<16x16x8xbf16> -> vector<16x16x24xbf16>
    %111 = vector.shape_cast %110 : vector<16x16x24xbf16> to vector<256x24xbf16>
    %c1_135 = arith.constant 1 : index
    %c0_136 = arith.constant 0 : index
    %c0_137 = arith.constant 0 : index
    %112 = vector.load %arg4[%c1_135, %c0_136, %c0_137] : memref<3x24x8xbf16, #tpu.memory_space<vmem>>, vector<1x24x8xbf16>
    %113 = vector.shape_cast %112 : vector<1x24x8xbf16> to vector<24x8xbf16>
    %cst_138 = arith.constant dense<0.000000e+00> : vector<256x8xf32>
    %114 = tpu.matmul %111, %113, %cst_138 {dimension_numbers = #tpu.dot_dimension_numbers<[1], [0], [0], [1], [0, 0, 1, 1], [], []>} : vector<256x24xbf16>, vector<24x8xbf16>, vector<256x8xf32> -> vector<256x8xf32>
    %115 = arith.addf %103, %114 : vector<256x8xf32>
    %c0_139 = arith.constant 0 : index
    %c2_140 = arith.constant 2 : index
    %c0_141 = arith.constant 0 : index
    %c0_142 = arith.constant 0 : index
    %116 = vector.load %arg7[%c0_139, %c2_140, %c0_141, %c0_142] : memref<3x18x24x8xbf16, #tpu.memory_space<vmem>>, vector<1x16x16x8xbf16>
    %117 = vector.shape_cast %116 : vector<1x16x16x8xbf16> to vector<16x16x8xbf16>
    %c1_143 = arith.constant 1 : index
    %c2_144 = arith.constant 2 : index
    %c0_145 = arith.constant 0 : index
    %c0_146 = arith.constant 0 : index
    %118 = vector.load %arg7[%c1_143, %c2_144, %c0_145, %c0_146] : memref<3x18x24x8xbf16, #tpu.memory_space<vmem>>, vector<1x16x16x8xbf16>
    %119 = vector.shape_cast %118 : vector<1x16x16x8xbf16> to vector<16x16x8xbf16>
    %c2_147 = arith.constant 2 : index
    %c2_148 = arith.constant 2 : index
    %c0_149 = arith.constant 0 : index
    %c0_150 = arith.constant 0 : index
    %120 = vector.load %arg7[%c2_147, %c2_148, %c0_149, %c0_150] : memref<3x18x24x8xbf16, #tpu.memory_space<vmem>>, vector<1x16x16x8xbf16>
    %121 = vector.shape_cast %120 : vector<1x16x16x8xbf16> to vector<16x16x8xbf16>
    %122 = tpu.concatenate %117, %119, %121 in 2 : vector<16x16x8xbf16>, vector<16x16x8xbf16>, vector<16x16x8xbf16> -> vector<16x16x24xbf16>
    %123 = vector.shape_cast %122 : vector<16x16x24xbf16> to vector<256x24xbf16>
    %c2_151 = arith.constant 2 : index
    %c0_152 = arith.constant 0 : index
    %c0_153 = arith.constant 0 : index
    %124 = vector.load %arg4[%c2_151, %c0_152, %c0_153] : memref<3x24x8xbf16, #tpu.memory_space<vmem>>, vector<1x24x8xbf16>
    %125 = vector.shape_cast %124 : vector<1x24x8xbf16> to vector<24x8xbf16>
    %cst_154 = arith.constant dense<0.000000e+00> : vector<256x8xf32>
    %126 = tpu.matmul %123, %125, %cst_154 {dimension_numbers = #tpu.dot_dimension_numbers<[1], [0], [0], [1], [0, 0, 1, 1], [], []>} : vector<256x24xbf16>, vector<24x8xbf16>, vector<256x8xf32> -> vector<256x8xf32>
    %127 = arith.addf %115, %126 : vector<256x8xf32>
    %c0_155 = arith.constant 0 : index
    %c0_156 = arith.constant 0 : index
    %128 = vector.load %arg5[%c0_155, %c0_156] : memref<1x8xf32, #tpu.memory_space<vmem>>, vector<1x8xf32>
    %129 = vector.shape_cast %128 : vector<1x8xf32> to vector<8xf32>
    %130 = vector.shape_cast %129 : vector<8xf32> to vector<1x8xf32>
    %131 = vector.broadcast %130 : vector<1x8xf32> to vector<256x8xf32>
    %132 = arith.addf %127, %131 : vector<256x8xf32>
    %133 = vector.shape_cast %27 : vector<16x16x8xf32> to vector<256x8xf32>
    %134 = arith.addf %132, %133 : vector<256x8xf32>
    %cst_157 = arith.constant 0.000000e+00 : f32
    %135 = vector.broadcast %cst_157 : f32 to vector<256x8xf32>
    %136 = arith.maximumf %134, %135 : vector<256x8xf32>
    %137 = vector.shape_cast %136 : vector<256x8xf32> to vector<16x16x8xf32>
    %c0_158 = arith.constant 0 : index
    %c0_159 = arith.constant 0 : index
    %c0_160 = arith.constant 0 : index
    %c0_161 = arith.constant 0 : index
    %138 = vector.load %arg6[%c0_158, %c0_159, %c0_160, %c0_161] : memref<1x16x16x8xf32, #tpu.memory_space<vmem>>, vector<1x16x16x8xf32>
    %139 = vector.shape_cast %138 : vector<1x16x16x8xf32> to vector<16x16x8xf32>
    %140 = vector.shape_cast %137 : vector<16x16x8xf32> to vector<1x16x16x8xf32>
    tpu.vector_store %arg6[%c0_158, %c0_159, %c0_160, %c0_161], %140 {strides = array<i32>} : memref<1x16x16x8xf32, #tpu.memory_space<vmem>>, vector<1x16x16x8xf32>,
    return
  }
  func.func @transform_0(%arg0: i32) -> (i32, i32, i32, i32) {
    %c0_i32 = arith.constant 0 : i32
    %c0_i32_0 = arith.constant 0 : i32
    %c0_i32_1 = arith.constant 0 : i32
    %c0_i32_2 = arith.constant 0 : i32
    return %arg0, %c0_i32, %c0_i32_0, %c0_i32_1 : i32, i32, i32, i32
  }
  func.func @transform_1(%arg0: i32) -> (i32, i32, i32) {
    %c0_i32 = arith.constant 0 : i32
    %c0_i32_0 = arith.constant 0 : i32
    %c0_i32_1 = arith.constant 0 : i32
    %c0_i32_2 = arith.constant 0 : i32
    return %c0_i32, %c0_i32_0, %c0_i32_1 : i32, i32, i32
  }
  func.func @transform_2(%arg0: i32) -> (i32, i32) {
    %c0_i32 = arith.constant 0 : i32
    %c0_i32_0 = arith.constant 0 : i32
    %c0_i32_1 = arith.constant 0 : i32
    return %c0_i32, %c0_i32_0 : i32, i32
  }
  func.func @transform_3(%arg0: i32) -> (i32, i32, i32) {
    %c0_i32 = arith.constant 0 : i32
    %c0_i32_0 = arith.constant 0 : i32
    %c0_i32_1 = arith.constant 0 : i32
    %c0_i32_2 = arith.constant 0 : i32
    return %c0_i32, %c0_i32_0, %c0_i32_1 : i32, i32, i32
  }
  func.func @transform_4(%arg0: i32) -> (i32, i32) {
    %c0_i32 = arith.constant 0 : i32
    %c0_i32_0 = arith.constant 0 : i32
    %c0_i32_1 = arith.constant 0 : i32
    return %c0_i32, %c0_i32_0 : i32, i32
  }
  func.func @transform_5(%arg0: i32) -> (i32, i32, i32, i32) {
    %c0_i32 = arith.constant 0 : i32
    %c0_i32_0 = arith.constant 0 : i32
    %c0_i32_1 = arith.constant 0 : i32
    %c0_i32_2 = arith.constant 0 : i32
    return %arg0, %c0_i32, %c0_i32_0, %c0_i32_1 : i32, i32, i32, i32
  }
}

</mosaic_0001>

<llo_original>
// kernel: basic_block.1
$region0: #{basic_block.1}
  #allocation0 [shape = 'u32[]', space=smem, size = 0x4, offset = 0x4, fixed_abs, tag = 'smem constant byte address 0x4 - core index']
  #allocation1 [shape = 'u32[144,128]{1,0:T(1,128)}', space=vmem, size = 0x12000, scoped, tag = 'internal scratch']
  #allocation2 [shape = 'bf16[3,18,24,8]{3,2,1,0:T(8,128)(2,1)}', space=vmem, size = 0x51000, scoped, tag = 'scratch operand']
  %s0 = inlined_call_operand.vmem [shape: f32[2,16,16,8], index: 0, kind: input, shape index: {}]
  %s1 = inlined_call_operand.vmem [shape: bf16[3,24,8], index: 1, kind: input, shape index: {}]
  %s2 = inlined_call_operand.vmem [shape: f32[1,8], index: 2, kind: input, shape index: {}]
  %s3 = inlined_call_operand.vmem [shape: bf16[3,24,8], index: 3, kind: input, shape index: {}]
  %s4 = inlined_call_operand.vmem [shape: f32[1,8], index: 4, kind: input, shape index: {}]
  %s5 = inlined_call_operand.vmem [shape: f32[2,16,16,8], index: 5, kind: output, shape index: {}]
  %s6 = sld [smem:[#allocation0]]
  $region53: #{basic_block.1} parent=0
    _
  %s8 = ssub.s32 1, %s6
  %s9 = scalar_select 0, %s8, %s6
  loop: start=0, step=1, limit=4
  $region2: #{basic_block.1} parent=0 // loop_pre_header
    _
  $region3: #{basic_block.1} parent=0 // loop_header
    %s11 = sphi 0, %s15
    %p12 = scmp.ge.s32.totalorder %s11, 4
    %s21 = sphi 0, %s23
    %s24 = sphi 0, %s21
    %s25 = sphi 0, %s24
    %s41 = sphi 0, %s25
    %s45 = sphi 0, %s45
    %s47 = sphi 0, %s45
    %s48 = sphi 0, %s47
    %s62 = sphi 0, %s48
    %s66 = sphi 0, %s66
    %s68 = sphi 0, %s66
    %s69 = sphi 0, %s68
    %s83 = sphi 0, %s69
    %s87 = sphi 0, %s87
    %s89 = sphi 0, %s87
    %s90 = sphi 0, %s89
    %s104 = sphi 0, %s90
    %s108 = sphi 0, %s108
    %s110 = sphi 0, %s108
    %s111 = sphi 0, %s110
    %s125 = sphi 0, %s111
    %s131 = sphi 0, %s133
    %s134 = sphi 0, %s131
    %s135 = sphi 0, %s134
    %s151 = sphi 0, %s135
  $region4: #{basic_block.1} parent=0 // loop_header_branch
    %14 = sbr.rel (%p12) target = $region8
  $region5: #{basic_block.1} parent=0 // loop_body
    %s16 = ssub.s32 %s11, 1
    %s17 = ssub.s32 %s11, 2
    %s18 = sadd.s32 %s11, 1
    %s19 = ssub.s32 %s11, %s18
    %p20 = scmp.eq.s32.totalorder %s19, 0
    %s22 = sadd.s32 %s21, 1
    %s23 = scalar_select %p20, %s21, %s22
    %p26 = pneg %p20
    %p27 = scmp.eq.s32.totalorder %s11, 1
    %p28 = por %p26, %p27
    %p29 = scmp.ne.s32.totalorder %s21, %s24
    %p30 = scmp.eq.s32.totalorder %s11, 0
    %p31 = por %p29, %p30
    %p32 = scmp.ne.s32.totalorder %s21, %s24
    %p33 = scmp.eq.s32.totalorder %s16, 1
    %p34 = por %p32, %p33
    %p35 = scmp.ne.s32.totalorder %s24, %s25
    %p36 = scmp.eq.s32.totalorder %s16, 0
    %p37 = por %p35, %p36
    %p38 = scmp.ne.s32.totalorder %s24, %s25
    %p39 = scmp.eq.s32.totalorder %s17, 1
    %p40 = por %p38, %p39
    %p42 = scmp.ne.s32.totalorder %s25, %s41
    %p43 = scmp.eq.s32.totalorder %s17, 0
    %p44 = por %p42, %p43
    %s46 = sadd.s32 %s45, 1
    %p49 = scmp.eq.s32.totalorder %s11, 1
    %p50 = scmp.ne.s32.totalorder %s45, %s47
    %p51 = scmp.eq.s32.totalorder %s11, 0
    %p52 = por %p50, %p51
    %p53 = scmp.ne.s32.totalorder %s45, %s47
    %p54 = scmp.eq.s32.totalorder %s16, 1
    %p55 = por %p53, %p54
    %p56 = scmp.ne.s32.totalorder %s47, %s48
    %p57 = scmp.eq.s32.totalorder %s16, 0
    %p58 = por %p56, %p57
    %p59 = scmp.ne.s32.totalorder %s47, %s48
    %p60 = scmp.eq.s32.totalorder %s17, 1
    %p61 = por %p59, %p60
    %p63 = scmp.ne.s32.totalorder %s48, %s62
    %p64 = scmp.eq.s32.totalorder %s17, 0
    %p65 = por %p63, %p64
    %s67 = sadd.s32 %s66, 1
    %p70 = scmp.eq.s32.totalorder %s11, 1
    %p71 = scmp.ne.s32.totalorder %s66, %s68
    %p72 = scmp.eq.s32.totalorder %s11, 0
    %p73 = por %p71, %p72
    %p74 = scmp.ne.s32.totalorder %s66, %s68
    %p75 = scmp.eq.s32.totalorder %s16, 1
    %p76 = por %p74, %p75
    %p77 = scmp.ne.s32.totalorder %s68, %s69
    %p78 = scmp.eq.s32.totalorder %s16, 0
    %p79 = por %p77, %p78
    %p80 = scmp.ne.s32.totalorder %s68, %s69
    %p81 = scmp.eq.s32.totalorder %s17, 1
    %p82 = por %p80, %p81
    %p84 = scmp.ne.s32.totalorder %s69, %s83
    %p85 = scmp.eq.s32.totalorder %s17, 0
    %p86 = por %p84, %p85
    %s88 = sadd.s32 %s87, 1
    %p91 = scmp.eq.s32.totalorder %s11, 1
    %p92 = scmp.ne.s32.totalorder %s87, %s89
    %p93 = scmp.eq.s32.totalorder %s11, 0
    %p94 = por %p92, %p93
    %p95 = scmp.ne.s32.totalorder %s87, %s89
    %p96 = scmp.eq.s32.totalorder %s16, 1
    %p97 = por %p95, %p96
    %p98 = scmp.ne.s32.totalorder %s89, %s90
    %p99 = scmp.eq.s32.totalorder %s16, 0
    %p100 = por %p98, %p99
    %p101 = scmp.ne.s32.totalorder %s89, %s90
    %p102 = scmp.eq.s32.totalorder %s17, 1
    %p103 = por %p101, %p102
    %p105 = scmp.ne.s32.totalorder %s90, %s104
    %p106 = scmp.eq.s32.totalorder %s17, 0
    %p107 = por %p105, %p106
    %s109 = sadd.s32 %s108, 1
    %p112 = scmp.eq.s32.totalorder %s11, 1
    %p113 = scmp.ne.s32.totalorder %s108, %s110
    %p114 = scmp.eq.s32.totalorder %s11, 0
    %p115 = por %p113, %p114
    %p116 = scmp.ne.s32.totalorder %s108, %s110
    %p117 = scmp.eq.s32.totalorder %s16, 1
    %p118 = por %p116, %p117
    %p119 = scmp.ne.s32.totalorder %s110, %s111
    %p120 = scmp.eq.s32.totalorder %s16, 0
    %p121 = por %p119, %p120
    %p122 = scmp.ne.s32.totalorder %s110, %s111
    %p123 = scmp.eq.s32.totalorder %s17, 1
    %p124 = por %p122, %p123
    %p126 = scmp.ne.s32.totalorder %s111, %s125
    %p127 = scmp.eq.s32.totalorder %s17, 0
    %p128 = por %p126, %p127
    %s129 = ssub.s32 %s11, %s18
    %p130 = scmp.eq.s32.totalorder %s129, 0
    %s132 = sadd.s32 %s131, 1
    %s133 = scalar_select %p130, %s131, %s132
    %p136 = pneg %p130
    %p137 = scmp.eq.s32.totalorder %s11, 1
    %p138 = por %p136, %p137
    %p139 = scmp.ne.s32.totalorder %s131, %s134
    %p140 = scmp.eq.s32.totalorder %s11, 0
    %p141 = por %p139, %p140
    %p142 = scmp.ne.s32.totalorder %s131, %s134
    %p143 = scmp.eq.s32.totalorder %s16, 1
    %p144 = por %p142, %p143
    %p145 = scmp.ne.s32.totalorder %s134, %s135
    %p146 = scmp.eq.s32.totalorder %s16, 0
    %p147 = por %p145, %p146
    %p148 = scmp.ne.s32.totalorder %s134, %s135
    %p149 = scmp.eq.s32.totalorder %s17, 1
    %p150 = por %p148, %p149
    %p152 = scmp.ne.s32.totalorder %s135, %s151
    %p153 = scmp.eq.s32.totalorder %s17, 0
    %p154 = por %p152, %p153
    %p155 = scmp.le.s32.totalorder 1, %s11
    %p156 = scmp.lt.s32.totalorder %s11, 3
    %p157 = pnand %p155, %p156
    %p158 = pneg %p157
    // Predicated region
    $region9: #{basic_block.1} parent=5 // pred_check
      _
    $region10: #{basic_block.1} parent=5 // pred_check_branch
      %160 = sbr.rel (%p157) target = $region12
    $region11: #{basic_block.1} parent=5 // pred_region
      %s161 = ssub.s32 %s11, 1
      // Predicated region
      $region13: #{basic_block.1} parent=11 // pred_check
        %p162 = pneg %p58
      $region14: #{basic_block.1} parent=11 // pred_check_branch
        %164 = sbr.rel (%p162) target = $region16
      $region15: #{basic_block.1} parent=11 // pred_region
        _
      $region16: #{basic_block.1} parent=11 // pred_fallthru
        _
      // Predicated region
      $region17: #{basic_block.1} parent=11 // pred_check
        %p165 = pneg %p79
      $region18: #{basic_block.1} parent=11 // pred_check_branch
        %167 = sbr.rel (%p165) target = $region20
      $region19: #{basic_block.1} parent=11 // pred_region
        _
      $region20: #{basic_block.1} parent=11 // pred_fallthru
        _
      // Predicated region
      $region21: #{basic_block.1} parent=11 // pred_check
        %p168 = pneg %p100
      $region22: #{basic_block.1} parent=11 // pred_check_branch
        %170 = sbr.rel (%p168) target = $region24
      $region23: #{basic_block.1} parent=11 // pred_region
        _
      $region24: #{basic_block.1} parent=11 // pred_fallthru
        _
      // Predicated region
      $region25: #{basic_block.1} parent=11 // pred_check
        %p171 = pneg %p121
      $region26: #{basic_block.1} parent=11 // pred_check_branch
        %173 = sbr.rel (%p171) target = $region28
      $region27: #{basic_block.1} parent=11 // pred_region
        _
      $region28: #{basic_block.1} parent=11 // pred_fallthru
        _
    $region12: #{basic_block.1} parent=5 // pred_fallthru
      _
    %p174 = scmp.lt.s32.totalorder %s11, 2
    // Predicated region
    $region29: #{basic_block.1} parent=5 // pred_check
      %p175 = pneg %p174
    $region30: #{basic_block.1} parent=5 // pred_check_branch
      %177 = sbr.rel (%p175) target = $region32
    $region31: #{basic_block.1} parent=5 // pred_region
      // Predicated region
      $region33: #{basic_block.1} parent=31 // pred_check
        %p178 = pneg %p31
      $region34: #{basic_block.1} parent=31 // pred_check_branch
        %180 = sbr.rel (%p178) target = $region36
      $region35: #{basic_block.1} parent=31 // pred_region
        %p181 = scmp.lt.s32.totalorder %s11, 1
        %s182 = scalar_select %p181, %s11, 1
        %s183 = smul.addr %s182, 32
        %s184 = smul.addr %s183, 8
        %s185 = scalar_lea.vmem %s0, %s184
      $region36: #{basic_block.1} parent=31 // pred_fallthru
        _
    $region32: #{basic_block.1} parent=5 // pred_fallthru
      _
    %p186 = scmp.le.s32.totalorder 1, %s11
    %p187 = scmp.lt.s32.totalorder %s11, 3
    %p188 = pnand %p186, %p187
    %p189 = pneg %p188
    // Predicated region
    $region37: #{basic_block.1} parent=5 // pred_check
      _
    $region38: #{basic_block.1} parent=5 // pred_check_branch
      %191 = sbr.rel (%p188) target = $region40
    $region39: #{basic_block.1} parent=5 // pred_region
      %s192 = ssub.s32 %s11, 1
      %p193 = scmp.lt.s32.totalorder %s16, 1
      %s194 = scalar_select %p193, %s16, 1
      %s195 = smul.addr %s194, 32
      %s196 = smul.addr %s195, 8
      %s197 = scalar_lea.vmem %s0, %s196
      %p198 = pneg %p37
      %p199 = pneg %p34
      %p200 = pneg %p58
      %p201 = pneg %p55
      %p202 = pneg %p79
      %p203 = pneg %p76
      %p204 = pneg %p100
      %p205 = pneg %p97
      %p206 = pneg %p121
      %p207 = pneg %p118
      %p208 = pneg %p147
      %p209 = pneg %p144
      %p210 = scmp.lt.s32.totalorder %s16, 1
      %s211 = scalar_select %p210, %s16, 1
      %s212 = smul.addr %s211, 32
      %s213 = smul.addr %s212, 8
      %s214 = scalar_lea.vmem %s5, %s213
      %p215 = scmp.lt.s32.totalorder %s16, 1
      %s216 = scalar_select %p215, %s16, 1
      %s217 = smul.addr %s216, 32
      %s218 = smul.addr %s217, 8
      %s219 = scalar_lea.vmem %s0, %s218
      %p220 = scmp.lt.s32.totalorder %s16, 1
      %s221 = scalar_select %p220, %s16, 1
      %s222 = smul.addr %s221, 32
      %s223 = smul.addr %s222, 8
      %s224 = scalar_lea.vmem %s5, %s223
      %vm226 = vcmask 60416
      %227 = vst.msk [vmem:[#allocation2] sm:$0xf] %vm226, 0
      %228 = vst.msk [vmem:[#allocation2 + $0x4] sm:$0xf] %vm226, 0
      %229 = vst.msk [vmem:[#allocation2 + $0x8] sm:$0xf] %vm226, 0
      %s230 = scalar_lea.vmem [#allocation2], 204
      %231 = vst.msk [vmem:[%s230] sm:$0xf] %vm226, 0
      %232 = vst.msk [vmem:[%s230 + $0x4] sm:$0xf] %vm226, 0
      %233 = vst.msk [vmem:[%s230 + $0x8] sm:$0xf] %vm226, 0
      %s234 = scalar_lea.vmem [#allocation2], 216
      %235 = vst.msk [vmem:[%s234] sm:$0xf] %vm226, 0
      %236 = vst.msk [vmem:[%s234 + $0x4] sm:$0xf] %vm226, 0
      %237 = vst.msk [vmem:[%s234 + $0x8] sm:$0xf] %vm226, 0
      %s238 = scalar_lea.vmem [#allocation2], 420
      %239 = vst.msk [vmem:[%s238] sm:$0xf] %vm226, 0
      %240 = vst.msk [vmem:[%s238 + $0x4] sm:$0xf] %vm226, 0
      %241 = vst.msk [vmem:[%s238 + $0x8] sm:$0xf] %vm226, 0
      %s242 = scalar_lea.vmem [#allocation2], 432
      %243 = vst.msk [vmem:[%s242] sm:$0xf] %vm226, 0
      %244 = vst.msk [vmem:[%s242 + $0x4] sm:$0xf] %vm226, 0
      %245 = vst.msk [vmem:[%s242 + $0x8] sm:$0xf] %vm226, 0
      %s246 = scalar_lea.vmem [#allocation2], 636
      %247 = vst.msk [vmem:[%s246] sm:$0xf] %vm226, 0
      %248 = vst.msk [vmem:[%s246 + $0x4] sm:$0xf] %vm226, 0
      %249 = vst.msk [vmem:[%s246 + $0x8] sm:$0xf] %vm226, 0
      %s250 = scalar_lea.vmem [#allocation2], 12
      %vm251 = vcmask 57344
      %vm252 = vsmask.f32 256
      %vm253 = vmand %vm251, %vm252
      %v254 = vld [vmem:[%s250] sm:$0x1]
      %v255 = vsel %vm253, 0, %v254
      %256 = vst [vmem:[%s250] sm:$0x1] %v255
      %v257 = vld [vmem:[%s250 + $0xc] sm:$0x1]
      %v258 = vsel %vm253, 0, %v257
      %259 = vst [vmem:[%s250 + $0xc] sm:$0x1] %v258
      %v260 = vld [vmem:[%s250 + $0x18] sm:$0x1]
      %v261 = vsel %vm253, 0, %v260
      %262 = vst [vmem:[%s250 + $0x18] sm:$0x1] %v261
      %v263 = vld [vmem:[%s250 + $0x24] sm:$0x1]
      %v264 = vsel %vm253, 0, %v263
      %265 = vst [vmem:[%s250 + $0x24] sm:$0x1] %v264
      %v266 = vld [vmem:[%s250 + $0x30] sm:$0x1]
      %v267 = vsel %vm253, 0, %v266
      %268 = vst [vmem:[%s250 + $0x30] sm:$0x1] %v267
      %v269 = vld [vmem:[%s250 + $0x3c] sm:$0x1]
      %v270 = vsel %vm253, 0, %v269
      %271 = vst [vmem:[%s250 + $0x3c] sm:$0x1] %v270
      %v272 = vld [vmem:[%s250 + $0x48] sm:$0x1]
      %v273 = vsel %vm253, 0, %v272
      %274 = vst [vmem:[%s250 + $0x48] sm:$0x1] %v273
      %v275 = vld [vmem:[%s250 + $0x54] sm:$0x1]
      %v276 = vsel %vm253, 0, %v275
      %277 = vst [vmem:[%s250 + $0x54] sm:$0x1] %v276
      %v278 = vld [vmem:[%s250 + $0x60] sm:$0x1]
      %v279 = vsel %vm253, 0, %v278
      %280 = vst [vmem:[%s250 + $0x60] sm:$0x1] %v279
      %v281 = vld [vmem:[%s250 + $0x6c] sm:$0x1]
      %v282 = vsel %vm253, 0, %v281
      %283 = vst [vmem:[%s250 + $0x6c] sm:$0x1] %v282
      %v284 = vld [vmem:[%s250 + $0x78] sm:$0x1]
      %v285 = vsel %vm253, 0, %v284
      %286 = vst [vmem:[%s250 + $0x78] sm:$0x1] %v285
      %v287 = vld [vmem:[%s250 + $0x84] sm:$0x1]
      %v288 = vsel %vm253, 0, %v287
      %289 = vst [vmem:[%s250 + $0x84] sm:$0x1] %v288
      %v290 = vld [vmem:[%s250 + $0x90] sm:$0x1]
      %v291 = vsel %vm253, 0, %v290
      %292 = vst [vmem:[%s250 + $0x90] sm:$0x1] %v291
      %v293 = vld [vmem:[%s250 + $0x9c] sm:$0x1]
      %v294 = vsel %vm253, 0, %v293
      %295 = vst [vmem:[%s250 + $0x9c] sm:$0x1] %v294
      %v296 = vld [vmem:[%s250 + $0xa8] sm:$0x1]
      %v297 = vsel %vm253, 0, %v296
      %298 = vst [vmem:[%s250 + $0xa8] sm:$0x1] %v297
      %v299 = vld [vmem:[%s250 + $0xb4] sm:$0x1]
      %v300 = vsel %vm253, 0, %v299
      %301 = vst [vmem:[%s250 + $0xb4] sm:$0x1] %v300
      %s302 = scalar_lea.vmem [#allocation2], 444
      %vm303 = vcmask 60419
      %vm304 = vsmask.f32 7950
      %vm305 = vmand %vm303, %vm304
      %v306 = vld [vmem:[%s302 + $0x4] sm:$0x8]
      %v307 = vsel %vm305, 0, %v306
      %308 = vst [vmem:[%s302 + $0x4] sm:$0x8] %v307
      %v309 = vld [vmem:[%s302 + $0x10] sm:$0x8]
      %v310 = vsel %vm305, 0, %v309
      %311 = vst [vmem:[%s302 + $0x10] sm:$0x8] %v310
      %v312 = vld [vmem:[%s302 + $0x1c] sm:$0x8]
      %v313 = vsel %vm305, 0, %v312
      %314 = vst [vmem:[%s302 + $0x1c] sm:$0x8] %v313
      %v315 = vld [vmem:[%s302 + $0x28] sm:$0x8]
      %v316 = vsel %vm305, 0, %v315
      %317 = vst [vmem:[%s302 + $0x28] sm:$0x8] %v316
      %v318 = vld [vmem:[%s302 + $0x34] sm:$0x8]
      %v319 = vsel %vm305, 0, %v318
      %320 = vst [vmem:[%s302 + $0x34] sm:$0x8] %v319
      %v321 = vld [vmem:[%s302 + $0x40] sm:$0x8]
      %v322 = vsel %vm305, 0, %v321
      %323 = vst [vmem:[%s302 + $0x40] sm:$0x8] %v322
      %v324 = vld [vmem:[%s302 + $0x4c] sm:$0x8]
      %v325 = vsel %vm305, 0, %v324
      %326 = vst [vmem:[%s302 + $0x4c] sm:$0x8] %v325
      %v327 = vld [vmem:[%s302 + $0x58] sm:$0x8]
      %v328 = vsel %vm305, 0, %v327
      %329 = vst [vmem:[%s302 + $0x58] sm:$0x8] %v328
      %v330 = vld [vmem:[%s302 + $0x64] sm:$0x8]
      %v331 = vsel %vm305, 0, %v330
      %332 = vst [vmem:[%s302 + $0x64] sm:$0x8] %v331
      %v333 = vld [vmem:[%s302 + $0x70] sm:$0x8]
      %v334 = vsel %vm305, 0, %v333
      %335 = vst [vmem:[%s302 + $0x70] sm:$0x8] %v334
      %v336 = vld [vmem:[%s302 + $0x7c] sm:$0x8]
      %v337 = vsel %vm305, 0, %v336
      %338 = vst [vmem:[%s302 + $0x7c] sm:$0x8] %v337
      %v339 = vld [vmem:[%s302 + $0x88] sm:$0x8]
      %v340 = vsel %vm305, 0, %v339
      %341 = vst [vmem:[%s302 + $0x88] sm:$0x8] %v340
      %v342 = vld [vmem:[%s302 + $0x94] sm:$0x8]
      %v343 = vsel %vm305, 0, %v342
      %344 = vst [vmem:[%s302 + $0x94] sm:$0x8] %v343
      %v345 = vld [vmem:[%s302 + $0xa0] sm:$0x8]
      %v346 = vsel %vm305, 0, %v345
      %347 = vst [vmem:[%s302 + $0xa0] sm:$0x8] %v346
      %v348 = vld [vmem:[%s302 + $0xac] sm:$0x8]
      %v349 = vsel %vm305, 0, %v348
      %350 = vst [vmem:[%s302 + $0xac] sm:$0x8] %v349
      %v351 = vld [vmem:[%s302 + $0xb8] sm:$0x8]
      %v352 = vsel %vm305, 0, %v351
      %353 = vst [vmem:[%s302 + $0xb8] sm:$0x8] %v352
      %v354 = vld [vmem:[%s219] sm:$0xff]
      %v355 = vld [vmem:[%s219 + $0x8] sm:$0xff]
      %v356 = vld [vmem:[%s219 + $0x10] sm:$0xff]
      %v357 = vld [vmem:[%s219 + $0x18] sm:$0xff]
      %v358 = vld [vmem:[%s219 + $0x20] sm:$0xff]
      %v359 = vld [vmem:[%s219 + $0x28] sm:$0xff]
      %v360 = vld [vmem:[%s219 + $0x30] sm:$0xff]
      %v361 = vld [vmem:[%s219 + $0x38] sm:$0xff]
      %v362 = vld [vmem:[%s219 + $0x40] sm:$0xff]
      %v363 = vld [vmem:[%s219 + $0x48] sm:$0xff]
      %v364 = vld [vmem:[%s219 + $0x50] sm:$0xff]
      %v365 = vld [vmem:[%s219 + $0x58] sm:$0xff]
      %v366 = vld [vmem:[%s219 + $0x60] sm:$0xff]
      %v367 = vld [vmem:[%s219 + $0x68] sm:$0xff]
      %v368 = vld [vmem:[%s219 + $0x70] sm:$0xff]
      %v369 = vld [vmem:[%s219 + $0x78] sm:$0xff]
      %v370 = vld [vmem:[%s219 + $0x80] sm:$0xff]
      %v371 = vld [vmem:[%s219 + $0x88] sm:$0xff]
      %v372 = vld [vmem:[%s219 + $0x90] sm:$0xff]
      %v373 = vld [vmem:[%s219 + $0x98] sm:$0xff]
      %v374 = vld [vmem:[%s219 + $0xa0] sm:$0xff]
      %v375 = vld [vmem:[%s219 + $0xa8] sm:$0xff]
      %v376 = vld [vmem:[%s219 + $0xb0] sm:$0xff]
      %v377 = vld [vmem:[%s219 + $0xb8] sm:$0xff]
      %v378 = vld [vmem:[%s219 + $0xc0] sm:$0xff]
      %v379 = vld [vmem:[%s219 + $0xc8] sm:$0xff]
      %v380 = vld [vmem:[%s219 + $0xd0] sm:$0xff]
      %v381 = vld [vmem:[%s219 + $0xd8] sm:$0xff]
      %v382 = vld [vmem:[%s219 + $0xe0] sm:$0xff]
      %v383 = vld [vmem:[%s219 + $0xe8] sm:$0xff]
      %v384 = vld [vmem:[%s219 + $0xf0] sm:$0xff]
      %v385 = vld [vmem:[%s219 + $0xf8] sm:$0xff]
      %v386 = vpack.c.bf16 %v355, %v354
      %v387 = vpack.c.bf16 %v357, %v356
      %v388 = vpack.c.bf16 %v359, %v358
      %v389 = vpack.c.bf16 %v361, %v360
      %v390 = vpack.c.bf16 %v363, %v362
      %v391 = vpack.c.bf16 %v365, %v364
      %v392 = vpack.c.bf16 %v367, %v366
      %v393 = vpack.c.bf16 %v369, %v368
      %v394 = vpack.c.bf16 %v371, %v370
      %v395 = vpack.c.bf16 %v373, %v372
      %v396 = vpack.c.bf16 %v375, %v374
      %v397 = vpack.c.bf16 %v377, %v376
      %v398 = vpack.c.bf16 %v379, %v378
      %v399 = vpack.c.bf16 %v381, %v380
      %v400 = vpack.c.bf16 %v383, %v382
      %v401 = vpack.c.bf16 %v385, %v384
      %v418 = vunpack.c.l.b16 %v386
      %v419 = vunpack.c.h.b16 %v386
      %v420 = vunpack.c.l.b16 %v387
      %v421 = vunpack.c.h.b16 %v387
      %v422 = vunpack.c.l.b16 %v388
      %v423 = vunpack.c.h.b16 %v388
      %v424 = vunpack.c.l.b16 %v389
      %v425 = vunpack.c.h.b16 %v389
      %v426 = vunpack.c.l.b16 %v390
      %v427 = vunpack.c.h.b16 %v390
      %v428 = vunpack.c.l.b16 %v391
      %v429 = vunpack.c.h.b16 %v391
      %v430 = vunpack.c.l.b16 %v392
      %v431 = vunpack.c.h.b16 %v392
      %v432 = vunpack.c.l.b16 %v393
      %v433 = vunpack.c.h.b16 %v393
      %v434 = vunpack.c.l.b16 %v394
      %v435 = vunpack.c.h.b16 %v394
      %v436 = vunpack.c.l.b16 %v395
      %v437 = vunpack.c.h.b16 %v395
      %v438 = vunpack.c.l.b16 %v396
      %v439 = vunpack.c.h.b16 %v396
      %v440 = vunpack.c.l.b16 %v397
      %v441 = vunpack.c.h.b16 %v397
      %v442 = vunpack.c.l.b16 %v398
      %v443 = vunpack.c.h.b16 %v398
      %v444 = vunpack.c.l.b16 %v399
      %v445 = vunpack.c.h.b16 %v399
      %v446 = vunpack.c.l.b16 %v400
      %v447 = vunpack.c.h.b16 %v400
      %v448 = vunpack.c.l.b16 %v401
      %v449 = vunpack.c.h.b16 %v401
      %v450 = vpack.c.b16 %v418, %v418
      %v451 = vpack.c.b16 %v419, %v419
      %v452 = vpack.c.b16 %v420, %v420
      %v453 = vpack.c.b16 %v421, %v421
      %v454 = vpack.c.b16 %v422, %v422
      %v455 = vpack.c.b16 %v423, %v423
      %v456 = vpack.c.b16 %v424, %v424
      %v457 = vpack.c.b16 %v425, %v425
      %v458 = vpack.c.b16 %v426, %v426
      %v459 = vpack.c.b16 %v427, %v427
      %v460 = vpack.c.b16 %v428, %v428
      %v461 = vpack.c.b16 %v429, %v429
      %v462 = vpack.c.b16 %v430, %v430
      %v463 = vpack.c.b16 %v431, %v431
      %v464 = vpack.c.b16 %v432, %v432
      %v465 = vpack.c.b16 %v433, %v433
      %v466 = vpack.c.b16 %v434, %v434
      %v467 = vpack.c.b16 %v435, %v435
      %v468 = vpack.c.b16 %v436, %v436
      %v469 = vpack.c.b16 %v437, %v437
      %v470 = vpack.c.b16 %v438, %v438
      %v471 = vpack.c.b16 %v439, %v439
      %v472 = vpack.c.b16 %v440, %v440
      %v473 = vpack.c.b16 %v441, %v441
      %v474 = vpack.c.b16 %v442, %v442
      %v475 = vpack.c.b16 %v443, %v443
      %v476 = vpack.c.b16 %v444, %v444
      %v477 = vpack.c.b16 %v445, %v445
      %v478 = vpack.c.b16 %v446, %v446
      %v479 = vpack.c.b16 %v447, %v447
      %v480 = vpack.c.b16 %v448, %v448
      %v481 = vpack.c.b16 %v449, %v449
      %vm482 = vsmask.f32 4368
      %vm483 = vmor %vm252, %vm482
      %v485 = vshrl.u32 %v450, 16
      %v487 = vrot.slane %v485, 7
      %v488 = vshll.u32 %v450, 16
      %v490 = vor.u32 %v487, %v488
      %v491 = vrot.slane %v487, 4
      %v493 = vshrl.u32 %v451, 16
      %v495 = vrot.slane %v493, 7
      %v496 = vshll.u32 %v451, 16
      %v498 = vor.u32 %v495, %v496
      %v499 = vsel %vm483, %v491, %v498
      %v500 = vrot.slane %v495, 4
      %v502 = vshrl.u32 %v452, 16
      %v504 = vrot.slane %v502, 7
      %v505 = vshll.u32 %v452, 16
      %v507 = vor.u32 %v504, %v505
      %v508 = vrot.slane %v504, 4
      %v510 = vshrl.u32 %v453, 16
      %v512 = vrot.slane %v510, 7
      %v513 = vshll.u32 %v453, 16
      %v515 = vor.u32 %v512, %v513
      %v516 = vsel %vm483, %v508, %v515
      %v517 = vrot.slane %v512, 4
      %v519 = vshrl.u32 %v454, 16
      %v521 = vrot.slane %v519, 7
      %v522 = vshll.u32 %v454, 16
      %v524 = vor.u32 %v521, %v522
      %v525 = vrot.slane %v521, 4
      %v527 = vshrl.u32 %v455, 16
      %v529 = vrot.slane %v527, 7
      %v530 = vshll.u32 %v455, 16
      %v532 = vor.u32 %v529, %v530
      %v533 = vsel %vm483, %v525, %v532
      %v534 = vrot.slane %v529, 4
      %v536 = vshrl.u32 %v456, 16
      %v538 = vrot.slane %v536, 7
      %v539 = vshll.u32 %v456, 16
      %v541 = vor.u32 %v538, %v539
      %v542 = vrot.slane %v538, 4
      %v544 = vshrl.u32 %v457, 16
      %v546 = vrot.slane %v544, 7
      %v547 = vshll.u32 %v457, 16
      %v549 = vor.u32 %v546, %v547
      %v550 = vsel %vm483, %v542, %v549
      %v551 = vrot.slane %v546, 4
      %v553 = vshrl.u32 %v458, 16
      %v555 = vrot.slane %v553, 7
      %v556 = vshll.u32 %v458, 16
      %v558 = vor.u32 %v555, %v556
      %v559 = vrot.slane %v555, 4
      %v561 = vshrl.u32 %v459, 16
      %v563 = vrot.slane %v561, 7
      %v564 = vshll.u32 %v459, 16
      %v566 = vor.u32 %v563, %v564
      %v567 = vsel %vm483, %v559, %v566
      %v568 = vrot.slane %v563, 4
      %v570 = vshrl.u32 %v460, 16
      %v572 = vrot.slane %v570, 7
      %v573 = vshll.u32 %v460, 16
      %v575 = vor.u32 %v572, %v573
      %v576 = vrot.slane %v572, 4
      %v578 = vshrl.u32 %v461, 16
      %v580 = vrot.slane %v578, 7
      %v581 = vshll.u32 %v461, 16
      %v583 = vor.u32 %v580, %v581
      %v584 = vsel %vm483, %v576, %v583
      %v585 = vrot.slane %v580, 4
      %v587 = vshrl.u32 %v462, 16
      %v589 = vrot.slane %v587, 7
      %v590 = vshll.u32 %v462, 16
      %v592 = vor.u32 %v589, %v590
      %v593 = vrot.slane %v589, 4
      %v595 = vshrl.u32 %v463, 16
      %v597 = vrot.slane %v595, 7
      %v598 = vshll.u32 %v463, 16
      %v600 = vor.u32 %v597, %v598
      %v601 = vsel %vm483, %v593, %v600
      %v602 = vrot.slane %v597, 4
      %v604 = vshrl.u32 %v464, 16
      %v606 = vrot.slane %v604, 7
      %v607 = vshll.u32 %v464, 16
      %v609 = vor.u32 %v606, %v607
      %v610 = vrot.slane %v606, 4
      %v612 = vshrl.u32 %v465, 16
      %v614 = vrot.slane %v612, 7
      %v615 = vshll.u32 %v465, 16
      %v617 = vor.u32 %v614, %v615
      %v618 = vsel %vm483, %v610, %v617
      %v619 = vrot.slane %v614, 4
      %v621 = vshrl.u32 %v466, 16
      %v623 = vrot.slane %v621, 7
      %v624 = vshll.u32 %v466, 16
      %v626 = vor.u32 %v623, %v624
      %v627 = vrot.slane %v623, 4
      %v629 = vshrl.u32 %v467, 16
      %v631 = vrot.slane %v629, 7
      %v632 = vshll.u32 %v467, 16
      %v634 = vor.u32 %v631, %v632
      %v635 = vsel %vm483, %v627, %v634
      %v636 = vrot.slane %v631, 4
      %v638 = vshrl.u32 %v468, 16
      %v640 = vrot.slane %v638, 7
      %v641 = vshll.u32 %v468, 16
      %v643 = vor.u32 %v640, %v641
      %v644 = vrot.slane %v640, 4
      %v646 = vshrl.u32 %v469, 16
      %v648 = vrot.slane %v646, 7
      %v649 = vshll.u32 %v469, 16
      %v651 = vor.u32 %v648, %v649
      %v652 = vsel %vm483, %v644, %v651
      %v653 = vrot.slane %v648, 4
      %v655 = vshrl.u32 %v470, 16
      %v657 = vrot.slane %v655, 7
      %v658 = vshll.u32 %v470, 16
      %v660 = vor.u32 %v657, %v658
      %v661 = vrot.slane %v657, 4
      %v663 = vshrl.u32 %v471, 16
      %v665 = vrot.slane %v663, 7
      %v666 = vshll.u32 %v471, 16
      %v668 = vor.u32 %v665, %v666
      %v669 = vsel %vm483, %v661, %v668
      %v670 = vrot.slane %v665, 4
      %v672 = vshrl.u32 %v472, 16
      %v674 = vrot.slane %v672, 7
      %v675 = vshll.u32 %v472, 16
      %v677 = vor.u32 %v674, %v675
      %v678 = vrot.slane %v674, 4
      %v680 = vshrl.u32 %v473, 16
      %v682 = vrot.slane %v680, 7
      %v683 = vshll.u32 %v473, 16
      %v685 = vor.u32 %v682, %v683
      %v686 = vsel %vm483, %v678, %v685
      %v687 = vrot.slane %v682, 4
      %v689 = vshrl.u32 %v474, 16
      %v691 = vrot.slane %v689, 7
      %v692 = vshll.u32 %v474, 16
      %v694 = vor.u32 %v691, %v692
      %v695 = vrot.slane %v691, 4
      %v697 = vshrl.u32 %v475, 16
      %v699 = vrot.slane %v697, 7
      %v700 = vshll.u32 %v475, 16
      %v702 = vor.u32 %v699, %v700
      %v703 = vsel %vm483, %v695, %v702
      %v704 = vrot.slane %v699, 4
      %v706 = vshrl.u32 %v476, 16
      %v708 = vrot.slane %v706, 7
      %v709 = vshll.u32 %v476, 16
      %v711 = vor.u32 %v708, %v709
      %v712 = vrot.slane %v708, 4
      %v714 = vshrl.u32 %v477, 16
      %v716 = vrot.slane %v714, 7
      %v717 = vshll.u32 %v477, 16
      %v719 = vor.u32 %v716, %v717
      %v720 = vsel %vm483, %v712, %v719
      %v721 = vrot.slane %v716, 4
      %v723 = vshrl.u32 %v478, 16
      %v725 = vrot.slane %v723, 7
      %v726 = vshll.u32 %v478, 16
      %v728 = vor.u32 %v725, %v726
      %v729 = vrot.slane %v725, 4
      %v731 = vshrl.u32 %v479, 16
      %v733 = vrot.slane %v731, 7
      %v734 = vshll.u32 %v479, 16
      %v736 = vor.u32 %v733, %v734
      %v737 = vsel %vm483, %v729, %v736
      %v738 = vrot.slane %v733, 4
      %v740 = vshrl.u32 %v480, 16
      %v742 = vrot.slane %v740, 7
      %v743 = vshll.u32 %v480, 16
      %v745 = vor.u32 %v742, %v743
      %v746 = vrot.slane %v742, 4
      %v748 = vshrl.u32 %v481, 16
      %v750 = vrot.slane %v748, 7
      %v751 = vshll.u32 %v481, 16
      %v753 = vor.u32 %v750, %v751
      %v754 = vsel %vm483, %v746, %v753
      %v755 = vrot.slane %v750, 4
      %vm804 = vcmask 60416
      %vm805 = vsmask.f32 7938
      %vm806 = vmand %vm804, %vm805
      %v807 = vld [vmem:[%s250] sm:$0xf]
      %v808 = vsel %vm806, %v490, %v807
      %809 = vst [vmem:[%s250] sm:$0xf] %v808
      %810 = vst.msk [vmem:[%s250 + $0x4] sm:$0xf] %vm226, %v499
      %v811 = vld [vmem:[%s250 + $0x8] sm:$0x1]
      %v812 = vsel %vm253, %v500, %v811
      %813 = vst [vmem:[%s250 + $0x8] sm:$0x1] %v812
      %v814 = vld [vmem:[%s250 + $0xc] sm:$0xf]
      %v815 = vsel %vm806, %v507, %v814
      %816 = vst [vmem:[%s250 + $0xc] sm:$0xf] %v815
      %817 = vst.msk [vmem:[%s250 + $0x10] sm:$0xf] %vm226, %v516
      %v818 = vld [vmem:[%s250 + $0x14] sm:$0x1]
      %v819 = vsel %vm253, %v517, %v818
      %820 = vst [vmem:[%s250 + $0x14] sm:$0x1] %v819
      %v821 = vld [vmem:[%s250 + $0x18] sm:$0xf]
      %v822 = vsel %vm806, %v524, %v821
      %823 = vst [vmem:[%s250 + $0x18] sm:$0xf] %v822
      %824 = vst.msk [vmem:[%s250 + $0x1c] sm:$0xf] %vm226, %v533
      %v825 = vld [vmem:[%s250 + $0x20] sm:$0x1]
      %v826 = vsel %vm253, %v534, %v825
      %827 = vst [vmem:[%s250 + $0x20] sm:$0x1] %v826
      %v828 = vld [vmem:[%s250 + $0x24] sm:$0xf]
      %v829 = vsel %vm806, %v541, %v828
      %830 = vst [vmem:[%s250 + $0x24] sm:$0xf] %v829
      %831 = vst.msk [vmem:[%s250 + $0x28] sm:$0xf] %vm226, %v550
      %v832 = vld [vmem:[%s250 + $0x2c] sm:$0x1]
      %v833 = vsel %vm253, %v551, %v832
      %834 = vst [vmem:[%s250 + $0x2c] sm:$0x1] %v833
      %v835 = vld [vmem:[%s250 + $0x30] sm:$0xf]
      %v836 = vsel %vm806, %v558, %v835
      %837 = vst [vmem:[%s250 + $0x30] sm:$0xf] %v836
      %838 = vst.msk [vmem:[%s250 + $0x34] sm:$0xf] %vm226, %v567
      %v839 = vld [vmem:[%s250 + $0x38] sm:$0x1]
      %v840 = vsel %vm253, %v568, %v839
      %841 = vst [vmem:[%s250 + $0x38] sm:$0x1] %v840
      %v842 = vld [vmem:[%s250 + $0x3c] sm:$0xf]
      %v843 = vsel %vm806, %v575, %v842
      %844 = vst [vmem:[%s250 + $0x3c] sm:$0xf] %v843
      %845 = vst.msk [vmem:[%s250 + $0x40] sm:$0xf] %vm226, %v584
      %v846 = vld [vmem:[%s250 + $0x44] sm:$0x1]
      %v847 = vsel %vm253, %v585, %v846
      %848 = vst [vmem:[%s250 + $0x44] sm:$0x1] %v847
      %v849 = vld [vmem:[%s250 + $0x48] sm:$0xf]
      %v850 = vsel %vm806, %v592, %v849
      %851 = vst [vmem:[%s250 + $0x48] sm:$0xf] %v850
      %852 = vst.msk [vmem:[%s250 + $0x4c] sm:$0xf] %vm226, %v601
      %v853 = vld [vmem:[%s250 + $0x50] sm:$0x1]
      %v854 = vsel %vm253, %v602, %v853
      %855 = vst [vmem:[%s250 + $0x50] sm:$0x1] %v854
      %v856 = vld [vmem:[%s250 + $0x54] sm:$0xf]
      %v857 = vsel %vm806, %v609, %v856
      %858 = vst [vmem:[%s250 + $0x54] sm:$0xf] %v857
      %859 = vst.msk [vmem:[%s250 + $0x58] sm:$0xf] %vm226, %v618
      %v860 = vld [vmem:[%s250 + $0x5c] sm:$0x1]
      %v861 = vsel %vm253, %v619, %v860
      %862 = vst [vmem:[%s250 + $0x5c] sm:$0x1] %v861
      %v863 = vld [vmem:[%s250 + $0x60] sm:$0xf]
      %v864 = vsel %vm806, %v626, %v863
      %865 = vst [vmem:[%s250 + $0x60] sm:$0xf] %v864
      %866 = vst.msk [vmem:[%s250 + $0x64] sm:$0xf] %vm226, %v635
      %v867 = vld [vmem:[%s250 + $0x68] sm:$0x1]
      %v868 = vsel %vm253, %v636, %v867
      %869 = vst [vmem:[%s250 + $0x68] sm:$0x1] %v868
      %v870 = vld [vmem:[%s250 + $0x6c] sm:$0xf]
      %v871 = vsel %vm806, %v643, %v870
      %872 = vst [vmem:[%s250 + $0x6c] sm:$0xf] %v871
      %873 = vst.msk [vmem:[%s250 + $0x70] sm:$0xf] %vm226, %v652
      %v874 = vld [vmem:[%s250 + $0x74] sm:$0x1]
      %v875 = vsel %vm253, %v653, %v874
      %876 = vst [vmem:[%s250 + $0x74] sm:$0x1] %v875
      %v877 = vld [vmem:[%s250 + $0x78] sm:$0xf]
      %v878 = vsel %vm806, %v660, %v877
      %879 = vst [vmem:[%s250 + $0x78] sm:$0xf] %v878
      %880 = vst.msk [vmem:[%s250 + $0x7c] sm:$0xf] %vm226, %v669
      %v881 = vld [vmem:[%s250 + $0x80] sm:$0x1]
      %v882 = vsel %vm253, %v670, %v881
      %883 = vst [vmem:[%s250 + $0x80] sm:$0x1] %v882
      %v884 = vld [vmem:[%s250 + $0x84] sm:$0xf]
      %v885 = vsel %vm806, %v677, %v884
      %886 = vst [vmem:[%s250 + $0x84] sm:$0xf] %v885
      %887 = vst.msk [vmem:[%s250 + $0x88] sm:$0xf] %vm226, %v686
      %v888 = vld [vmem:[%s250 + $0x8c] sm:$0x1]
      %v889 = vsel %vm253, %v687, %v888
      %890 = vst [vmem:[%s250 + $0x8c] sm:$0x1] %v889
      %v891 = vld [vmem:[%s250 + $0x90] sm:$0xf]
      %v892 = vsel %vm806, %v694, %v891
      %893 = vst [vmem:[%s250 + $0x90] sm:$0xf] %v892
      %894 = vst.msk [vmem:[%s250 + $0x94] sm:$0xf] %vm226, %v703
      %v895 = vld [vmem:[%s250 + $0x98] sm:$0x1]
      %v896 = vsel %vm253, %v704, %v895
      %897 = vst [vmem:[%s250 + $0x98] sm:$0x1] %v896
      %v898 = vld [vmem:[%s250 + $0x9c] sm:$0xf]
      %v899 = vsel %vm806, %v711, %v898
      %900 = vst [vmem:[%s250 + $0x9c] sm:$0xf] %v899
      %901 = vst.msk [vmem:[%s250 + $0xa0] sm:$0xf] %vm226, %v720
      %v902 = vld [vmem:[%s250 + $0xa4] sm:$0x1]
      %v903 = vsel %vm253, %v721, %v902
      %904 = vst [vmem:[%s250 + $0xa4] sm:$0x1] %v903
      %v905 = vld [vmem:[%s250 + $0xa8] sm:$0xf]
      %v906 = vsel %vm806, %v728, %v905
      %907 = vst [vmem:[%s250 + $0xa8] sm:$0xf] %v906
      %908 = vst.msk [vmem:[%s250 + $0xac] sm:$0xf] %vm226, %v737
      %v909 = vld [vmem:[%s250 + $0xb0] sm:$0x1]
      %v910 = vsel %vm253, %v738, %v909
      %911 = vst [vmem:[%s250 + $0xb0] sm:$0x1] %v910
      %v912 = vld [vmem:[%s250 + $0xb4] sm:$0xf]
      %v913 = vsel %vm806, %v745, %v912
      %914 = vst [vmem:[%s250 + $0xb4] sm:$0xf] %v913
      %915 = vst.msk [vmem:[%s250 + $0xb8] sm:$0xf] %vm226, %v754
      %v916 = vld [vmem:[%s250 + $0xbc] sm:$0x1]
      %v917 = vsel %vm253, %v755, %v916
      %918 = vst [vmem:[%s250 + $0xbc] sm:$0x1] %v917
      %s951 = scalar_lea.vmem [#allocation2], 228
      %952 = vst.msk [vmem:[%s951] sm:$0xf] %vm226, %v450
      %953 = vst.msk [vmem:[%s951 + $0x4] sm:$0xf] %vm226, %v451
      %954 = vst.msk [vmem:[%s951 + $0xc] sm:$0xf] %vm226, %v452
      %955 = vst.msk [vmem:[%s951 + $0x10] sm:$0xf] %vm226, %v453
      %956 = vst.msk [vmem:[%s951 + $0x18] sm:$0xf] %vm226, %v454
      %957 = vst.msk [vmem:[%s951 + $0x1c] sm:$0xf] %vm226, %v455
      %958 = vst.msk [vmem:[%s951 + $0x24] sm:$0xf] %vm226, %v456
      %959 = vst.msk [vmem:[%s951 + $0x28] sm:$0xf] %vm226, %v457
      %960 = vst.msk [vmem:[%s951 + $0x30] sm:$0xf] %vm226, %v458
      %961 = vst.msk [vmem:[%s951 + $0x34] sm:$0xf] %vm226, %v459
      %962 = vst.msk [vmem:[%s951 + $0x3c] sm:$0xf] %vm226, %v460
      %963 = vst.msk [vmem:[%s951 + $0x40] sm:$0xf] %vm226, %v461
      %964 = vst.msk [vmem:[%s951 + $0x48] sm:$0xf] %vm226, %v462
      %965 = vst.msk [vmem:[%s951 + $0x4c] sm:$0xf] %vm226, %v463
      %966 = vst.msk [vmem:[%s951 + $0x54] sm:$0xf] %vm226, %v464
      %967 = vst.msk [vmem:[%s951 + $0x58] sm:$0xf] %vm226, %v465
      %968 = vst.msk [vmem:[%s951 + $0x60] sm:$0xf] %vm226, %v466
      %969 = vst.msk [vmem:[%s951 + $0x64] sm:$0xf] %vm226, %v467
      %970 = vst.msk [vmem:[%s951 + $0x6c] sm:$0xf] %vm226, %v468
      %971 = vst.msk [vmem:[%s951 + $0x70] sm:$0xf] %vm226, %v469
      %972 = vst.msk [vmem:[%s951 + $0x78] sm:$0xf] %vm226, %v470
      %973 = vst.msk [vmem:[%s951 + $0x7c] sm:$0xf] %vm226, %v471
      %974 = vst.msk [vmem:[%s951 + $0x84] sm:$0xf] %vm226, %v472
      %975 = vst.msk [vmem:[%s951 + $0x88] sm:$0xf] %vm226, %v473
      %976 = vst.msk [vmem:[%s951 + $0x90] sm:$0xf] %vm226, %v474
      %977 = vst.msk [vmem:[%s951 + $0x94] sm:$0xf] %vm226, %v475
      %978 = vst.msk [vmem:[%s951 + $0x9c] sm:$0xf] %vm226, %v476
      %979 = vst.msk [vmem:[%s951 + $0xa0] sm:$0xf] %vm226, %v477
      %980 = vst.msk [vmem:[%s951 + $0xa8] sm:$0xf] %vm226, %v478
      %981 = vst.msk [vmem:[%s951 + $0xac] sm:$0xf] %vm226, %v479
      %982 = vst.msk [vmem:[%s951 + $0xb4] sm:$0xf] %vm226, %v480
      %983 = vst.msk [vmem:[%s951 + $0xb8] sm:$0xf] %vm226, %v481
      %vm984 = vsmask.f32 3328
      %vm985 = vsmask.f32 7440
      %vm986 = vmor %vm984, %vm985
      %v987 = vrot.slane %v485, 4
      %v988 = vrot.slane %v488, 5
      %v989 = vor.u32 %v987, %v988
      %v990 = vrot.slane %v989, 4
      %v991 = vrot.slane %v496, 5
      %v992 = vsel %vm986, %v990, %v991
      %v993 = vrot.slane %v493, 4
      %v994 = vor.u32 %v993, %v991
      %v995 = vrot.slane %v994, 4
      %v996 = vrot.slane %v502, 4
      %v997 = vrot.slane %v505, 5
      %v998 = vor.u32 %v996, %v997
      %v999 = vrot.slane %v998, 4
      %v1000 = vrot.slane %v513, 5
      %v1001 = vsel %vm986, %v999, %v1000
      %v1002 = vrot.slane %v510, 4
      %v1003 = vor.u32 %v1002, %v1000
      %v1004 = vrot.slane %v1003, 4
      %v1005 = vrot.slane %v519, 4
      %v1006 = vrot.slane %v522, 5
      %v1007 = vor.u32 %v1005, %v1006
      %v1008 = vrot.slane %v1007, 4
      %v1009 = vrot.slane %v530, 5
      %v1010 = vsel %vm986, %v1008, %v1009
      %v1011 = vrot.slane %v527, 4
      %v1012 = vor.u32 %v1011, %v1009
      %v1013 = vrot.slane %v1012, 4
      %v1014 = vrot.slane %v536, 4
      %v1015 = vrot.slane %v539, 5
      %v1016 = vor.u32 %v1014, %v1015
      %v1017 = vrot.slane %v1016, 4
      %v1018 = vrot.slane %v547, 5
      %v1019 = vsel %vm986, %v1017, %v1018
      %v1020 = vrot.slane %v544, 4
      %v1021 = vor.u32 %v1020, %v1018
      %v1022 = vrot.slane %v1021, 4
      %v1023 = vrot.slane %v553, 4
      %v1024 = vrot.slane %v556, 5
      %v1025 = vor.u32 %v1023, %v1024
      %v1026 = vrot.slane %v1025, 4
      %v1027 = vrot.slane %v564, 5
      %v1028 = vsel %vm986, %v1026, %v1027
      %v1029 = vrot.slane %v561, 4
      %v1030 = vor.u32 %v1029, %v1027
      %v1031 = vrot.slane %v1030, 4
      %v1032 = vrot.slane %v570, 4
      %v1033 = vrot.slane %v573, 5
      %v1034 = vor.u32 %v1032, %v1033
      %v1035 = vrot.slane %v1034, 4
      %v1036 = vrot.slane %v581, 5
      %v1037 = vsel %vm986, %v1035, %v1036
      %v1038 = vrot.slane %v578, 4
      %v1039 = vor.u32 %v1038, %v1036
      %v1040 = vrot.slane %v1039, 4
      %v1041 = vrot.slane %v587, 4
      %v1042 = vrot.slane %v590, 5
      %v1043 = vor.u32 %v1041, %v1042
      %v1044 = vrot.slane %v1043, 4
      %v1045 = vrot.slane %v598, 5
      %v1046 = vsel %vm986, %v1044, %v1045
      %v1047 = vrot.slane %v595, 4
      %v1048 = vor.u32 %v1047, %v1045
      %v1049 = vrot.slane %v1048, 4
      %v1050 = vrot.slane %v604, 4
      %v1051 = vrot.slane %v607, 5
      %v1052 = vor.u32 %v1050, %v1051
      %v1053 = vrot.slane %v1052, 4
      %v1054 = vrot.slane %v615, 5
      %v1055 = vsel %vm986, %v1053, %v1054
      %v1056 = vrot.slane %v612, 4
      %v1057 = vor.u32 %v1056, %v1054
      %v1058 = vrot.slane %v1057, 4
      %v1059 = vrot.slane %v621, 4
      %v1060 = vrot.slane %v624, 5
      %v1061 = vor.u32 %v1059, %v1060
      %v1062 = vrot.slane %v1061, 4
      %v1063 = vrot.slane %v632, 5
      %v1064 = vsel %vm986, %v1062, %v1063
      %v1065 = vrot.slane %v629, 4
      %v1066 = vor.u32 %v1065, %v1063
      %v1067 = vrot.slane %v1066, 4
      %v1068 = vrot.slane %v638, 4
      %v1069 = vrot.slane %v641, 5
      %v1070 = vor.u32 %v1068, %v1069
      %v1071 = vrot.slane %v1070, 4
      %v1072 = vrot.slane %v649, 5
      %v1073 = vsel %vm986, %v1071, %v1072
      %v1074 = vrot.slane %v646, 4
      %v1075 = vor.u32 %v1074, %v1072
      %v1076 = vrot.slane %v1075, 4
      %v1077 = vrot.slane %v655, 4
      %v1078 = vrot.slane %v658, 5
      %v1079 = vor.u32 %v1077, %v1078
      %v1080 = vrot.slane %v1079, 4
      %v1081 = vrot.slane %v666, 5
      %v1082 = vsel %vm986, %v1080, %v1081
      %v1083 = vrot.slane %v663, 4
      %v1084 = vor.u32 %v1083, %v1081
      %v1085 = vrot.slane %v1084, 4
      %v1086 = vrot.slane %v672, 4
      %v1087 = vrot.slane %v675, 5
      %v1088 = vor.u32 %v1086, %v1087
      %v1089 = vrot.slane %v1088, 4
      %v1090 = vrot.slane %v683, 5
      %v1091 = vsel %vm986, %v1089, %v1090
      %v1092 = vrot.slane %v680, 4
      %v1093 = vor.u32 %v1092, %v1090
      %v1094 = vrot.slane %v1093, 4
      %v1095 = vrot.slane %v689, 4
      %v1096 = vrot.slane %v692, 5
      %v1097 = vor.u32 %v1095, %v1096
      %v1098 = vrot.slane %v1097, 4
      %v1099 = vrot.slane %v700, 5
      %v1100 = vsel %vm986, %v1098, %v1099
      %v1101 = vrot.slane %v697, 4
      %v1102 = vor.u32 %v1101, %v1099
      %v1103 = vrot.slane %v1102, 4
      %v1104 = vrot.slane %v706, 4
      %v1105 = vrot.slane %v709, 5
      %v1106 = vor.u32 %v1104, %v1105
      %v1107 = vrot.slane %v1106, 4
      %v1108 = vrot.slane %v717, 5
      %v1109 = vsel %vm986, %v1107, %v1108
      %v1110 = vrot.slane %v714, 4
      %v1111 = vor.u32 %v1110, %v1108
      %v1112 = vrot.slane %v1111, 4
      %v1113 = vrot.slane %v723, 4
      %v1114 = vrot.slane %v726, 5
      %v1115 = vor.u32 %v1113, %v1114
      %v1116 = vrot.slane %v1115, 4
      %v1117 = vrot.slane %v734, 5
      %v1118 = vsel %vm986, %v1116, %v1117
      %v1119 = vrot.slane %v731, 4
      %v1120 = vor.u32 %v1119, %v1117
      %v1121 = vrot.slane %v1120, 4
      %v1122 = vrot.slane %v740, 4
      %v1123 = vrot.slane %v743, 5
      %v1124 = vor.u32 %v1122, %v1123
      %v1125 = vrot.slane %v1124, 4
      %v1126 = vrot.slane %v751, 5
      %v1127 = vsel %vm986, %v1125, %v1126
      %v1128 = vrot.slane %v748, 4
      %v1129 = vor.u32 %v1128, %v1126
      %v1130 = vrot.slane %v1129, 4
      %1163 = vst.msk [vmem:[%s302] sm:$0xf] %vm226, %v992
      %vm1164 = vmand %vm804, %vm984
      %v1165 = vld [vmem:[%s302 + $0x4] sm:$0xf]
      %v1166 = vsel %vm1164, %v995, %v1165
      %1167 = vst [vmem:[%s302 + $0x4] sm:$0xf] %v1166
      %1168 = vst.msk [vmem:[%s302 + $0xc] sm:$0xf] %vm226, %v1001
      %v1169 = vld [vmem:[%s302 + $0x10] sm:$0xf]
      %v1170 = vsel %vm1164, %v1004, %v1169
      %1171 = vst [vmem:[%s302 + $0x10] sm:$0xf] %v1170
      %1172 = vst.msk [vmem:[%s302 + $0x18] sm:$0xf] %vm226, %v1010
      %v1173 = vld [vmem:[%s302 + $0x1c] sm:$0xf]
      %v1174 = vsel %vm1164, %v1013, %v1173
      %1175 = vst [vmem:[%s302 + $0x1c] sm:$0xf] %v1174
      %1176 = vst.msk [vmem:[%s302 + $0x24] sm:$0xf] %vm226, %v1019
      %v1177 = vld [vmem:[%s302 + $0x28] sm:$0xf]
      %v1178 = vsel %vm1164, %v1022, %v1177
      %1179 = vst [vmem:[%s302 + $0x28] sm:$0xf] %v1178
      %1180 = vst.msk [vmem:[%s302 + $0x30] sm:$0xf] %vm226, %v1028
      %v1181 = vld [vmem:[%s302 + $0x34] sm:$0xf]
      %v1182 = vsel %vm1164, %v1031, %v1181
      %1183 = vst [vmem:[%s302 + $0x34] sm:$0xf] %v1182
      %1184 = vst.msk [vmem:[%s302 + $0x3c] sm:$0xf] %vm226, %v1037
      %v1185 = vld [vmem:[%s302 + $0x40] sm:$0xf]
      %v1186 = vsel %vm1164, %v1040, %v1185
      %1187 = vst [vmem:[%s302 + $0x40] sm:$0xf] %v1186
      %1188 = vst.msk [vmem:[%s302 + $0x48] sm:$0xf] %vm226, %v1046
      %v1189 = vld [vmem:[%s302 + $0x4c] sm:$0xf]
      %v1190 = vsel %vm1164, %v1049, %v1189
      %1191 = vst [vmem:[%s302 + $0x4c] sm:$0xf] %v1190
      %1192 = vst.msk [vmem:[%s302 + $0x54] sm:$0xf] %vm226, %v1055
      %v1193 = vld [vmem:[%s302 + $0x58] sm:$0xf]
      %v1194 = vsel %vm1164, %v1058, %v1193
      %1195 = vst [vmem:[%s302 + $0x58] sm:$0xf] %v1194
      %1196 = vst.msk [vmem:[%s302 + $0x60] sm:$0xf] %vm226, %v1064
      %v1197 = vld [vmem:[%s302 + $0x64] sm:$0xf]
      %v1198 = vsel %vm1164, %v1067, %v1197
      %1199 = vst [vmem:[%s302 + $0x64] sm:$0xf] %v1198
      %1200 = vst.msk [vmem:[%s302 + $0x6c] sm:$0xf] %vm226, %v1073
      %v1201 = vld [vmem:[%s302 + $0x70] sm:$0xf]
      %v1202 = vsel %vm1164, %v1076, %v1201
      %1203 = vst [vmem:[%s302 + $0x70] sm:$0xf] %v1202
      %1204 = vst.msk [vmem:[%s302 + $0x78] sm:$0xf] %vm226, %v1082
      %v1205 = vld [vmem:[%s302 + $0x7c] sm:$0xf]
      %v1206 = vsel %vm1164, %v1085, %v1205
      %1207 = vst [vmem:[%s302 + $0x7c] sm:$0xf] %v1206
      %1208 = vst.msk [vmem:[%s302 + $0x84] sm:$0xf] %vm226, %v1091
      %v1209 = vld [vmem:[%s302 + $0x88] sm:$0xf]
      %v1210 = vsel %vm1164, %v1094, %v1209
      %1211 = vst [vmem:[%s302 + $0x88] sm:$0xf] %v1210
      %1212 = vst.msk [vmem:[%s302 + $0x90] sm:$0xf] %vm226, %v1100
      %v1213 = vld [vmem:[%s302 + $0x94] sm:$0xf]
      %v1214 = vsel %vm1164, %v1103, %v1213
      %1215 = vst [vmem:[%s302 + $0x94] sm:$0xf] %v1214
      %1216 = vst.msk [vmem:[%s302 + $0x9c] sm:$0xf] %vm226, %v1109
      %v1217 = vld [vmem:[%s302 + $0xa0] sm:$0xf]
      %v1218 = vsel %vm1164, %v1112, %v1217
      %1219 = vst [vmem:[%s302 + $0xa0] sm:$0xf] %v1218
      %1220 = vst.msk [vmem:[%s302 + $0xa8] sm:$0xf] %vm226, %v1118
      %v1221 = vld [vmem:[%s302 + $0xac] sm:$0xf]
      %v1222 = vsel %vm1164, %v1121, %v1221
      %1223 = vst [vmem:[%s302 + $0xac] sm:$0xf] %v1222
      %1224 = vst.msk [vmem:[%s302 + $0xb4] sm:$0xf] %vm226, %v1127
      %v1225 = vld [vmem:[%s302 + $0xb8] sm:$0xf]
      %v1226 = vsel %vm1164, %v1130, %v1225
      %1227 = vst [vmem:[%s302 + $0xb8] sm:$0xf] %v1226
      %v1228 = vld [vmem:[#allocation2] sm:$0xf]
      %v1229 = vld [vmem:[#allocation2 + $0x4] sm:$0xf]
      %v1230 = vld [vmem:[#allocation2 + $0xc] sm:$0xf]
      %v1231 = vld [vmem:[#allocation2 + $0x10] sm:$0xf]
      %v1232 = vld [vmem:[#allocation2 + $0x18] sm:$0xf]
      %v1233 = vld [vmem:[#allocation2 + $0x1c] sm:$0xf]
      %v1234 = vld [vmem:[#allocation2 + $0x24] sm:$0xf]
      %v1235 = vld [vmem:[#allocation2 + $0x28] sm:$0xf]
      %v1236 = vld [vmem:[#allocation2 + $0x30] sm:$0xf]
      %v1237 = vld [vmem:[#allocation2 + $0x34] sm:$0xf]
      %v1238 = vld [vmem:[#allocation2 + $0x3c] sm:$0xf]
      %v1239 = vld [vmem:[#allocation2 + $0x40] sm:$0xf]
      %v1240 = vld [vmem:[#allocation2 + $0x48] sm:$0xf]
      %v1241 = vld [vmem:[#allocation2 + $0x4c] sm:$0xf]
      %v1242 = vld [vmem:[#allocation2 + $0x54] sm:$0xf]
      %v1243 = vld [vmem:[#allocation2 + $0x58] sm:$0xf]
      %v1244 = vld [vmem:[#allocation2 + $0x60] sm:$0xf]
      %v1245 = vld [vmem:[#allocation2 + $0x64] sm:$0xf]
      %v1246 = vld [vmem:[#allocation2 + $0x6c] sm:$0xf]
      %v1247 = vld [vmem:[#allocation2 + $0x70] sm:$0xf]
      %v1248 = vld [vmem:[#allocation2 + $0x78] sm:$0xf]
      %v1249 = vld [vmem:[#allocation2 + $0x7c] sm:$0xf]
      %v1250 = vld [vmem:[#allocation2 + $0x84] sm:$0xf]
      %v1251 = vld [vmem:[#allocation2 + $0x88] sm:$0xf]
      %v1252 = vld [vmem:[#allocation2 + $0x90] sm:$0xf]
      %v1253 = vld [vmem:[#allocation2 + $0x94] sm:$0xf]
      %v1254 = vld [vmem:[#allocation2 + $0x9c] sm:$0xf]
      %v1255 = vld [vmem:[#allocation2 + $0xa0] sm:$0xf]
      %v1256 = vld [vmem:[#allocation2 + $0xa8] sm:$0xf]
      %v1257 = vld [vmem:[#allocation2 + $0xac] sm:$0xf]
      %v1258 = vld [vmem:[#allocation2 + $0xb4] sm:$0xf]
      %v1259 = vld [vmem:[#allocation2 + $0xb8] sm:$0xf]
      %v1260 = vld [vmem:[%s234] sm:$0xf]
      %v1261 = vld [vmem:[%s234 + $0x4] sm:$0xf]
      %v1262 = vld [vmem:[%s234 + $0xc] sm:$0xf]
      %v1263 = vld [vmem:[%s234 + $0x10] sm:$0xf]
      %v1264 = vld [vmem:[%s234 + $0x18] sm:$0xf]
      %v1265 = vld [vmem:[%s234 + $0x1c] sm:$0xf]
      %v1266 = vld [vmem:[%s234 + $0x24] sm:$0xf]
      %v1267 = vld [vmem:[%s234 + $0x28] sm:$0xf]
      %v1268 = vld [vmem:[%s234 + $0x30] sm:$0xf]
      %v1269 = vld [vmem:[%s234 + $0x34] sm:$0xf]
      %v1270 = vld [vmem:[%s234 + $0x3c] sm:$0xf]
      %v1271 = vld [vmem:[%s234 + $0x40] sm:$0xf]
      %v1272 = vld [vmem:[%s234 + $0x48] sm:$0xf]
      %v1273 = vld [vmem:[%s234 + $0x4c] sm:$0xf]
      %v1274 = vld [vmem:[%s234 + $0x54] sm:$0xf]
      %v1275 = vld [vmem:[%s234 + $0x58] sm:$0xf]
      %v1276 = vld [vmem:[%s234 + $0x60] sm:$0xf]
      %v1277 = vld [vmem:[%s234 + $0x64] sm:$0xf]
      %v1278 = vld [vmem:[%s234 + $0x6c] sm:$0xf]
      %v1279 = vld [vmem:[%s234 + $0x70] sm:$0xf]
      %v1280 = vld [vmem:[%s234 + $0x78] sm:$0xf]
      %v1281 = vld [vmem:[%s234 + $0x7c] sm:$0xf]
      %v1282 = vld [vmem:[%s234 + $0x84] sm:$0xf]
      %v1283 = vld [vmem:[%s234 + $0x88] sm:$0xf]
      %v1284 = vld [vmem:[%s234 + $0x90] sm:$0xf]
      %v1285 = vld [vmem:[%s234 + $0x94] sm:$0xf]
      %v1286 = vld [vmem:[%s234 + $0x9c] sm:$0xf]
      %v1287 = vld [vmem:[%s234 + $0xa0] sm:$0xf]
      %v1288 = vld [vmem:[%s234 + $0xa8] sm:$0xf]
      %v1289 = vld [vmem:[%s234 + $0xac] sm:$0xf]
      %v1290 = vld [vmem:[%s234 + $0xb4] sm:$0xf]
      %v1291 = vld [vmem:[%s234 + $0xb8] sm:$0xf]
      %v1292 = vld [vmem:[%s242] sm:$0xf]
      %v1293 = vld [vmem:[%s242 + $0x4] sm:$0xf]
      %v1294 = vld [vmem:[%s242 + $0xc] sm:$0xf]
      %v1295 = vld [vmem:[%s242 + $0x10] sm:$0xf]
      %v1296 = vld [vmem:[%s242 + $0x18] sm:$0xf]
      %v1297 = vld [vmem:[%s242 + $0x1c] sm:$0xf]
      %v1298 = vld [vmem:[%s242 + $0x24] sm:$0xf]
      %v1299 = vld [vmem:[%s242 + $0x28] sm:$0xf]
      %v1300 = vld [vmem:[%s242 + $0x30] sm:$0xf]
      %v1301 = vld [vmem:[%s242 + $0x34] sm:$0xf]
      %v1302 = vld [vmem:[%s242 + $0x3c] sm:$0xf]
      %v1303 = vld [vmem:[%s242 + $0x40] sm:$0xf]
      %v1304 = vld [vmem:[%s242 + $0x48] sm:$0xf]
      %v1305 = vld [vmem:[%s242 + $0x4c] sm:$0xf]
      %v1306 = vld [vmem:[%s242 + $0x54] sm:$0xf]
      %v1307 = vld [vmem:[%s242 + $0x58] sm:$0xf]
      %v1308 = vld [vmem:[%s242 + $0x60] sm:$0xf]
      %v1309 = vld [vmem:[%s242 + $0x64] sm:$0xf]
      %v1310 = vld [vmem:[%s242 + $0x6c] sm:$0xf]
      %v1311 = vld [vmem:[%s242 + $0x70] sm:$0xf]
      %v1312 = vld [vmem:[%s242 + $0x78] sm:$0xf]
      %v1313 = vld [vmem:[%s242 + $0x7c] sm:$0xf]
      %v1314 = vld [vmem:[%s242 + $0x84] sm:$0xf]
      %v1315 = vld [vmem:[%s242 + $0x88] sm:$0xf]
      %v1316 = vld [vmem:[%s242 + $0x90] sm:$0xf]
      %v1317 = vld [vmem:[%s242 + $0x94] sm:$0xf]
      %v1318 = vld [vmem:[%s242 + $0x9c] sm:$0xf]
      %v1319 = vld [vmem:[%s242 + $0xa0] sm:$0xf]
      %v1320 = vld [vmem:[%s242 + $0xa8] sm:$0xf]
      %v1321 = vld [vmem:[%s242 + $0xac] sm:$0xf]
      %v1322 = vld [vmem:[%s242 + $0xb4] sm:$0xf]
      %v1323 = vld [vmem:[%s242 + $0xb8] sm:$0xf]
      %v1356 = vunpack.c.l.b16 %v1228
      %v1357 = vunpack.c.l.b16 %v1229
      %v1358 = vunpack.c.l.b16 %v1230
      %v1359 = vunpack.c.l.b16 %v1231
      %v1360 = vunpack.c.l.b16 %v1232
      %v1361 = vunpack.c.l.b16 %v1233
      %v1362 = vunpack.c.l.b16 %v1234
      %v1363 = vunpack.c.l.b16 %v1235
      %v1364 = vunpack.c.l.b16 %v1236
      %v1365 = vunpack.c.l.b16 %v1237
      %v1366 = vunpack.c.l.b16 %v1238
      %v1367 = vunpack.c.l.b16 %v1239
      %v1368 = vunpack.c.l.b16 %v1240
      %v1369 = vunpack.c.l.b16 %v1241
      %v1370 = vunpack.c.l.b16 %v1242
      %v1371 = vunpack.c.l.b16 %v1243
      %v1372 = vunpack.c.l.b16 %v1244
      %v1373 = vunpack.c.l.b16 %v1245
      %v1374 = vunpack.c.l.b16 %v1246
      %v1375 = vunpack.c.l.b16 %v1247
      %v1376 = vunpack.c.l.b16 %v1248
      %v1377 = vunpack.c.l.b16 %v1249
      %v1378 = vunpack.c.l.b16 %v1250
      %v1379 = vunpack.c.l.b16 %v1251
      %v1380 = vunpack.c.l.b16 %v1252
      %v1381 = vunpack.c.l.b16 %v1253
      %v1382 = vunpack.c.l.b16 %v1254
      %v1383 = vunpack.c.l.b16 %v1255
      %v1384 = vunpack.c.l.b16 %v1256
      %v1385 = vunpack.c.l.b16 %v1257
      %v1386 = vunpack.c.l.b16 %v1258
      %v1387 = vunpack.c.l.b16 %v1259
      %v1388 = vpack.c.b16 %v1357, %v1356
      %v1389 = vpack.c.b16 %v1359, %v1358
      %v1390 = vpack.c.b16 %v1361, %v1360
      %v1391 = vpack.c.b16 %v1363, %v1362
      %v1392 = vpack.c.b16 %v1365, %v1364
      %v1393 = vpack.c.b16 %v1367, %v1366
      %v1394 = vpack.c.b16 %v1369, %v1368
      %v1395 = vpack.c.b16 %v1371, %v1370
      %v1396 = vpack.c.b16 %v1373, %v1372
      %v1397 = vpack.c.b16 %v1375, %v1374
      %v1398 = vpack.c.b16 %v1377, %v1376
      %v1399 = vpack.c.b16 %v1379, %v1378
      %v1400 = vpack.c.b16 %v1381, %v1380
      %v1401 = vpack.c.b16 %v1383, %v1382
      %v1402 = vpack.c.b16 %v1385, %v1384
      %v1403 = vpack.c.b16 %v1387, %v1386
      %v1436 = vunpack.c.l.b16 %v1260
      %v1437 = vunpack.c.l.b16 %v1261
      %v1438 = vunpack.c.l.b16 %v1262
      %v1439 = vunpack.c.l.b16 %v1263
      %v1440 = vunpack.c.l.b16 %v1264
      %v1441 = vunpack.c.l.b16 %v1265
      %v1442 = vunpack.c.l.b16 %v1266
      %v1443 = vunpack.c.l.b16 %v1267
      %v1444 = vunpack.c.l.b16 %v1268
      %v1445 = vunpack.c.l.b16 %v1269
      %v1446 = vunpack.c.l.b16 %v1270
      %v1447 = vunpack.c.l.b16 %v1271
      %v1448 = vunpack.c.l.b16 %v1272
      %v1449 = vunpack.c.l.b16 %v1273
      %v1450 = vunpack.c.l.b16 %v1274
      %v1451 = vunpack.c.l.b16 %v1275
      %v1452 = vunpack.c.l.b16 %v1276
      %v1453 = vunpack.c.l.b16 %v1277
      %v1454 = vunpack.c.l.b16 %v1278
      %v1455 = vunpack.c.l.b16 %v1279
      %v1456 = vunpack.c.l.b16 %v1280
      %v1457 = vunpack.c.l.b16 %v1281
      %v1458 = vunpack.c.l.b16 %v1282
      %v1459 = vunpack.c.l.b16 %v1283
      %v1460 = vunpack.c.l.b16 %v1284
      %v1461 = vunpack.c.l.b16 %v1285
      %v1462 = vunpack.c.l.b16 %v1286
      %v1463 = vunpack.c.l.b16 %v1287
      %v1464 = vunpack.c.l.b16 %v1288
      %v1465 = vunpack.c.l.b16 %v1289
      %v1466 = vunpack.c.l.b16 %v1290
      %v1467 = vunpack.c.l.b16 %v1291
      %v1468 = vpack.c.b16 %v1437, %v1436
      %v1469 = vpack.c.b16 %v1439, %v1438
      %v1470 = vpack.c.b16 %v1441, %v1440
      %v1471 = vpack.c.b16 %v1443, %v1442
      %v1472 = vpack.c.b16 %v1445, %v1444
      %v1473 = vpack.c.b16 %v1447, %v1446
      %v1474 = vpack.c.b16 %v1449, %v1448
      %v1475 = vpack.c.b16 %v1451, %v1450
      %v1476 = vpack.c.b16 %v1453, %v1452
      %v1477 = vpack.c.b16 %v1455, %v1454
      %v1478 = vpack.c.b16 %v1457, %v1456
      %v1479 = vpack.c.b16 %v1459, %v1458
      %v1480 = vpack.c.b16 %v1461, %v1460
      %v1481 = vpack.c.b16 %v1463, %v1462
      %v1482 = vpack.c.b16 %v1465, %v1464
      %v1483 = vpack.c.b16 %v1467, %v1466
      %1484 = vrot.lane.b32.xlu0 %v1468, 8
      %v1485 = vpop.permute.xlu0 %1484
      %1486 = vrot.lane.b32.xlu0 %v1469, 8
      %v1487 = vpop.permute.xlu0 %1486
      %1488 = vrot.lane.b32.xlu0 %v1470, 8
      %v1489 = vpop.permute.xlu0 %1488
      %1490 = vrot.lane.b32.xlu0 %v1471, 8
      %v1491 = vpop.permute.xlu0 %1490
      %1492 = vrot.lane.b32.xlu0 %v1472, 8
      %v1493 = vpop.permute.xlu0 %1492
      %1494 = vrot.lane.b32.xlu0 %v1473, 8
      %v1495 = vpop.permute.xlu0 %1494
      %1496 = vrot.lane.b32.xlu0 %v1474, 8
      %v1497 = vpop.permute.xlu0 %1496
      %1498 = vrot.lane.b32.xlu0 %v1475, 8
      %v1499 = vpop.permute.xlu0 %1498
      %1500 = vrot.lane.b32.xlu0 %v1476, 8
      %v1501 = vpop.permute.xlu0 %1500
      %1502 = vrot.lane.b32.xlu0 %v1477, 8
      %v1503 = vpop.permute.xlu0 %1502
      %1504 = vrot.lane.b32.xlu0 %v1478, 8
      %v1505 = vpop.permute.xlu0 %1504
      %1506 = vrot.lane.b32.xlu0 %v1479, 8
      %v1507 = vpop.permute.xlu0 %1506
      %1508 = vrot.lane.b32.xlu0 %v1480, 8
      %v1509 = vpop.permute.xlu0 %1508
      %1510 = vrot.lane.b32.xlu0 %v1481, 8
      %v1511 = vpop.permute.xlu0 %1510
      %1512 = vrot.lane.b32.xlu0 %v1482, 8
      %v1513 = vpop.permute.xlu0 %1512
      %1514 = vrot.lane.b32.xlu0 %v1483, 8
      %v1515 = vpop.permute.xlu0 %1514
      %v1548 = vunpack.c.l.b16 %v1292
      %v1549 = vunpack.c.l.b16 %v1293
      %v1550 = vunpack.c.l.b16 %v1294
      %v1551 = vunpack.c.l.b16 %v1295
      %v1552 = vunpack.c.l.b16 %v1296
      %v1553 = vunpack.c.l.b16 %v1297
      %v1554 = vunpack.c.l.b16 %v1298
      %v1555 = vunpack.c.l.b16 %v1299
      %v1556 = vunpack.c.l.b16 %v1300
      %v1557 = vunpack.c.l.b16 %v1301
      %v1558 = vunpack.c.l.b16 %v1302
      %v1559 = vunpack.c.l.b16 %v1303
      %v1560 = vunpack.c.l.b16 %v1304
      %v1561 = vunpack.c.l.b16 %v1305
      %v1562 = vunpack.c.l.b16 %v1306
      %v1563 = vunpack.c.l.b16 %v1307
      %v1564 = vunpack.c.l.b16 %v1308
      %v1565 = vunpack.c.l.b16 %v1309
      %v1566 = vunpack.c.l.b16 %v1310
      %v1567 = vunpack.c.l.b16 %v1311
      %v1568 = vunpack.c.l.b16 %v1312
      %v1569 = vunpack.c.l.b16 %v1313
      %v1570 = vunpack.c.l.b16 %v1314
      %v1571 = vunpack.c.l.b16 %v1315
      %v1572 = vunpack.c.l.b16 %v1316
      %v1573 = vunpack.c.l.b16 %v1317
      %v1574 = vunpack.c.l.b16 %v1318
      %v1575 = vunpack.c.l.b16 %v1319
      %v1576 = vunpack.c.l.b16 %v1320
      %v1577 = vunpack.c.l.b16 %v1321
      %v1578 = vunpack.c.l.b16 %v1322
      %v1579 = vunpack.c.l.b16 %v1323
      %v1580 = vpack.c.b16 %v1549, %v1548
      %v1581 = vpack.c.b16 %v1551, %v1550
      %v1582 = vpack.c.b16 %v1553, %v1552
      %v1583 = vpack.c.b16 %v1555, %v1554
      %v1584 = vpack.c.b16 %v1557, %v1556
      %v1585 = vpack.c.b16 %v1559, %v1558
      %v1586 = vpack.c.b16 %v1561, %v1560
      %v1587 = vpack.c.b16 %v1563, %v1562
      %v1588 = vpack.c.b16 %v1565, %v1564
      %v1589 = vpack.c.b16 %v1567, %v1566
      %v1590 = vpack.c.b16 %v1569, %v1568
      %v1591 = vpack.c.b16 %v1571, %v1570
      %v1592 = vpack.c.b16 %v1573, %v1572
      %v1593 = vpack.c.b16 %v1575, %v1574
      %v1594 = vpack.c.b16 %v1577, %v1576
      %v1595 = vpack.c.b16 %v1579, %v1578
      %1596 = vrot.lane.b32.xlu0 %v1580, 16
      %v1597 = vpop.permute.xlu0 %1596
      %1598 = vrot.lane.b32.xlu0 %v1581, 16
      %v1599 = vpop.permute.xlu0 %1598
      %1600 = vrot.lane.b32.xlu0 %v1582, 16
      %v1601 = vpop.permute.xlu0 %1600
      %1602 = vrot.lane.b32.xlu0 %v1583, 16
      %v1603 = vpop.permute.xlu0 %1602
      %1604 = vrot.lane.b32.xlu0 %v1584, 16
      %v1605 = vpop.permute.xlu0 %1604
      %1606 = vrot.lane.b32.xlu0 %v1585, 16
      %v1607 = vpop.permute.xlu0 %1606
      %1608 = vrot.lane.b32.xlu0 %v1586, 16
      %v1609 = vpop.permute.xlu0 %1608
      %1610 = vrot.lane.b32.xlu0 %v1587, 16
      %v1611 = vpop.permute.xlu0 %1610
      %1612 = vrot.lane.b32.xlu0 %v1588, 16
      %v1613 = vpop.permute.xlu0 %1612
      %1614 = vrot.lane.b32.xlu0 %v1589, 16
      %v1615 = vpop.permute.xlu0 %1614
      %1616 = vrot.lane.b32.xlu0 %v1590, 16
      %v1617 = vpop.permute.xlu0 %1616
      %1618 = vrot.lane.b32.xlu0 %v1591, 16
      %v1619 = vpop.permute.xlu0 %1618
      %1620 = vrot.lane.b32.xlu0 %v1592, 16
      %v1621 = vpop.permute.xlu0 %1620
      %1622 = vrot.lane.b32.xlu0 %v1593, 16
      %v1623 = vpop.permute.xlu0 %1622
      %1624 = vrot.lane.b32.xlu0 %v1594, 16
      %v1625 = vpop.permute.xlu0 %1624
      %1626 = vrot.lane.b32.xlu0 %v1595, 16
      %v1627 = vpop.permute.xlu0 %1626
      %vm1628 = vcmask 64512
      %v1631 = vsel %vm1628, %v1388, %v1485
      %v1634 = vsel %vm1628, %v1389, %v1487
      %v1637 = vsel %vm1628, %v1390, %v1489
      %v1640 = vsel %vm1628, %v1391, %v1491
      %v1643 = vsel %vm1628, %v1392, %v1493
      %v1646 = vsel %vm1628, %v1393, %v1495
      %v1649 = vsel %vm1628, %v1394, %v1497
      %v1652 = vsel %vm1628, %v1395, %v1499
      %v1655 = vsel %vm1628, %v1396, %v1501
      %v1658 = vsel %vm1628, %v1397, %v1503
      %v1661 = vsel %vm1628, %v1398, %v1505
      %v1664 = vsel %vm1628, %v1399, %v1507
      %v1667 = vsel %vm1628, %v1400, %v1509
      %v1670 = vsel %vm1628, %v1401, %v1511
      %v1673 = vsel %vm1628, %v1402, %v1513
      %v1676 = vsel %vm1628, %v1403, %v1515
      %vm1677 = vcmask 130048
      %v1679 = vsel %vm1677, %v1631, %v1597
      %v1681 = vsel %vm1677, %v1634, %v1599
      %v1683 = vsel %vm1677, %v1637, %v1601
      %v1685 = vsel %vm1677, %v1640, %v1603
      %v1687 = vsel %vm1677, %v1643, %v1605
      %v1689 = vsel %vm1677, %v1646, %v1607
      %v1691 = vsel %vm1677, %v1649, %v1609
      %v1693 = vsel %vm1677, %v1652, %v1611
      %v1695 = vsel %vm1677, %v1655, %v1613
      %v1697 = vsel %vm1677, %v1658, %v1615
      %v1699 = vsel %vm1677, %v1661, %v1617
      %v1701 = vsel %vm1677, %v1664, %v1619
      %v1703 = vsel %vm1677, %v1667, %v1621
      %v1705 = vsel %vm1677, %v1670, %v1623
      %v1707 = vsel %vm1677, %v1673, %v1625
      %v1709 = vsel %vm1677, %v1676, %v1627
      %v1710 = vld [vmem:[%s1] sm:$0xf]
      %v1711 = vld [vmem:[%s1 + $0x4] sm:$0xf]
      %v1712 = vld [vmem:[%s1 + $0x8] sm:$0xf]
      %v1713 = vld [vmem:[%s250] sm:$0xf]
      %v1714 = vld [vmem:[%s250 + $0x4] sm:$0xf]
      %v1715 = vld [vmem:[%s250 + $0xc] sm:$0xf]
      %v1716 = vld [vmem:[%s250 + $0x10] sm:$0xf]
      %v1717 = vld [vmem:[%s250 + $0x18] sm:$0xf]
      %v1718 = vld [vmem:[%s250 + $0x1c] sm:$0xf]
      %v1719 = vld [vmem:[%s250 + $0x24] sm:$0xf]
      %v1720 = vld [vmem:[%s250 + $0x28] sm:$0xf]
      %v1721 = vld [vmem:[%s250 + $0x30] sm:$0xf]
      %v1722 = vld [vmem:[%s250 + $0x34] sm:$0xf]
      %v1723 = vld [vmem:[%s250 + $0x3c] sm:$0xf]
      %v1724 = vld [vmem:[%s250 + $0x40] sm:$0xf]
      %v1725 = vld [vmem:[%s250 + $0x48] sm:$0xf]
      %v1726 = vld [vmem:[%s250 + $0x4c] sm:$0xf]
      %v1727 = vld [vmem:[%s250 + $0x54] sm:$0xf]
      %v1728 = vld [vmem:[%s250 + $0x58] sm:$0xf]
      %v1729 = vld [vmem:[%s250 + $0x60] sm:$0xf]
      %v1730 = vld [vmem:[%s250 + $0x64] sm:$0xf]
      %v1731 = vld [vmem:[%s250 + $0x6c] sm:$0xf]
      %v1732 = vld [vmem:[%s250 + $0x70] sm:$0xf]
      %v1733 = vld [vmem:[%s250 + $0x78] sm:$0xf]
      %v1734 = vld [vmem:[%s250 + $0x7c] sm:$0xf]
      %v1735 = vld [vmem:[%s250 + $0x84] sm:$0xf]
      %v1736 = vld [vmem:[%s250 + $0x88] sm:$0xf]
      %v1737 = vld [vmem:[%s250 + $0x90] sm:$0xf]
      %v1738 = vld [vmem:[%s250 + $0x94] sm:$0xf]
      %v1739 = vld [vmem:[%s250 + $0x9c] sm:$0xf]
      %v1740 = vld [vmem:[%s250 + $0xa0] sm:$0xf]
      %v1741 = vld [vmem:[%s250 + $0xa8] sm:$0xf]
      %v1742 = vld [vmem:[%s250 + $0xac] sm:$0xf]
      %v1743 = vld [vmem:[%s250 + $0xb4] sm:$0xf]
      %v1744 = vld [vmem:[%s250 + $0xb8] sm:$0xf]
      %v1745 = vld [vmem:[%s951] sm:$0xf]
      %v1746 = vld [vmem:[%s951 + $0x4] sm:$0xf]
      %v1747 = vld [vmem:[%s951 + $0xc] sm:$0xf]
      %v1748 = vld [vmem:[%s951 + $0x10] sm:$0xf]
      %v1749 = vld [vmem:[%s951 + $0x18] sm:$0xf]
      %v1750 = vld [vmem:[%s951 + $0x1c] sm:$0xf]
      %v1751 = vld [vmem:[%s951 + $0x24] sm:$0xf]
      %v1752 = vld [vmem:[%s951 + $0x28] sm:$0xf]
      %v1753 = vld [vmem:[%s951 + $0x30] sm:$0xf]
      %v1754 = vld [vmem:[%s951 + $0x34] sm:$0xf]
      %v1755 = vld [vmem:[%s951 + $0x3c] sm:$0xf]
      %v1756 = vld [vmem:[%s951 + $0x40] sm:$0xf]
      %v1757 = vld [vmem:[%s951 + $0x48] sm:$0xf]
      %v1758 = vld [vmem:[%s951 + $0x4c] sm:$0xf]
      %v1759 = vld [vmem:[%s951 + $0x54] sm:$0xf]
      %v1760 = vld [vmem:[%s951 + $0x58] sm:$0xf]
      %v1761 = vld [vmem:[%s951 + $0x60] sm:$0xf]
      %v1762 = vld [vmem:[%s951 + $0x64] sm:$0xf]
      %v1763 = vld [vmem:[%s951 + $0x6c] sm:$0xf]
      %v1764 = vld [vmem:[%s951 + $0x70] sm:$0xf]
      %v1765 = vld [vmem:[%s951 + $0x78] sm:$0xf]
      %v1766 = vld [vmem:[%s951 + $0x7c] sm:$0xf]
      %v1767 = vld [vmem:[%s951 + $0x84] sm:$0xf]
      %v1768 = vld [vmem:[%s951 + $0x88] sm:$0xf]
      %v1769 = vld [vmem:[%s951 + $0x90] sm:$0xf]
      %v1770 = vld [vmem:[%s951 + $0x94] sm:$0xf]
      %v1771 = vld [vmem:[%s951 + $0x9c] sm:$0xf]
      %v1772 = vld [vmem:[%s951 + $0xa0] sm:$0xf]
      %v1773 = vld [vmem:[%s951 + $0xa8] sm:$0xf]
      %v1774 = vld [vmem:[%s951 + $0xac] sm:$0xf]
      %v1775 = vld [vmem:[%s951 + $0xb4] sm:$0xf]
      %v1776 = vld [vmem:[%s951 + $0xb8] sm:$0xf]
      %v1777 = vld [vmem:[%s302] sm:$0xf]
      %v1778 = vld [vmem:[%s302 + $0x4] sm:$0xf]
      %v1779 = vld [vmem:[%s302 + $0xc] sm:$0xf]
      %v1780 = vld [vmem:[%s302 + $0x10] sm:$0xf]
      %v1781 = vld [vmem:[%s302 + $0x18] sm:$0xf]
      %v1782 = vld [vmem:[%s302 + $0x1c] sm:$0xf]
      %v1783 = vld [vmem:[%s302 + $0x24] sm:$0xf]
      %v1784 = vld [vmem:[%s302 + $0x28] sm:$0xf]
      %v1785 = vld [vmem:[%s302 + $0x30] sm:$0xf]
      %v1786 = vld [vmem:[%s302 + $0x34] sm:$0xf]
      %v1787 = vld [vmem:[%s302 + $0x3c] sm:$0xf]
      %v1788 = vld [vmem:[%s302 + $0x40] sm:$0xf]
      %v1789 = vld [vmem:[%s302 + $0x48] sm:$0xf]
      %v1790 = vld [vmem:[%s302 + $0x4c] sm:$0xf]
      %v1791 = vld [vmem:[%s302 + $0x54] sm:$0xf]
      %v1792 = vld [vmem:[%s302 + $0x58] sm:$0xf]
      %v1793 = vld [vmem:[%s302 + $0x60] sm:$0xf]
      %v1794 = vld [vmem:[%s302 + $0x64] sm:$0xf]
      %v1795 = vld [vmem:[%s302 + $0x6c] sm:$0xf]
      %v1796 = vld [vmem:[%s302 + $0x70] sm:$0xf]
      %v1797 = vld [vmem:[%s302 + $0x78] sm:$0xf]
      %v1798 = vld [vmem:[%s302 + $0x7c] sm:$0xf]
      %v1799 = vld [vmem:[%s302 + $0x84] sm:$0xf]
      %v1800 = vld [vmem:[%s302 + $0x88] sm:$0xf]
      %v1801 = vld [vmem:[%s302 + $0x90] sm:$0xf]
      %v1802 = vld [vmem:[%s302 + $0x94] sm:$0xf]
      %v1803 = vld [vmem:[%s302 + $0x9c] sm:$0xf]
      %v1804 = vld [vmem:[%s302 + $0xa0] sm:$0xf]
      %v1805 = vld [vmem:[%s302 + $0xa8] sm:$0xf]
      %v1806 = vld [vmem:[%s302 + $0xac] sm:$0xf]
      %v1807 = vld [vmem:[%s302 + $0xb4] sm:$0xf]
      %v1808 = vld [vmem:[%s302 + $0xb8] sm:$0xf]
      %v1841 = vunpack.c.l.b16 %v1713
      %v1842 = vunpack.c.l.b16 %v1714
      %v1843 = vunpack.c.l.b16 %v1715
      %v1844 = vunpack.c.l.b16 %v1716
      %v1845 = vunpack.c.l.b16 %v1717
      %v1846 = vunpack.c.l.b16 %v1718
      %v1847 = vunpack.c.l.b16 %v1719
      %v1848 = vunpack.c.l.b16 %v1720
      %v1849 = vunpack.c.l.b16 %v1721
      %v1850 = vunpack.c.l.b16 %v1722
      %v1851 = vunpack.c.l.b16 %v1723
      %v1852 = vunpack.c.l.b16 %v1724
      %v1853 = vunpack.c.l.b16 %v1725
      %v1854 = vunpack.c.l.b16 %v1726
      %v1855 = vunpack.c.l.b16 %v1727
      %v1856 = vunpack.c.l.b16 %v1728
      %v1857 = vunpack.c.l.b16 %v1729
      %v1858 = vunpack.c.l.b16 %v1730
      %v1859 = vunpack.c.l.b16 %v1731
      %v1860 = vunpack.c.l.b16 %v1732
      %v1861 = vunpack.c.l.b16 %v1733
      %v1862 = vunpack.c.l.b16 %v1734
      %v1863 = vunpack.c.l.b16 %v1735
      %v1864 = vunpack.c.l.b16 %v1736
      %v1865 = vunpack.c.l.b16 %v1737
      %v1866 = vunpack.c.l.b16 %v1738
      %v1867 = vunpack.c.l.b16 %v1739
      %v1868 = vunpack.c.l.b16 %v1740
      %v1869 = vunpack.c.l.b16 %v1741
      %v1870 = vunpack.c.l.b16 %v1742
      %v1871 = vunpack.c.l.b16 %v1743
      %v1872 = vunpack.c.l.b16 %v1744
      %v1873 = vpack.c.b16 %v1842, %v1841
      %v1874 = vpack.c.b16 %v1844, %v1843
      %v1875 = vpack.c.b16 %v1846, %v1845
      %v1876 = vpack.c.b16 %v1848, %v1847
      %v1877 = vpack.c.b16 %v1850, %v1849
      %v1878 = vpack.c.b16 %v1852, %v1851
      %v1879 = vpack.c.b16 %v1854, %v1853
      %v1880 = vpack.c.b16 %v1856, %v1855
      %v1881 = vpack.c.b16 %v1858, %v1857
      %v1882 = vpack.c.b16 %v1860, %v1859
      %v1883 = vpack.c.b16 %v1862, %v1861
      %v1884 = vpack.c.b16 %v1864, %v1863
      %v1885 = vpack.c.b16 %v1866, %v1865
      %v1886 = vpack.c.b16 %v1868, %v1867
      %v1887 = vpack.c.b16 %v1870, %v1869
      %v1888 = vpack.c.b16 %v1872, %v1871
      %v1921 = vunpack.c.l.b16 %v1745
      %v1922 = vunpack.c.l.b16 %v1746
      %v1923 = vunpack.c.l.b16 %v1747
      %v1924 = vunpack.c.l.b16 %v1748
      %v1925 = vunpack.c.l.b16 %v1749
      %v1926 = vunpack.c.l.b16 %v1750
      %v1927 = vunpack.c.l.b16 %v1751
      %v1928 = vunpack.c.l.b16 %v1752
      %v1929 = vunpack.c.l.b16 %v1753
      %v1930 = vunpack.c.l.b16 %v1754
      %v1931 = vunpack.c.l.b16 %v1755
      %v1932 = vunpack.c.l.b16 %v1756
      %v1933 = vunpack.c.l.b16 %v1757
      %v1934 = vunpack.c.l.b16 %v1758
      %v1935 = vunpack.c.l.b16 %v1759
      %v1936 = vunpack.c.l.b16 %v1760
      %v1937 = vunpack.c.l.b16 %v1761
      %v1938 = vunpack.c.l.b16 %v1762
      %v1939 = vunpack.c.l.b16 %v1763
      %v1940 = vunpack.c.l.b16 %v1764
      %v1941 = vunpack.c.l.b16 %v1765
      %v1942 = vunpack.c.l.b16 %v1766
      %v1943 = vunpack.c.l.b16 %v1767
      %v1944 = vunpack.c.l.b16 %v1768
      %v1945 = vunpack.c.l.b16 %v1769
      %v1946 = vunpack.c.l.b16 %v1770
      %v1947 = vunpack.c.l.b16 %v1771
      %v1948 = vunpack.c.l.b16 %v1772
      %v1949 = vunpack.c.l.b16 %v1773
      %v1950 = vunpack.c.l.b16 %v1774
      %v1951 = vunpack.c.l.b16 %v1775
      %v1952 = vunpack.c.l.b16 %v1776
      %v1953 = vpack.c.b16 %v1922, %v1921
      %v1954 = vpack.c.b16 %v1924, %v1923
      %v1955 = vpack.c.b16 %v1926, %v1925
      %v1956 = vpack.c.b16 %v1928, %v1927
      %v1957 = vpack.c.b16 %v1930, %v1929
      %v1958 = vpack.c.b16 %v1932, %v1931
      %v1959 = vpack.c.b16 %v1934, %v1933
      %v1960 = vpack.c.b16 %v1936, %v1935
      %v1961 = vpack.c.b16 %v1938, %v1937
      %v1962 = vpack.c.b16 %v1940, %v1939
      %v1963 = vpack.c.b16 %v1942, %v1941
      %v1964 = vpack.c.b16 %v1944, %v1943
      %v1965 = vpack.c.b16 %v1946, %v1945
      %v1966 = vpack.c.b16 %v1948, %v1947
      %v1967 = vpack.c.b16 %v1950, %v1949
      %v1968 = vpack.c.b16 %v1952, %v1951
      %1969 = vrot.lane.b32.xlu0 %v1953, 8
      %v1970 = vpop.permute.xlu0 %1969
      %1971 = vrot.lane.b32.xlu0 %v1954, 8
      %v1972 = vpop.permute.xlu0 %1971
      %1973 = vrot.lane.b32.xlu0 %v1955, 8
      %v1974 = vpop.permute.xlu0 %1973
      %1975 = vrot.lane.b32.xlu0 %v1956, 8
      %v1976 = vpop.permute.xlu0 %1975
      %1977 = vrot.lane.b32.xlu0 %v1957, 8
      %v1978 = vpop.permute.xlu0 %1977
      %1979 = vrot.lane.b32.xlu0 %v1958, 8
      %v1980 = vpop.permute.xlu0 %1979
      %1981 = vrot.lane.b32.xlu0 %v1959, 8
      %v1982 = vpop.permute.xlu0 %1981
      %1983 = vrot.lane.b32.xlu0 %v1960, 8
      %v1984 = vpop.permute.xlu0 %1983
      %1985 = vrot.lane.b32.xlu0 %v1961, 8
      %v1986 = vpop.permute.xlu0 %1985
      %1987 = vrot.lane.b32.xlu0 %v1962, 8
      %v1988 = vpop.permute.xlu0 %1987
      %1989 = vrot.lane.b32.xlu0 %v1963, 8
      %v1990 = vpop.permute.xlu0 %1989
      %1991 = vrot.lane.b32.xlu0 %v1964, 8
      %v1992 = vpop.permute.xlu0 %1991
      %1993 = vrot.lane.b32.xlu0 %v1965, 8
      %v1994 = vpop.permute.xlu0 %1993
      %1995 = vrot.lane.b32.xlu0 %v1966, 8
      %v1996 = vpop.permute.xlu0 %1995
      %1997 = vrot.lane.b32.xlu0 %v1967, 8
      %v1998 = vpop.permute.xlu0 %1997
      %1999 = vrot.lane.b32.xlu0 %v1968, 8
      %v2000 = vpop.permute.xlu0 %1999
      %v2033 = vunpack.c.l.b16 %v1777
      %v2034 = vunpack.c.l.b16 %v1778
      %v2035 = vunpack.c.l.b16 %v1779
      %v2036 = vunpack.c.l.b16 %v1780
      %v2037 = vunpack.c.l.b16 %v1781
      %v2038 = vunpack.c.l.b16 %v1782
      %v2039 = vunpack.c.l.b16 %v1783
      %v2040 = vunpack.c.l.b16 %v1784
      %v2041 = vunpack.c.l.b16 %v1785
      %v2042 = vunpack.c.l.b16 %v1786
      %v2043 = vunpack.c.l.b16 %v1787
      %v2044 = vunpack.c.l.b16 %v1788
      %v2045 = vunpack.c.l.b16 %v1789
      %v2046 = vunpack.c.l.b16 %v1790
      %v2047 = vunpack.c.l.b16 %v1791
      %v2048 = vunpack.c.l.b16 %v1792
      %v2049 = vunpack.c.l.b16 %v1793
      %v2050 = vunpack.c.l.b16 %v1794
      %v2051 = vunpack.c.l.b16 %v1795
      %v2052 = vunpack.c.l.b16 %v1796
      %v2053 = vunpack.c.l.b16 %v1797
      %v2054 = vunpack.c.l.b16 %v1798
      %v2055 = vunpack.c.l.b16 %v1799
      %v2056 = vunpack.c.l.b16 %v1800
      %v2057 = vunpack.c.l.b16 %v1801
      %v2058 = vunpack.c.l.b16 %v1802
      %v2059 = vunpack.c.l.b16 %v1803
      %v2060 = vunpack.c.l.b16 %v1804
      %v2061 = vunpack.c.l.b16 %v1805
      %v2062 = vunpack.c.l.b16 %v1806
      %v2063 = vunpack.c.l.b16 %v1807
      %v2064 = vunpack.c.l.b16 %v1808
      %v2065 = vpack.c.b16 %v2034, %v2033
      %v2066 = vpack.c.b16 %v2036, %v2035
      %v2067 = vpack.c.b16 %v2038, %v2037
      %v2068 = vpack.c.b16 %v2040, %v2039
      %v2069 = vpack.c.b16 %v2042, %v2041
      %v2070 = vpack.c.b16 %v2044, %v2043
      %v2071 = vpack.c.b16 %v2046, %v2045
      %v2072 = vpack.c.b16 %v2048, %v2047
      %v2073 = vpack.c.b16 %v2050, %v2049
      %v2074 = vpack.c.b16 %v2052, %v2051
      %v2075 = vpack.c.b16 %v2054, %v2053
      %v2076 = vpack.c.b16 %v2056, %v2055
      %v2077 = vpack.c.b16 %v2058, %v2057
      %v2078 = vpack.c.b16 %v2060, %v2059
      %v2079 = vpack.c.b16 %v2062, %v2061
      %v2080 = vpack.c.b16 %v2064, %v2063
      %2081 = vrot.lane.b32.xlu0 %v2065, 16
      %v2082 = vpop.permute.xlu0 %2081
      %2083 = vrot.lane.b32.xlu0 %v2066, 16
      %v2084 = vpop.permute.xlu0 %2083
      %2085 = vrot.lane.b32.xlu0 %v2067, 16
      %v2086 = vpop.permute.xlu0 %2085
      %2087 = vrot.lane.b32.xlu0 %v2068, 16
      %v2088 = vpop.permute.xlu0 %2087
      %2089 = vrot.lane.b32.xlu0 %v2069, 16
      %v2090 = vpop.permute.xlu0 %2089
      %2091 = vrot.lane.b32.xlu0 %v2070, 16
      %v2092 = vpop.permute.xlu0 %2091
      %2093 = vrot.lane.b32.xlu0 %v2071, 16
      %v2094 = vpop.permute.xlu0 %2093
      %2095 = vrot.lane.b32.xlu0 %v2072, 16
      %v2096 = vpop.permute.xlu0 %2095
      %2097 = vrot.lane.b32.xlu0 %v2073, 16
      %v2098 = vpop.permute.xlu0 %2097
      %2099 = vrot.lane.b32.xlu0 %v2074, 16
      %v2100 = vpop.permute.xlu0 %2099
      %2101 = vrot.lane.b32.xlu0 %v2075, 16
      %v2102 = vpop.permute.xlu0 %2101
      %2103 = vrot.lane.b32.xlu0 %v2076, 16
      %v2104 = vpop.permute.xlu0 %2103
      %2105 = vrot.lane.b32.xlu0 %v2077, 16
      %v2106 = vpop.permute.xlu0 %2105
      %2107 = vrot.lane.b32.xlu0 %v2078, 16
      %v2108 = vpop.permute.xlu0 %2107
      %2109 = vrot.lane.b32.xlu0 %v2079, 16
      %v2110 = vpop.permute.xlu0 %2109
      %2111 = vrot.lane.b32.xlu0 %v2080, 16
      %v2112 = vpop.permute.xlu0 %2111
      %v2115 = vsel %vm1628, %v1873, %v1970
      %v2118 = vsel %vm1628, %v1874, %v1972
      %v2121 = vsel %vm1628, %v1875, %v1974
      %v2124 = vsel %vm1628, %v1876, %v1976
      %v2127 = vsel %vm1628, %v1877, %v1978
      %v2130 = vsel %vm1628, %v1878, %v1980
      %v2133 = vsel %vm1628, %v1879, %v1982
      %v2136 = vsel %vm1628, %v1880, %v1984
      %v2139 = vsel %vm1628, %v1881, %v1986
      %v2142 = vsel %vm1628, %v1882, %v1988
      %v2145 = vsel %vm1628, %v1883, %v1990
      %v2148 = vsel %vm1628, %v1884, %v1992
      %v2151 = vsel %vm1628, %v1885, %v1994
      %v2154 = vsel %vm1628, %v1886, %v1996
      %v2157 = vsel %vm1628, %v1887, %v1998
      %v2160 = vsel %vm1628, %v1888, %v2000
      %v2162 = vsel %vm1677, %v2115, %v2082
      %v2164 = vsel %vm1677, %v2118, %v2084
      %v2166 = vsel %vm1677, %v2121, %v2086
      %v2168 = vsel %vm1677, %v2124, %v2088
      %v2170 = vsel %vm1677, %v2127, %v2090
      %v2172 = vsel %vm1677, %v2130, %v2092
      %v2174 = vsel %vm1677, %v2133, %v2094
      %v2176 = vsel %vm1677, %v2136, %v2096
      %v2178 = vsel %vm1677, %v2139, %v2098
      %v2180 = vsel %vm1677, %v2142, %v2100
      %v2182 = vsel %vm1677, %v2145, %v2102
      %v2184 = vsel %vm1677, %v2148, %v2104
      %v2186 = vsel %vm1677, %v2151, %v2106
      %v2188 = vsel %vm1677, %v2154, %v2108
      %v2190 = vsel %vm1677, %v2157, %v2110
      %v2192 = vsel %vm1677, %v2160, %v2112
      %s2193 = scalar_lea.vmem %s1, 12
      %v2194 = vld [vmem:[%s2193] sm:$0xf]
      %v2195 = vld [vmem:[%s2193 + $0x4] sm:$0xf]
      %v2196 = vld [vmem:[%s2193 + $0x8] sm:$0xf]
      %v2200 = vunpack.c.l.b16 %v2194
      %v2201 = vunpack.c.l.b16 %v2195
      %v2202 = vunpack.c.l.b16 %v2196
      %v2203 = vpack.c.b16 %v2201, %v2200
      %v2204 = vpack.c.b16 %v2202, %v2202
      %vm2206 = vcmask 195584
      %v2207 = vsel %vm2206, %v2162, 0
      %v2209 = vsel %vm2206, %v2164, 0
      %v2211 = vsel %vm2206, %v2166, 0
      %v2213 = vsel %vm2206, %v2168, 0
      %v2215 = vsel %vm2206, %v2170, 0
      %v2217 = vsel %vm2206, %v2172, 0
      %v2219 = vsel %vm2206, %v2174, 0
      %v2221 = vsel %vm2206, %v2176, 0
      %v2223 = vsel %vm2206, %v2178, 0
      %v2225 = vsel %vm2206, %v2180, 0
      %v2227 = vsel %vm2206, %v2182, 0
      %v2229 = vsel %vm2206, %v2184, 0
      %v2231 = vsel %vm2206, %v2186, 0
      %v2233 = vsel %vm2206, %v2188, 0
      %v2235 = vsel %vm2206, %v2190, 0
      %v2237 = vsel %vm2206, %v2192, 0
      %vm2239 = vcmask 1043456
      %v2241 = vsel %vm2239, %v2204, 0
      %2243 = vmatprep.subr.bf16.mxu0 0
      %2244 = vmatpush1.bf16.msra.mxu0 %v2203
      %2245 = vmatprep.subr.bf16.mxu0 0
      %2246 = vmatpush1.bf16.msra.mxu0 %v2241
      %2247 = vmatprep.subr.bf16.mxu0 0
      %2248 = vmatpush1.bf16.msra.mxu0 0
      %2249 = vmatprep.subr.bf16.mxu0 0
      %2250 = vmatpush1.bf16.msra.mxu0 0
      %2251 = vmatprep.subr.bf16.mxu0 0
      %2252 = vmatpush1.bf16.msra.mxu0 0
      %2253 = vmatprep.subr.bf16.mxu0 0
      %2254 = vmatpush1.bf16.msra.mxu0 0
      %2255 = vmatprep.subr.bf16.mxu0 0
      %2256 = vmatpush1.bf16.msra.mxu0 0
      %2257 = vmatprep.subr.bf16.mxu0 0
      %2258 = vmatpush1.bf16.msra.mxu0 0
      %2259 = vmatprep.subr.bf16.mxu0 0
      %2260 = vmatpush1.bf16.msra.mxu0 0
      %2261 = vmatprep.subr.bf16.mxu0 0
      %2262 = vmatpush1.bf16.msra.mxu0 0
      %2263 = vmatprep.subr.bf16.mxu0 0
      %2264 = vmatpush1.bf16.msra.mxu0 0
      %2265 = vmatprep.subr.bf16.mxu0 0
      %2266 = vmatpush1.bf16.msra.mxu0 0
      %2267 = vmatprep.subr.bf16.mxu0 0
      %2268 = vmatpush1.bf16.msra.mxu0 0
      %2269 = vmatprep.subr.bf16.mxu0 0
      %2270 = vmatpush1.bf16.msra.mxu0 0
      %2271 = vmatprep.subr.bf16.mxu0 0
      %2272 = vmatpush1.bf16.msra.mxu0 0
      %2273 = vmatprep.subr.bf16.mxu0 0
      %2274 = vmatpush1.bf16.msra.mxu0 0
      %2275 = vmatprep.mubr.bf16.mxu0 0
      %2276 = vmatmul.mubr.bf16.gmra.mrb[0].mxu0 %v2207
      %v2277 = vpop.f32.mrb[0].mxu0
      %v2278 = vadd.f32 0.0, %v2277
      %v2279 = vpop.f32.mrb[0].mxu0
      %v2280 = vpop.f32.mrb[0].mxu0
      %v2281 = vadd.f32 0.0, %v2280
      %v2282 = vpop.f32.mrb[0].mxu0
      %2283 = vmatprep.mubr.bf16.mxu0 0
      %2284 = vmatmul.mubr.bf16.gmra.mrb[0].mxu0 %v2209
      %v2285 = vpop.f32.mrb[0].mxu0
      %v2286 = vadd.f32 0.0, %v2285
      %v2287 = vpop.f32.mrb[0].mxu0
      %v2288 = vpop.f32.mrb[0].mxu0
      %v2289 = vadd.f32 0.0, %v2288
      %v2290 = vpop.f32.mrb[0].mxu0
      %2291 = vmatprep.mubr.bf16.mxu0 0
      %2292 = vmatmul.mubr.bf16.gmra.mrb[0].mxu0 %v2211
      %v2293 = vpop.f32.mrb[0].mxu0
      %v2294 = vadd.f32 0.0, %v2293
      %v2295 = vpop.f32.mrb[0].mxu0
      %v2296 = vpop.f32.mrb[0].mxu0
      %v2297 = vadd.f32 0.0, %v2296
      %v2298 = vpop.f32.mrb[0].mxu0
      %2299 = vmatprep.mubr.bf16.mxu0 0
      %2300 = vmatmul.mubr.bf16.gmra.mrb[0].mxu0 %v2213
      %v2301 = vpop.f32.mrb[0].mxu0
      %v2302 = vadd.f32 0.0, %v2301
      %v2303 = vpop.f32.mrb[0].mxu0
      %v2304 = vpop.f32.mrb[0].mxu0
      %v2305 = vadd.f32 0.0, %v2304
      %v2306 = vpop.f32.mrb[0].mxu0
      %2307 = vmatprep.mubr.bf16.mxu0 0
      %2308 = vmatmul.mubr.bf16.gmra.mrb[0].mxu0 %v2215
      %v2309 = vpop.f32.mrb[0].mxu0
      %v2310 = vadd.f32 0.0, %v2309
      %v2311 = vpop.f32.mrb[0].mxu0
      %v2312 = vpop.f32.mrb[0].mxu0
      %v2313 = vadd.f32 0.0, %v2312
      %v2314 = vpop.f32.mrb[0].mxu0
      %2315 = vmatprep.mubr.bf16.mxu0 0
      %2316 = vmatmul.mubr.bf16.gmra.mrb[0].mxu0 %v2217
      %v2317 = vpop.f32.mrb[0].mxu0
      %v2318 = vadd.f32 0.0, %v2317
      %v2319 = vpop.f32.mrb[0].mxu0
      %v2320 = vpop.f32.mrb[0].mxu0
      %v2321 = vadd.f32 0.0, %v2320
      %v2322 = vpop.f32.mrb[0].mxu0
      %2323 = vmatprep.mubr.bf16.mxu0 0
      %2324 = vmatmul.mubr.bf16.gmra.mrb[0].mxu0 %v2219
      %v2325 = vpop.f32.mrb[0].mxu0
      %v2326 = vadd.f32 0.0, %v2325
      %v2327 = vpop.f32.mrb[0].mxu0
      %v2328 = vpop.f32.mrb[0].mxu0
      %v2329 = vadd.f32 0.0, %v2328
      %v2330 = vpop.f32.mrb[0].mxu0
      %2331 = vmatprep.mubr.bf16.mxu0 0
      %2332 = vmatmul.mubr.bf16.gmra.mrb[0].mxu0 %v2221
      %v2333 = vpop.f32.mrb[0].mxu0
      %v2334 = vadd.f32 0.0, %v2333
      %v2335 = vpop.f32.mrb[0].mxu0
      %v2336 = vpop.f32.mrb[0].mxu0
      %v2337 = vadd.f32 0.0, %v2336
      %v2338 = vpop.f32.mrb[0].mxu0
      %2339 = vmatprep.mubr.bf16.mxu0 0
      %2340 = vmatmul.mubr.bf16.gmra.mrb[0].mxu0 %v2223
      %v2341 = vpop.f32.mrb[0].mxu0
      %v2342 = vadd.f32 0.0, %v2341
      %v2343 = vpop.f32.mrb[0].mxu0
      %v2344 = vpop.f32.mrb[0].mxu0
      %v2345 = vadd.f32 0.0, %v2344
      %v2346 = vpop.f32.mrb[0].mxu0
      %2347 = vmatprep.mubr.bf16.mxu0 0
      %2348 = vmatmul.mubr.bf16.gmra.mrb[0].mxu0 %v2225
      %v2349 = vpop.f32.mrb[0].mxu0
      %v2350 = vadd.f32 0.0, %v2349
      %v2351 = vpop.f32.mrb[0].mxu0
      %v2352 = vpop.f32.mrb[0].mxu0
      %v2353 = vadd.f32 0.0, %v2352
      %v2354 = vpop.f32.mrb[0].mxu0
      %2355 = vmatprep.mubr.bf16.mxu0 0
      %2356 = vmatmul.mubr.bf16.gmra.mrb[0].mxu0 %v2227
      %v2357 = vpop.f32.mrb[0].mxu0
      %v2358 = vadd.f32 0.0, %v2357
      %v2359 = vpop.f32.mrb[0].mxu0
      %v2360 = vpop.f32.mrb[0].mxu0
      %v2361 = vadd.f32 0.0, %v2360
      %v2362 = vpop.f32.mrb[0].mxu0
      %2363 = vmatprep.mubr.bf16.mxu0 0
      %2364 = vmatmul.mubr.bf16.gmra.mrb[0].mxu0 %v2229
      %v2365 = vpop.f32.mrb[0].mxu0
      %v2366 = vadd.f32 0.0, %v2365
      %v2367 = vpop.f32.mrb[0].mxu0
      %v2368 = vpop.f32.mrb[0].mxu0
      %v2369 = vadd.f32 0.0, %v2368
      %v2370 = vpop.f32.mrb[0].mxu0
      %2371 = vmatprep.mubr.bf16.mxu0 0
      %2372 = vmatmul.mubr.bf16.gmra.mrb[0].mxu0 %v2231
      %v2373 = vpop.f32.mrb[0].mxu0
      %v2374 = vadd.f32 0.0, %v2373
      %v2375 = vpop.f32.mrb[0].mxu0
      %v2376 = vpop.f32.mrb[0].mxu0
      %v2377 = vadd.f32 0.0, %v2376
      %v2378 = vpop.f32.mrb[0].mxu0
      %2379 = vmatprep.mubr.bf16.mxu0 0
      %2380 = vmatmul.mubr.bf16.gmra.mrb[0].mxu0 %v2233
      %v2381 = vpop.f32.mrb[0].mxu0
      %v2382 = vadd.f32 0.0, %v2381
      %v2383 = vpop.f32.mrb[0].mxu0
      %v2384 = vpop.f32.mrb[0].mxu0
      %v2385 = vadd.f32 0.0, %v2384
      %v2386 = vpop.f32.mrb[0].mxu0
      %2387 = vmatprep.mubr.bf16.mxu0 0
      %2388 = vmatmul.mubr.bf16.gmra.mrb[0].mxu0 %v2235
      %v2389 = vpop.f32.mrb[0].mxu0
      %v2390 = vadd.f32 0.0, %v2389
      %v2391 = vpop.f32.mrb[0].mxu0
      %v2392 = vpop.f32.mrb[0].mxu0
      %v2393 = vadd.f32 0.0, %v2392
      %v2394 = vpop.f32.mrb[0].mxu0
      %2395 = vmatprep.mubr.bf16.mxu0 0
      %2396 = vmatmul.mubr.bf16.gmra.mrb[0].mxu0 %v2237
      %v2397 = vpop.f32.mrb[0].mxu0
      %v2398 = vadd.f32 0.0, %v2397
      %v2399 = vpop.f32.mrb[0].mxu0
      %v2400 = vpop.f32.mrb[0].mxu0
      %v2401 = vadd.f32 0.0, %v2400
      %v2402 = vpop.f32.mrb[0].mxu0
      %2403 = vdwg.mxu0
      %v2407 = vunpack.c.l.b16 %v1710
      %v2408 = vunpack.c.l.b16 %v1711
      %v2409 = vunpack.c.l.b16 %v1712
      %v2410 = vpack.c.b16 %v2408, %v2407
      %v2411 = vpack.c.b16 %v2409, %v2409
      %v2413 = vsel %vm2206, %v1679, 0
      %v2415 = vsel %vm2206, %v1681, 0
      %v2417 = vsel %vm2206, %v1683, 0
      %v2419 = vsel %vm2206, %v1685, 0
      %v2421 = vsel %vm2206, %v1687, 0
      %v2423 = vsel %vm2206, %v1689, 0
      %v2425 = vsel %vm2206, %v1691, 0
      %v2427 = vsel %vm2206, %v1693, 0
      %v2429 = vsel %vm2206, %v1695, 0
      %v2431 = vsel %vm2206, %v1697, 0
      %v2433 = vsel %vm2206, %v1699, 0
      %v2435 = vsel %vm2206, %v1701, 0
      %v2437 = vsel %vm2206, %v1703, 0
      %v2439 = vsel %vm2206, %v1705, 0
      %v2441 = vsel %vm2206, %v1707, 0
      %v2443 = vsel %vm2206, %v1709, 0
      %v2446 = vsel %vm2239, %v2411, 0
      %2448 = vmatprep.subr.bf16.mxu0 0
      %2449 = vmatpush1.bf16.msra.mxu0 %v2410
      %2450 = vmatprep.subr.bf16.mxu0 0
      %2451 = vmatpush1.bf16.msra.mxu0 %v2446
      %2452 = vmatprep.subr.bf16.mxu0 0
      %2453 = vmatpush1.bf16.msra.mxu0 0
      %2454 = vmatprep.subr.bf16.mxu0 0
      %2455 = vmatpush1.bf16.msra.mxu0 0
      %2456 = vmatprep.subr.bf16.mxu0 0
      %2457 = vmatpush1.bf16.msra.mxu0 0
      %2458 = vmatprep.subr.bf16.mxu0 0
      %2459 = vmatpush1.bf16.msra.mxu0 0
      %2460 = vmatprep.subr.bf16.mxu0 0
      %2461 = vmatpush1.bf16.msra.mxu0 0
      %2462 = vmatprep.subr.bf16.mxu0 0
      %2463 = vmatpush1.bf16.msra.mxu0 0
      %2464 = vmatprep.subr.bf16.mxu0 0
      %2465 = vmatpush1.bf16.msra.mxu0 0
      %2466 = vmatprep.subr.bf16.mxu0 0
      %2467 = vmatpush1.bf16.msra.mxu0 0
      %2468 = vmatprep.subr.bf16.mxu0 0
      %2469 = vmatpush1.bf16.msra.mxu0 0
      %2470 = vmatprep.subr.bf16.mxu0 0
      %2471 = vmatpush1.bf16.msra.mxu0 0
      %2472 = vmatprep.subr.bf16.mxu0 0
      %2473 = vmatpush1.bf16.msra.mxu0 0
      %2474 = vmatprep.subr.bf16.mxu0 0
      %2475 = vmatpush1.bf16.msra.mxu0 0
      %2476 = vmatprep.subr.bf16.mxu0 0
      %2477 = vmatpush1.bf16.msra.mxu0 0
      %2478 = vmatprep.subr.bf16.mxu0 0
      %2479 = vmatpush1.bf16.msra.mxu0 0
      %2480 = vmatprep.mubr.bf16.mxu0 0
      %2481 = vmatmul.mubr.bf16.gmra.mrb[0].mxu0 %v2413
      %v2482 = vpop.f32.mrb[0].mxu0
      %v2483 = vadd.f32 %v2278, %v2482
      %v2484 = vpop.f32.mrb[0].mxu0
      %v2485 = vpop.f32.mrb[0].mxu0
      %v2486 = vadd.f32 %v2281, %v2485
      %v2487 = vpop.f32.mrb[0].mxu0
      %2488 = vmatprep.mubr.bf16.mxu0 0
      %2489 = vmatmul.mubr.bf16.gmra.mrb[0].mxu0 %v2415
      %v2490 = vpop.f32.mrb[0].mxu0
      %v2491 = vadd.f32 %v2286, %v2490
      %v2492 = vpop.f32.mrb[0].mxu0
      %v2493 = vpop.f32.mrb[0].mxu0
      %v2494 = vadd.f32 %v2289, %v2493
      %v2495 = vpop.f32.mrb[0].mxu0
      %2496 = vmatprep.mubr.bf16.mxu0 0
      %2497 = vmatmul.mubr.bf16.gmra.mrb[0].mxu0 %v2417
      %v2498 = vpop.f32.mrb[0].mxu0
      %v2499 = vadd.f32 %v2294, %v2498
      %v2500 = vpop.f32.mrb[0].mxu0
      %v2501 = vpop.f32.mrb[0].mxu0
      %v2502 = vadd.f32 %v2297, %v2501
      %v2503 = vpop.f32.mrb[0].mxu0
      %2504 = vmatprep.mubr.bf16.mxu0 0
      %2505 = vmatmul.mubr.bf16.gmra.mrb[0].mxu0 %v2419
      %v2506 = vpop.f32.mrb[0].mxu0
      %v2507 = vadd.f32 %v2302, %v2506
      %v2508 = vpop.f32.mrb[0].mxu0
      %v2509 = vpop.f32.mrb[0].mxu0
      %v2510 = vadd.f32 %v2305, %v2509
      %v2511 = vpop.f32.mrb[0].mxu0
      %2512 = vmatprep.mubr.bf16.mxu0 0
      %2513 = vmatmul.mubr.bf16.gmra.mrb[0].mxu0 %v2421
      %v2514 = vpop.f32.mrb[0].mxu0
      %v2515 = vadd.f32 %v2310, %v2514
      %v2516 = vpop.f32.mrb[0].mxu0
      %v2517 = vpop.f32.mrb[0].mxu0
      %v2518 = vadd.f32 %v2313, %v2517
      %v2519 = vpop.f32.mrb[0].mxu0
      %2520 = vmatprep.mubr.bf16.mxu0 0
      %2521 = vmatmul.mubr.bf16.gmra.mrb[0].mxu0 %v2423
      %v2522 = vpop.f32.mrb[0].mxu0
      %v2523 = vadd.f32 %v2318, %v2522
      %v2524 = vpop.f32.mrb[0].mxu0
      %v2525 = vpop.f32.mrb[0].mxu0
      %v2526 = vadd.f32 %v2321, %v2525
      %v2527 = vpop.f32.mrb[0].mxu0
      %2528 = vmatprep.mubr.bf16.mxu0 0
      %2529 = vmatmul.mubr.bf16.gmra.mrb[0].mxu0 %v2425
      %v2530 = vpop.f32.mrb[0].mxu0
      %v2531 = vadd.f32 %v2326, %v2530
      %v2532 = vpop.f32.mrb[0].mxu0
      %v2533 = vpop.f32.mrb[0].mxu0
      %v2534 = vadd.f32 %v2329, %v2533
      %v2535 = vpop.f32.mrb[0].mxu0
      %2536 = vmatprep.mubr.bf16.mxu0 0
      %2537 = vmatmul.mubr.bf16.gmra.mrb[0].mxu0 %v2427
      %v2538 = vpop.f32.mrb[0].mxu0
      %v2539 = vadd.f32 %v2334, %v2538
      %v2540 = vpop.f32.mrb[0].mxu0
      %v2541 = vpop.f32.mrb[0].mxu0
      %v2542 = vadd.f32 %v2337, %v2541
      %v2543 = vpop.f32.mrb[0].mxu0
      %2544 = vmatprep.mubr.bf16.mxu0 0
      %2545 = vmatmul.mubr.bf16.gmra.mrb[0].mxu0 %v2429
      %v2546 = vpop.f32.mrb[0].mxu0
      %v2547 = vadd.f32 %v2342, %v2546
      %v2548 = vpop.f32.mrb[0].mxu0
      %v2549 = vpop.f32.mrb[0].mxu0
      %v2550 = vadd.f32 %v2345, %v2549
      %v2551 = vpop.f32.mrb[0].mxu0
      %2552 = vmatprep.mubr.bf16.mxu0 0
      %2553 = vmatmul.mubr.bf16.gmra.mrb[0].mxu0 %v2431
      %v2554 = vpop.f32.mrb[0].mxu0
      %v2555 = vadd.f32 %v2350, %v2554
      %v2556 = vpop.f32.mrb[0].mxu0
      %v2557 = vpop.f32.mrb[0].mxu0
      %v2558 = vadd.f32 %v2353, %v2557
      %v2559 = vpop.f32.mrb[0].mxu0
      %2560 = vmatprep.mubr.bf16.mxu0 0
      %2561 = vmatmul.mubr.bf16.gmra.mrb[0].mxu0 %v2433
      %v2562 = vpop.f32.mrb[0].mxu0
      %v2563 = vadd.f32 %v2358, %v2562
      %v2564 = vpop.f32.mrb[0].mxu0
      %v2565 = vpop.f32.mrb[0].mxu0
      %v2566 = vadd.f32 %v2361, %v2565
      %v2567 = vpop.f32.mrb[0].mxu0
      %2568 = vmatprep.mubr.bf16.mxu0 0
      %2569 = vmatmul.mubr.bf16.gmra.mrb[0].mxu0 %v2435
      %v2570 = vpop.f32.mrb[0].mxu0
      %v2571 = vadd.f32 %v2366, %v2570
      %v2572 = vpop.f32.mrb[0].mxu0
      %v2573 = vpop.f32.mrb[0].mxu0
      %v2574 = vadd.f32 %v2369, %v2573
      %v2575 = vpop.f32.mrb[0].mxu0
      %2576 = vmatprep.mubr.bf16.mxu0 0
      %2577 = vmatmul.mubr.bf16.gmra.mrb[0].mxu0 %v2437
      %v2578 = vpop.f32.mrb[0].mxu0
      %v2579 = vadd.f32 %v2374, %v2578
      %v2580 = vpop.f32.mrb[0].mxu0
      %v2581 = vpop.f32.mrb[0].mxu0
      %v2582 = vadd.f32 %v2377, %v2581
      %v2583 = vpop.f32.mrb[0].mxu0
      %2584 = vmatprep.mubr.bf16.mxu0 0
      %2585 = vmatmul.mubr.bf16.gmra.mrb[0].mxu0 %v2439
      %v2586 = vpop.f32.mrb[0].mxu0
      %v2587 = vadd.f32 %v2382, %v2586
      %v2588 = vpop.f32.mrb[0].mxu0
      %v2589 = vpop.f32.mrb[0].mxu0
      %v2590 = vadd.f32 %v2385, %v2589
      %v2591 = vpop.f32.mrb[0].mxu0
      %2592 = vmatprep.mubr.bf16.mxu0 0
      %2593 = vmatmul.mubr.bf16.gmra.mrb[0].mxu0 %v2441
      %v2594 = vpop.f32.mrb[0].mxu0
      %v2595 = vadd.f32 %v2390, %v2594
      %v2596 = vpop.f32.mrb[0].mxu0
      %v2597 = vpop.f32.mrb[0].mxu0
      %v2598 = vadd.f32 %v2393, %v2597
      %v2599 = vpop.f32.mrb[0].mxu0
      %2600 = vmatprep.mubr.bf16.mxu0 0
      %2601 = vmatmul.mubr.bf16.gmra.mrb[0].mxu0 %v2443
      %v2602 = vpop.f32.mrb[0].mxu0
      %v2603 = vadd.f32 %v2398, %v2602
      %v2604 = vpop.f32.mrb[0].mxu0
      %v2605 = vpop.f32.mrb[0].mxu0
      %v2606 = vadd.f32 %v2401, %v2605
      %v2607 = vpop.f32.mrb[0].mxu0
      %2608 = vdwg.mxu0
      %s2609 = scalar_lea.vmem [#allocation2], 24
      %v2610 = vld [vmem:[%s2609] sm:$0xf]
      %v2611 = vld [vmem:[%s2609 + $0x4] sm:$0xf]
      %v2612 = vld [vmem:[%s2609 + $0xc] sm:$0xf]
      %v2613 = vld [vmem:[%s2609 + $0x10] sm:$0xf]
      %v2614 = vld [vmem:[%s2609 + $0x18] sm:$0xf]
      %v2615 = vld [vmem:[%s2609 + $0x1c] sm:$0xf]
      %v2616 = vld [vmem:[%s2609 + $0x24] sm:$0xf]
      %v2617 = vld [vmem:[%s2609 + $0x28] sm:$0xf]
      %v2618 = vld [vmem:[%s2609 + $0x30] sm:$0xf]
      %v2619 = vld [vmem:[%s2609 + $0x34] sm:$0xf]
      %v2620 = vld [vmem:[%s2609 + $0x3c] sm:$0xf]
      %v2621 = vld [vmem:[%s2609 + $0x40] sm:$0xf]
      %v2622 = vld [vmem:[%s2609 + $0x48] sm:$0xf]
      %v2623 = vld [vmem:[%s2609 + $0x4c] sm:$0xf]
      %v2624 = vld [vmem:[%s2609 + $0x54] sm:$0xf]
      %v2625 = vld [vmem:[%s2609 + $0x58] sm:$0xf]
      %v2626 = vld [vmem:[%s2609 + $0x60] sm:$0xf]
      %v2627 = vld [vmem:[%s2609 + $0x64] sm:$0xf]
      %v2628 = vld [vmem:[%s2609 + $0x6c] sm:$0xf]
      %v2629 = vld [vmem:[%s2609 + $0x70] sm:$0xf]
      %v2630 = vld [vmem:[%s2609 + $0x78] sm:$0xf]
      %v2631 = vld [vmem:[%s2609 + $0x7c] sm:$0xf]
      %v2632 = vld [vmem:[%s2609 + $0x84] sm:$0xf]
      %v2633 = vld [vmem:[%s2609 + $0x88] sm:$0xf]
      %v2634 = vld [vmem:[%s2609 + $0x90] sm:$0xf]
      %v2635 = vld [vmem:[%s2609 + $0x94] sm:$0xf]
      %v2636 = vld [vmem:[%s2609 + $0x9c] sm:$0xf]
      %v2637 = vld [vmem:[%s2609 + $0xa0] sm:$0xf]
      %v2638 = vld [vmem:[%s2609 + $0xa8] sm:$0xf]
      %v2639 = vld [vmem:[%s2609 + $0xac] sm:$0xf]
      %v2640 = vld [vmem:[%s2609 + $0xb4] sm:$0xf]
      %v2641 = vld [vmem:[%s2609 + $0xb8] sm:$0xf]
      %s2642 = scalar_lea.vmem [#allocation2], 240
      %v2643 = vld [vmem:[%s2642] sm:$0xf]
      %v2644 = vld [vmem:[%s2642 + $0x4] sm:$0xf]
      %v2645 = vld [vmem:[%s2642 + $0xc] sm:$0xf]
      %v2646 = vld [vmem:[%s2642 + $0x10] sm:$0xf]
      %v2647 = vld [vmem:[%s2642 + $0x18] sm:$0xf]
      %v2648 = vld [vmem:[%s2642 + $0x1c] sm:$0xf]
      %v2649 = vld [vmem:[%s2642 + $0x24] sm:$0xf]
      %v2650 = vld [vmem:[%s2642 + $0x28] sm:$0xf]
      %v2651 = vld [vmem:[%s2642 + $0x30] sm:$0xf]
      %v2652 = vld [vmem:[%s2642 + $0x34] sm:$0xf]
      %v2653 = vld [vmem:[%s2642 + $0x3c] sm:$0xf]
      %v2654 = vld [vmem:[%s2642 + $0x40] sm:$0xf]
      %v2655 = vld [vmem:[%s2642 + $0x48] sm:$0xf]
      %v2656 = vld [vmem:[%s2642 + $0x4c] sm:$0xf]
      %v2657 = vld [vmem:[%s2642 + $0x54] sm:$0xf]
      %v2658 = vld [vmem:[%s2642 + $0x58] sm:$0xf]
      %v2659 = vld [vmem:[%s2642 + $0x60] sm:$0xf]
      %v2660 = vld [vmem:[%s2642 + $0x64] sm:$0xf]
      %v2661 = vld [vmem:[%s2642 + $0x6c] sm:$0xf]
      %v2662 = vld [vmem:[%s2642 + $0x70] sm:$0xf]
      %v2663 = vld [vmem:[%s2642 + $0x78] sm:$0xf]
      %v2664 = vld [vmem:[%s2642 + $0x7c] sm:$0xf]
      %v2665 = vld [vmem:[%s2642 + $0x84] sm:$0xf]
      %v2666 = vld [vmem:[%s2642 + $0x88] sm:$0xf]
      %v2667 = vld [vmem:[%s2642 + $0x90] sm:$0xf]
      %v2668 = vld [vmem:[%s2642 + $0x94] sm:$0xf]
      %v2669 = vld [vmem:[%s2642 + $0x9c] sm:$0xf]
      %v2670 = vld [vmem:[%s2642 + $0xa0] sm:$0xf]
      %v2671 = vld [vmem:[%s2642 + $0xa8] sm:$0xf]
      %v2672 = vld [vmem:[%s2642 + $0xac] sm:$0xf]
      %v2673 = vld [vmem:[%s2642 + $0xb4] sm:$0xf]
      %v2674 = vld [vmem:[%s2642 + $0xb8] sm:$0xf]
      %s2675 = scalar_lea.vmem [#allocation2], 456
      %v2676 = vld [vmem:[%s2675] sm:$0xf]
      %v2677 = vld [vmem:[%s2675 + $0x4] sm:$0xf]
      %v2678 = vld [vmem:[%s2675 + $0xc] sm:$0xf]
      %v2679 = vld [vmem:[%s2675 + $0x10] sm:$0xf]
      %v2680 = vld [vmem:[%s2675 + $0x18] sm:$0xf]
      %v2681 = vld [vmem:[%s2675 + $0x1c] sm:$0xf]
      %v2682 = vld [vmem:[%s2675 + $0x24] sm:$0xf]
      %v2683 = vld [vmem:[%s2675 + $0x28] sm:$0xf]
      %v2684 = vld [vmem:[%s2675 + $0x30] sm:$0xf]
      %v2685 = vld [vmem:[%s2675 + $0x34] sm:$0xf]
      %v2686 = vld [vmem:[%s2675 + $0x3c] sm:$0xf]
      %v2687 = vld [vmem:[%s2675 + $0x40] sm:$0xf]
      %v2688 = vld [vmem:[%s2675 + $0x48] sm:$0xf]
      %v2689 = vld [vmem:[%s2675 + $0x4c] sm:$0xf]
      %v2690 = vld [vmem:[%s2675 + $0x54] sm:$0xf]
      %v2691 = vld [vmem:[%s2675 + $0x58] sm:$0xf]
      %v2692 = vld [vmem:[%s2675 + $0x60] sm:$0xf]
      %v2693 = vld [vmem:[%s2675 + $0x64] sm:$0xf]
      %v2694 = vld [vmem:[%s2675 + $0x6c] sm:$0xf]
      %v2695 = vld [vmem:[%s2675 + $0x70] sm:$0xf]
      %v2696 = vld [vmem:[%s2675 + $0x78] sm:$0xf]
      %v2697 = vld [vmem:[%s2675 + $0x7c] sm:$0xf]
      %v2698 = vld [vmem:[%s2675 + $0x84] sm:$0xf]
      %v2699 = vld [vmem:[%s2675 + $0x88] sm:$0xf]
      %v2700 = vld [vmem:[%s2675 + $0x90] sm:$0xf]
      %v2701 = vld [vmem:[%s2675 + $0x94] sm:$0xf]
      %v2702 = vld [vmem:[%s2675 + $0x9c] sm:$0xf]
      %v2703 = vld [vmem:[%s2675 + $0xa0] sm:$0xf]
      %v2704 = vld [vmem:[%s2675 + $0xa8] sm:$0xf]
      %v2705 = vld [vmem:[%s2675 + $0xac] sm:$0xf]
      %v2706 = vld [vmem:[%s2675 + $0xb4] sm:$0xf]
      %v2707 = vld [vmem:[%s2675 + $0xb8] sm:$0xf]
      %v2740 = vunpack.c.l.b16 %v2610
      %v2741 = vunpack.c.l.b16 %v2611
      %v2742 = vunpack.c.l.b16 %v2612
      %v2743 = vunpack.c.l.b16 %v2613
      %v2744 = vunpack.c.l.b16 %v2614
      %v2745 = vunpack.c.l.b16 %v2615
      %v2746 = vunpack.c.l.b16 %v2616
      %v2747 = vunpack.c.l.b16 %v2617
      %v2748 = vunpack.c.l.b16 %v2618
      %v2749 = vunpack.c.l.b16 %v2619
      %v2750 = vunpack.c.l.b16 %v2620
      %v2751 = vunpack.c.l.b16 %v2621
      %v2752 = vunpack.c.l.b16 %v2622
      %v2753 = vunpack.c.l.b16 %v2623
      %v2754 = vunpack.c.l.b16 %v2624
      %v2755 = vunpack.c.l.b16 %v2625
      %v2756 = vunpack.c.l.b16 %v2626
      %v2757 = vunpack.c.l.b16 %v2627
      %v2758 = vunpack.c.l.b16 %v2628
      %v2759 = vunpack.c.l.b16 %v2629
      %v2760 = vunpack.c.l.b16 %v2630
      %v2761 = vunpack.c.l.b16 %v2631
      %v2762 = vunpack.c.l.b16 %v2632
      %v2763 = vunpack.c.l.b16 %v2633
      %v2764 = vunpack.c.l.b16 %v2634
      %v2765 = vunpack.c.l.b16 %v2635
      %v2766 = vunpack.c.l.b16 %v2636
      %v2767 = vunpack.c.l.b16 %v2637
      %v2768 = vunpack.c.l.b16 %v2638
      %v2769 = vunpack.c.l.b16 %v2639
      %v2770 = vunpack.c.l.b16 %v2640
      %v2771 = vunpack.c.l.b16 %v2641
      %v2772 = vpack.c.b16 %v2741, %v2740
      %v2773 = vpack.c.b16 %v2743, %v2742
      %v2774 = vpack.c.b16 %v2745, %v2744
      %v2775 = vpack.c.b16 %v2747, %v2746
      %v2776 = vpack.c.b16 %v2749, %v2748
      %v2777 = vpack.c.b16 %v2751, %v2750
      %v2778 = vpack.c.b16 %v2753, %v2752
      %v2779 = vpack.c.b16 %v2755, %v2754
      %v2780 = vpack.c.b16 %v2757, %v2756
      %v2781 = vpack.c.b16 %v2759, %v2758
      %v2782 = vpack.c.b16 %v2761, %v2760
      %v2783 = vpack.c.b16 %v2763, %v2762
      %v2784 = vpack.c.b16 %v2765, %v2764
      %v2785 = vpack.c.b16 %v2767, %v2766
      %v2786 = vpack.c.b16 %v2769, %v2768
      %v2787 = vpack.c.b16 %v2771, %v2770
      %v2820 = vunpack.c.l.b16 %v2643
      %v2821 = vunpack.c.l.b16 %v2644
      %v2822 = vunpack.c.l.b16 %v2645
      %v2823 = vunpack.c.l.b16 %v2646
      %v2824 = vunpack.c.l.b16 %v2647
      %v2825 = vunpack.c.l.b16 %v2648
      %v2826 = vunpack.c.l.b16 %v2649
      %v2827 = vunpack.c.l.b16 %v2650
      %v2828 = vunpack.c.l.b16 %v2651
      %v2829 = vunpack.c.l.b16 %v2652
      %v2830 = vunpack.c.l.b16 %v2653
      %v2831 = vunpack.c.l.b16 %v2654
      %v2832 = vunpack.c.l.b16 %v2655
      %v2833 = vunpack.c.l.b16 %v2656
      %v2834 = vunpack.c.l.b16 %v2657
      %v2835 = vunpack.c.l.b16 %v2658
      %v2836 = vunpack.c.l.b16 %v2659
      %v2837 = vunpack.c.l.b16 %v2660
      %v2838 = vunpack.c.l.b16 %v2661
      %v2839 = vunpack.c.l.b16 %v2662
      %v2840 = vunpack.c.l.b16 %v2663
      %v2841 = vunpack.c.l.b16 %v2664
      %v2842 = vunpack.c.l.b16 %v2665
      %v2843 = vunpack.c.l.b16 %v2666
      %v2844 = vunpack.c.l.b16 %v2667
      %v2845 = vunpack.c.l.b16 %v2668
      %v2846 = vunpack.c.l.b16 %v2669
      %v2847 = vunpack.c.l.b16 %v2670
      %v2848 = vunpack.c.l.b16 %v2671
      %v2849 = vunpack.c.l.b16 %v2672
      %v2850 = vunpack.c.l.b16 %v2673
      %v2851 = vunpack.c.l.b16 %v2674
      %v2852 = vpack.c.b16 %v2821, %v2820
      %v2853 = vpack.c.b16 %v2823, %v2822
      %v2854 = vpack.c.b16 %v2825, %v2824
      %v2855 = vpack.c.b16 %v2827, %v2826
      %v2856 = vpack.c.b16 %v2829, %v2828
      %v2857 = vpack.c.b16 %v2831, %v2830
      %v2858 = vpack.c.b16 %v2833, %v2832
      %v2859 = vpack.c.b16 %v2835, %v2834
      %v2860 = vpack.c.b16 %v2837, %v2836
      %v2861 = vpack.c.b16 %v2839, %v2838
      %v2862 = vpack.c.b16 %v2841, %v2840
      %v2863 = vpack.c.b16 %v2843, %v2842
      %v2864 = vpack.c.b16 %v2845, %v2844
      %v2865 = vpack.c.b16 %v2847, %v2846
      %v2866 = vpack.c.b16 %v2849, %v2848
      %v2867 = vpack.c.b16 %v2851, %v2850
      %2868 = vrot.lane.b32.xlu0 %v2852, 8
      %v2869 = vpop.permute.xlu0 %2868
      %2870 = vrot.lane.b32.xlu0 %v2853, 8
      %v2871 = vpop.permute.xlu0 %2870
      %2872 = vrot.lane.b32.xlu0 %v2854, 8
      %v2873 = vpop.permute.xlu0 %2872
      %2874 = vrot.lane.b32.xlu0 %v2855, 8
      %v2875 = vpop.permute.xlu0 %2874
      %2876 = vrot.lane.b32.xlu0 %v2856, 8
      %v2877 = vpop.permute.xlu0 %2876
      %2878 = vrot.lane.b32.xlu0 %v2857, 8
      %v2879 = vpop.permute.xlu0 %2878
      %2880 = vrot.lane.b32.xlu0 %v2858, 8
      %v2881 = vpop.permute.xlu0 %2880
      %2882 = vrot.lane.b32.xlu0 %v2859, 8
      %v2883 = vpop.permute.xlu0 %2882
      %2884 = vrot.lane.b32.xlu0 %v2860, 8
      %v2885 = vpop.permute.xlu0 %2884
      %2886 = vrot.lane.b32.xlu0 %v2861, 8
      %v2887 = vpop.permute.xlu0 %2886
      %2888 = vrot.lane.b32.xlu0 %v2862, 8
      %v2889 = vpop.permute.xlu0 %2888
      %2890 = vrot.lane.b32.xlu0 %v2863, 8
      %v2891 = vpop.permute.xlu0 %2890
      %2892 = vrot.lane.b32.xlu0 %v2864, 8
      %v2893 = vpop.permute.xlu0 %2892
      %2894 = vrot.lane.b32.xlu0 %v2865, 8
      %v2895 = vpop.permute.xlu0 %2894
      %2896 = vrot.lane.b32.xlu0 %v2866, 8
      %v2897 = vpop.permute.xlu0 %2896
      %2898 = vrot.lane.b32.xlu0 %v2867, 8
      %v2899 = vpop.permute.xlu0 %2898
      %v2932 = vunpack.c.l.b16 %v2676
      %v2933 = vunpack.c.l.b16 %v2677
      %v2934 = vunpack.c.l.b16 %v2678
      %v2935 = vunpack.c.l.b16 %v2679
      %v2936 = vunpack.c.l.b16 %v2680
      %v2937 = vunpack.c.l.b16 %v2681
      %v2938 = vunpack.c.l.b16 %v2682
      %v2939 = vunpack.c.l.b16 %v2683
      %v2940 = vunpack.c.l.b16 %v2684
      %v2941 = vunpack.c.l.b16 %v2685
      %v2942 = vunpack.c.l.b16 %v2686
      %v2943 = vunpack.c.l.b16 %v2687
      %v2944 = vunpack.c.l.b16 %v2688
      %v2945 = vunpack.c.l.b16 %v2689
      %v2946 = vunpack.c.l.b16 %v2690
      %v2947 = vunpack.c.l.b16 %v2691
      %v2948 = vunpack.c.l.b16 %v2692
      %v2949 = vunpack.c.l.b16 %v2693
      %v2950 = vunpack.c.l.b16 %v2694
      %v2951 = vunpack.c.l.b16 %v2695
      %v2952 = vunpack.c.l.b16 %v2696
      %v2953 = vunpack.c.l.b16 %v2697
      %v2954 = vunpack.c.l.b16 %v2698
      %v2955 = vunpack.c.l.b16 %v2699
      %v2956 = vunpack.c.l.b16 %v2700
      %v2957 = vunpack.c.l.b16 %v2701
      %v2958 = vunpack.c.l.b16 %v2702
      %v2959 = vunpack.c.l.b16 %v2703
      %v2960 = vunpack.c.l.b16 %v2704
      %v2961 = vunpack.c.l.b16 %v2705
      %v2962 = vunpack.c.l.b16 %v2706
      %v2963 = vunpack.c.l.b16 %v2707
      %v2964 = vpack.c.b16 %v2933, %v2932
      %v2965 = vpack.c.b16 %v2935, %v2934
      %v2966 = vpack.c.b16 %v2937, %v2936
      %v2967 = vpack.c.b16 %v2939, %v2938
      %v2968 = vpack.c.b16 %v2941, %v2940
      %v2969 = vpack.c.b16 %v2943, %v2942
      %v2970 = vpack.c.b16 %v2945, %v2944
      %v2971 = vpack.c.b16 %v2947, %v2946
      %v2972 = vpack.c.b16 %v2949, %v2948
      %v2973 = vpack.c.b16 %v2951, %v2950
      %v2974 = vpack.c.b16 %v2953, %v2952
      %v2975 = vpack.c.b16 %v2955, %v2954
      %v2976 = vpack.c.b16 %v2957, %v2956
      %v2977 = vpack.c.b16 %v2959, %v2958
      %v2978 = vpack.c.b16 %v2961, %v2960
      %v2979 = vpack.c.b16 %v2963, %v2962
      %2980 = vrot.lane.b32.xlu0 %v2964, 16
      %v2981 = vpop.permute.xlu0 %2980
      %2982 = vrot.lane.b32.xlu0 %v2965, 16
      %v2983 = vpop.permute.xlu0 %2982
      %2984 = vrot.lane.b32.xlu0 %v2966, 16
      %v2985 = vpop.permute.xlu0 %2984
      %2986 = vrot.lane.b32.xlu0 %v2967, 16
      %v2987 = vpop.permute.xlu0 %2986
      %2988 = vrot.lane.b32.xlu0 %v2968, 16
      %v2989 = vpop.permute.xlu0 %2988
      %2990 = vrot.lane.b32.xlu0 %v2969, 16
      %v2991 = vpop.permute.xlu0 %2990
      %2992 = vrot.lane.b32.xlu0 %v2970, 16
      %v2993 = vpop.permute.xlu0 %2992
      %2994 = vrot.lane.b32.xlu0 %v2971, 16
      %v2995 = vpop.permute.xlu0 %2994
      %2996 = vrot.lane.b32.xlu0 %v2972, 16
      %v2997 = vpop.permute.xlu0 %2996
      %2998 = vrot.lane.b32.xlu0 %v2973, 16
      %v2999 = vpop.permute.xlu0 %2998
      %3000 = vrot.lane.b32.xlu0 %v2974, 16
      %v3001 = vpop.permute.xlu0 %3000
      %3002 = vrot.lane.b32.xlu0 %v2975, 16
      %v3003 = vpop.permute.xlu0 %3002
      %3004 = vrot.lane.b32.xlu0 %v2976, 16
      %v3005 = vpop.permute.xlu0 %3004
      %3006 = vrot.lane.b32.xlu0 %v2977, 16
      %v3007 = vpop.permute.xlu0 %3006
      %3008 = vrot.lane.b32.xlu0 %v2978, 16
      %v3009 = vpop.permute.xlu0 %3008
      %3010 = vrot.lane.b32.xlu0 %v2979, 16
      %v3011 = vpop.permute.xlu0 %3010
      %v3014 = vsel %vm1628, %v2772, %v2869
      %v3017 = vsel %vm1628, %v2773, %v2871
      %v3020 = vsel %vm1628, %v2774, %v2873
      %v3023 = vsel %vm1628, %v2775, %v2875
      %v3026 = vsel %vm1628, %v2776, %v2877
      %v3029 = vsel %vm1628, %v2777, %v2879
      %v3032 = vsel %vm1628, %v2778, %v2881
      %v3035 = vsel %vm1628, %v2779, %v2883
      %v3038 = vsel %vm1628, %v2780, %v2885
      %v3041 = vsel %vm1628, %v2781, %v2887
      %v3044 = vsel %vm1628, %v2782, %v2889
      %v3047 = vsel %vm1628, %v2783, %v2891
      %v3050 = vsel %vm1628, %v2784, %v2893
      %v3053 = vsel %vm1628, %v2785, %v2895
      %v3056 = vsel %vm1628, %v2786, %v2897
      %v3059 = vsel %vm1628, %v2787, %v2899
      %v3061 = vsel %vm1677, %v3014, %v2981
      %v3063 = vsel %vm1677, %v3017, %v2983
      %v3065 = vsel %vm1677, %v3020, %v2985
      %v3067 = vsel %vm1677, %v3023, %v2987
      %v3069 = vsel %vm1677, %v3026, %v2989
      %v3071 = vsel %vm1677, %v3029, %v2991
      %v3073 = vsel %vm1677, %v3032, %v2993
      %v3075 = vsel %vm1677, %v3035, %v2995
      %v3077 = vsel %vm1677, %v3038, %v2997
      %v3079 = vsel %vm1677, %v3041, %v2999
      %v3081 = vsel %vm1677, %v3044, %v3001
      %v3083 = vsel %vm1677, %v3047, %v3003
      %v3085 = vsel %vm1677, %v3050, %v3005
      %v3087 = vsel %vm1677, %v3053, %v3007
      %v3089 = vsel %vm1677, %v3056, %v3009
      %v3091 = vsel %vm1677, %v3059, %v3011
      %s3092 = scalar_lea.vmem %s1, 24
      %v3093 = vld [vmem:[%s3092] sm:$0xf]
      %v3094 = vld [vmem:[%s3092 + $0x4] sm:$0xf]
      %v3095 = vld [vmem:[%s3092 + $0x8] sm:$0xf]
      %v3099 = vunpack.c.l.b16 %v3093
      %v3100 = vunpack.c.l.b16 %v3094
      %v3101 = vunpack.c.l.b16 %v3095
      %v3102 = vpack.c.b16 %v3100, %v3099
      %v3103 = vpack.c.b16 %v3101, %v3101
      %v3105 = vsel %vm2206, %v3061, 0
      %v3107 = vsel %vm2206, %v3063, 0
      %v3109 = vsel %vm2206, %v3065, 0
      %v3111 = vsel %vm2206, %v3067, 0
      %v3113 = vsel %vm2206, %v3069, 0
      %v3115 = vsel %vm2206, %v3071, 0
      %v3117 = vsel %vm2206, %v3073, 0
      %v3119 = vsel %vm2206, %v3075, 0
      %v3121 = vsel %vm2206, %v3077, 0
      %v3123 = vsel %vm2206, %v3079, 0
      %v3125 = vsel %vm2206, %v3081, 0
      %v3127 = vsel %vm2206, %v3083, 0
      %v3129 = vsel %vm2206, %v3085, 0
      %v3131 = vsel %vm2206, %v3087, 0
      %v3133 = vsel %vm2206, %v3089, 0
      %v3135 = vsel %vm2206, %v3091, 0
      %v3138 = vsel %vm2239, %v3103, 0
      %3140 = vmatprep.subr.bf16.mxu0 0
      %3141 = vmatpush1.bf16.msra.mxu0 %v3102
      %3142 = vmatprep.subr.bf16.mxu0 0
      %3143 = vmatpush1.bf16.msra.mxu0 %v3138
      %3144 = vmatprep.subr.bf16.mxu0 0
      %3145 = vmatpush1.bf16.msra.mxu0 0
      %3146 = vmatprep.subr.bf16.mxu0 0
      %3147 = vmatpush1.bf16.msra.mxu0 0
      %3148 = vmatprep.subr.bf16.mxu0 0
      %3149 = vmatpush1.bf16.msra.mxu0 0
      %3150 = vmatprep.subr.bf16.mxu0 0
      %3151 = vmatpush1.bf16.msra.mxu0 0
      %3152 = vmatprep.subr.bf16.mxu0 0
      %3153 = vmatpush1.bf16.msra.mxu0 0
      %3154 = vmatprep.subr.bf16.mxu0 0
      %3155 = vmatpush1.bf16.msra.mxu0 0
      %3156 = vmatprep.subr.bf16.mxu0 0
      %3157 = vmatpush1.bf16.msra.mxu0 0
      %3158 = vmatprep.subr.bf16.mxu0 0
      %3159 = vmatpush1.bf16.msra.mxu0 0
      %3160 = vmatprep.subr.bf16.mxu0 0
      %3161 = vmatpush1.bf16.msra.mxu0 0
      %3162 = vmatprep.subr.bf16.mxu0 0
      %3163 = vmatpush1.bf16.msra.mxu0 0
      %3164 = vmatprep.subr.bf16.mxu0 0
      %3165 = vmatpush1.bf16.msra.mxu0 0
      %3166 = vmatprep.subr.bf16.mxu0 0
      %3167 = vmatpush1.bf16.msra.mxu0 0
      %3168 = vmatprep.subr.bf16.mxu0 0
      %3169 = vmatpush1.bf16.msra.mxu0 0
      %3170 = vmatprep.subr.bf16.mxu0 0
      %3171 = vmatpush1.bf16.msra.mxu0 0
      %3172 = vmatprep.mubr.bf16.mxu0 0
      %3173 = vmatmul.mubr.bf16.gmra.mrb[0].mxu0 %v3105
      %v3174 = vpop.f32.mrb[0].mxu0
      %v3175 = vadd.f32 0.0, %v3174
      %v3176 = vpop.f32.mrb[0].mxu0
      %v3177 = vpop.f32.mrb[0].mxu0
      %v3178 = vadd.f32 0.0, %v3177
      %v3179 = vpop.f32.mrb[0].mxu0
      %3180 = vmatprep.mubr.bf16.mxu0 0
      %3181 = vmatmul.mubr.bf16.gmra.mrb[0].mxu0 %v3107
      %v3182 = vpop.f32.mrb[0].mxu0
      %v3183 = vadd.f32 0.0, %v3182
      %v3184 = vpop.f32.mrb[0].mxu0
      %v3185 = vpop.f32.mrb[0].mxu0
      %v3186 = vadd.f32 0.0, %v3185
      %v3187 = vpop.f32.mrb[0].mxu0
      %3188 = vmatprep.mubr.bf16.mxu0 0
      %3189 = vmatmul.mubr.bf16.gmra.mrb[0].mxu0 %v3109
      %v3190 = vpop.f32.mrb[0].mxu0
      %v3191 = vadd.f32 0.0, %v3190
      %v3192 = vpop.f32.mrb[0].mxu0
      %v3193 = vpop.f32.mrb[0].mxu0
      %v3194 = vadd.f32 0.0, %v3193
      %v3195 = vpop.f32.mrb[0].mxu0
      %3196 = vmatprep.mubr.bf16.mxu0 0
      %3197 = vmatmul.mubr.bf16.gmra.mrb[0].mxu0 %v3111
      %v3198 = vpop.f32.mrb[0].mxu0
      %v3199 = vadd.f32 0.0, %v3198
      %v3200 = vpop.f32.mrb[0].mxu0
      %v3201 = vpop.f32.mrb[0].mxu0
      %v3202 = vadd.f32 0.0, %v3201
      %v3203 = vpop.f32.mrb[0].mxu0
      %3204 = vmatprep.mubr.bf16.mxu0 0
      %3205 = vmatmul.mubr.bf16.gmra.mrb[0].mxu0 %v3113
      %v3206 = vpop.f32.mrb[0].mxu0
      %v3207 = vadd.f32 0.0, %v3206
      %v3208 = vpop.f32.mrb[0].mxu0
      %v3209 = vpop.f32.mrb[0].mxu0
      %v3210 = vadd.f32 0.0, %v3209
      %v3211 = vpop.f32.mrb[0].mxu0
      %3212 = vmatprep.mubr.bf16.mxu0 0
      %3213 = vmatmul.mubr.bf16.gmra.mrb[0].mxu0 %v3115
      %v3214 = vpop.f32.mrb[0].mxu0
      %v3215 = vadd.f32 0.0, %v3214
      %v3216 = vpop.f32.mrb[0].mxu0
      %v3217 = vpop.f32.mrb[0].mxu0
      %v3218 = vadd.f32 0.0, %v3217
      %v3219 = vpop.f32.mrb[0].mxu0
      %3220 = vmatprep.mubr.bf16.mxu0 0
      %3221 = vmatmul.mubr.bf16.gmra.mrb[0].mxu0 %v3117
      %v3222 = vpop.f32.mrb[0].mxu0
      %v3223 = vadd.f32 0.0, %v3222
      %v3224 = vpop.f32.mrb[0].mxu0
      %v3225 = vpop.f32.mrb[0].mxu0
      %v3226 = vadd.f32 0.0, %v3225
      %v3227 = vpop.f32.mrb[0].mxu0
      %3228 = vmatprep.mubr.bf16.mxu0 0
      %3229 = vmatmul.mubr.bf16.gmra.mrb[0].mxu0 %v3119
      %v3230 = vpop.f32.mrb[0].mxu0
      %v3231 = vadd.f32 0.0, %v3230
      %v3232 = vpop.f32.mrb[0].mxu0
      %v3233 = vpop.f32.mrb[0].mxu0
      %v3234 = vadd.f32 0.0, %v3233
      %v3235 = vpop.f32.mrb[0].mxu0
      %3236 = vmatprep.mubr.bf16.mxu0 0
      %3237 = vmatmul.mubr.bf16.gmra.mrb[0].mxu0 %v3121
      %v3238 = vpop.f32.mrb[0].mxu0
      %v3239 = vadd.f32 0.0, %v3238
      %v3240 = vpop.f32.mrb[0].mxu0
      %v3241 = vpop.f32.mrb[0].mxu0
      %v3242 = vadd.f32 0.0, %v3241
      %v3243 = vpop.f32.mrb[0].mxu0
      %3244 = vmatprep.mubr.bf16.mxu0 0
      %3245 = vmatmul.mubr.bf16.gmra.mrb[0].mxu0 %v3123
      %v3246 = vpop.f32.mrb[0].mxu0
      %v3247 = vadd.f32 0.0, %v3246
      %v3248 = vpop.f32.mrb[0].mxu0
      %v3249 = vpop.f32.mrb[0].mxu0
      %v3250 = vadd.f32 0.0, %v3249
      %v3251 = vpop.f32.mrb[0].mxu0
      %3252 = vmatprep.mubr.bf16.mxu0 0
      %3253 = vmatmul.mubr.bf16.gmra.mrb[0].mxu0 %v3125
      %v3254 = vpop.f32.mrb[0].mxu0
      %v3255 = vadd.f32 0.0, %v3254
      %v3256 = vpop.f32.mrb[0].mxu0
      %v3257 = vpop.f32.mrb[0].mxu0
      %v3258 = vadd.f32 0.0, %v3257
      %v3259 = vpop.f32.mrb[0].mxu0
      %3260 = vmatprep.mubr.bf16.mxu0 0
      %3261 = vmatmul.mubr.bf16.gmra.mrb[0].mxu0 %v3127
      %v3262 = vpop.f32.mrb[0].mxu0
      %v3263 = vadd.f32 0.0, %v3262
      %v3264 = vpop.f32.mrb[0].mxu0
      %v3265 = vpop.f32.mrb[0].mxu0
      %v3266 = vadd.f32 0.0, %v3265
      %v3267 = vpop.f32.mrb[0].mxu0
      %3268 = vmatprep.mubr.bf16.mxu0 0
      %3269 = vmatmul.mubr.bf16.gmra.mrb[0].mxu0 %v3129
      %v3270 = vpop.f32.mrb[0].mxu0
      %v3271 = vadd.f32 0.0, %v3270
      %v3272 = vpop.f32.mrb[0].mxu0
      %v3273 = vpop.f32.mrb[0].mxu0
      %v3274 = vadd.f32 0.0, %v3273
      %v3275 = vpop.f32.mrb[0].mxu0
      %3276 = vmatprep.mubr.bf16.mxu0 0
      %3277 = vmatmul.mubr.bf16.gmra.mrb[0].mxu0 %v3131
      %v3278 = vpop.f32.mrb[0].mxu0
      %v3279 = vadd.f32 0.0, %v3278
      %v3280 = vpop.f32.mrb[0].mxu0
      %v3281 = vpop.f32.mrb[0].mxu0
      %v3282 = vadd.f32 0.0, %v3281
      %v3283 = vpop.f32.mrb[0].mxu0
      %3284 = vmatprep.mubr.bf16.mxu0 0
      %3285 = vmatmul.mubr.bf16.gmra.mrb[0].mxu0 %v3133
      %v3286 = vpop.f32.mrb[0].mxu0
      %v3287 = vadd.f32 0.0, %v3286
      %v3288 = vpop.f32.mrb[0].mxu0
      %v3289 = vpop.f32.mrb[0].mxu0
      %v3290 = vadd.f32 0.0, %v3289
      %v3291 = vpop.f32.mrb[0].mxu0
      %3292 = vmatprep.mubr.bf16.mxu0 0
      %3293 = vmatmul.mubr.bf16.gmra.mrb[0].mxu0 %v3135
      %v3294 = vpop.f32.mrb[0].mxu0
      %v3295 = vadd.f32 0.0, %v3294
      %v3296 = vpop.f32.mrb[0].mxu0
      %v3297 = vpop.f32.mrb[0].mxu0
      %v3298 = vadd.f32 0.0, %v3297
      %v3299 = vpop.f32.mrb[0].mxu0
      %3300 = vdwg.mxu0
      %v3301 = vadd.f32 %v2483, %v3175
      %v3302 = vadd.f32 %v2486, %v3178
      %v3303 = vadd.f32 %v2491, %v3183
      %v3304 = vadd.f32 %v2494, %v3186
      %v3305 = vadd.f32 %v2499, %v3191
      %v3306 = vadd.f32 %v2502, %v3194
      %v3307 = vadd.f32 %v2507, %v3199
      %v3308 = vadd.f32 %v2510, %v3202
      %v3309 = vadd.f32 %v2515, %v3207
      %v3310 = vadd.f32 %v2518, %v3210
      %v3311 = vadd.f32 %v2523, %v3215
      %v3312 = vadd.f32 %v2526, %v3218
      %v3313 = vadd.f32 %v2531, %v3223
      %v3314 = vadd.f32 %v2534, %v3226
      %v3315 = vadd.f32 %v2539, %v3231
      %v3316 = vadd.f32 %v2542, %v3234
      %v3317 = vadd.f32 %v2547, %v3239
      %v3318 = vadd.f32 %v2550, %v3242
      %v3319 = vadd.f32 %v2555, %v3247
      %v3320 = vadd.f32 %v2558, %v3250
      %v3321 = vadd.f32 %v2563, %v3255
      %v3322 = vadd.f32 %v2566, %v3258
      %v3323 = vadd.f32 %v2571, %v3263
      %v3324 = vadd.f32 %v2574, %v3266
      %v3325 = vadd.f32 %v2579, %v3271
      %v3326 = vadd.f32 %v2582, %v3274
      %v3327 = vadd.f32 %v2587, %v3279
      %v3328 = vadd.f32 %v2590, %v3282
      %v3329 = vadd.f32 %v2595, %v3287
      %v3330 = vadd.f32 %v2598, %v3290
      %v3331 = vadd.f32 %v2603, %v3295
      %v3332 = vadd.f32 %v2606, %v3298
      %v3333 = vld [vmem:[%s2] sm:$0x1]
      %v3335 = vlaneseq
      %v3336 = vshrl.u32 %v3335, 7
      %v3337 = vsub.s32 0, %v3336
      %v3338 = vrot.slane %v3333, %v3337
      %v3340 = vadd.f32 %v3301, %v3338
      %v3341 = vadd.f32 %v3302, %v3338
      %v3342 = vadd.f32 %v3303, %v3338
      %v3343 = vadd.f32 %v3304, %v3338
      %v3344 = vadd.f32 %v3305, %v3338
      %v3345 = vadd.f32 %v3306, %v3338
      %v3346 = vadd.f32 %v3307, %v3338
      %v3347 = vadd.f32 %v3308, %v3338
      %v3348 = vadd.f32 %v3309, %v3338
      %v3349 = vadd.f32 %v3310, %v3338
      %v3350 = vadd.f32 %v3311, %v3338
      %v3351 = vadd.f32 %v3312, %v3338
      %v3352 = vadd.f32 %v3313, %v3338
      %v3353 = vadd.f32 %v3314, %v3338
      %v3354 = vadd.f32 %v3315, %v3338
      %v3355 = vadd.f32 %v3316, %v3338
      %v3356 = vadd.f32 %v3317, %v3338
      %v3357 = vadd.f32 %v3318, %v3338
      %v3358 = vadd.f32 %v3319, %v3338
      %v3359 = vadd.f32 %v3320, %v3338
      %v3360 = vadd.f32 %v3321, %v3338
      %v3361 = vadd.f32 %v3322, %v3338
      %v3362 = vadd.f32 %v3323, %v3338
      %v3363 = vadd.f32 %v3324, %v3338
      %v3364 = vadd.f32 %v3325, %v3338
      %v3365 = vadd.f32 %v3326, %v3338
      %v3366 = vadd.f32 %v3327, %v3338
      %v3367 = vadd.f32 %v3328, %v3338
      %v3368 = vadd.f32 %v3329, %v3338
      %v3369 = vadd.f32 %v3330, %v3338
      %v3370 = vadd.f32 %v3331, %v3338
      %v3371 = vadd.f32 %v3332, %v3338
      %v3372 = vmax.f32 %v3340, 0.0
      %v3373 = vmax.f32 %v3341, 0.0
      %v3374 = vmax.f32 %v3342, 0.0
      %v3375 = vmax.f32 %v3343, 0.0
      %v3376 = vmax.f32 %v3344, 0.0
      %v3377 = vmax.f32 %v3345, 0.0
      %v3378 = vmax.f32 %v3346, 0.0
      %v3379 = vmax.f32 %v3347, 0.0
      %v3380 = vmax.f32 %v3348, 0.0
      %v3381 = vmax.f32 %v3349, 0.0
      %v3382 = vmax.f32 %v3350, 0.0
      %v3383 = vmax.f32 %v3351, 0.0
      %v3384 = vmax.f32 %v3352, 0.0
      %v3385 = vmax.f32 %v3353, 0.0
      %v3386 = vmax.f32 %v3354, 0.0
      %v3387 = vmax.f32 %v3355, 0.0
      %v3388 = vmax.f32 %v3356, 0.0
      %v3389 = vmax.f32 %v3357, 0.0
      %v3390 = vmax.f32 %v3358, 0.0
      %v3391 = vmax.f32 %v3359, 0.0
      %v3392 = vmax.f32 %v3360, 0.0
      %v3393 = vmax.f32 %v3361, 0.0
      %v3394 = vmax.f32 %v3362, 0.0
      %v3395 = vmax.f32 %v3363, 0.0
      %v3396 = vmax.f32 %v3364, 0.0
      %v3397 = vmax.f32 %v3365, 0.0
      %v3398 = vmax.f32 %v3366, 0.0
      %v3399 = vmax.f32 %v3367, 0.0
      %v3400 = vmax.f32 %v3368, 0.0
      %v3401 = vmax.f32 %v3369, 0.0
      %v3402 = vmax.f32 %v3370, 0.0
      %v3403 = vmax.f32 %v3371, 0.0
      %v3404 = vpack.c.bf16 %v3373, %v3372
      %v3405 = vpack.c.bf16 %v3375, %v3374
      %v3406 = vpack.c.bf16 %v3377, %v3376
      %v3407 = vpack.c.bf16 %v3379, %v3378
      %v3408 = vpack.c.bf16 %v3381, %v3380
      %v3409 = vpack.c.bf16 %v3383, %v3382
      %v3410 = vpack.c.bf16 %v3385, %v3384
      %v3411 = vpack.c.bf16 %v3387, %v3386
      %v3412 = vpack.c.bf16 %v3389, %v3388
      %v3413 = vpack.c.bf16 %v3391, %v3390
      %v3414 = vpack.c.bf16 %v3393, %v3392
      %v3415 = vpack.c.bf16 %v3395, %v3394
      %v3416 = vpack.c.bf16 %v3397, %v3396
      %v3417 = vpack.c.bf16 %v3399, %v3398
      %v3418 = vpack.c.bf16 %v3401, %v3400
      %v3419 = vpack.c.bf16 %v3403, %v3402
      %v3436 = vunpack.c.l.b16 %v3404
      %v3437 = vunpack.c.h.b16 %v3404
      %v3438 = vunpack.c.l.b16 %v3405
      %v3439 = vunpack.c.h.b16 %v3405
      %v3440 = vunpack.c.l.b16 %v3406
      %v3441 = vunpack.c.h.b16 %v3406
      %v3442 = vunpack.c.l.b16 %v3407
      %v3443 = vunpack.c.h.b16 %v3407
      %v3444 = vunpack.c.l.b16 %v3408
      %v3445 = vunpack.c.h.b16 %v3408
      %v3446 = vunpack.c.l.b16 %v3409
      %v3447 = vunpack.c.h.b16 %v3409
      %v3448 = vunpack.c.l.b16 %v3410
      %v3449 = vunpack.c.h.b16 %v3410
      %v3450 = vunpack.c.l.b16 %v3411
      %v3451 = vunpack.c.h.b16 %v3411
      %v3452 = vunpack.c.l.b16 %v3412
      %v3453 = vunpack.c.h.b16 %v3412
      %v3454 = vunpack.c.l.b16 %v3413
      %v3455 = vunpack.c.h.b16 %v3413
      %v3456 = vunpack.c.l.b16 %v3414
      %v3457 = vunpack.c.h.b16 %v3414
      %v3458 = vunpack.c.l.b16 %v3415
      %v3459 = vunpack.c.h.b16 %v3415
      %v3460 = vunpack.c.l.b16 %v3416
      %v3461 = vunpack.c.h.b16 %v3416
      %v3462 = vunpack.c.l.b16 %v3417
      %v3463 = vunpack.c.h.b16 %v3417
      %v3464 = vunpack.c.l.b16 %v3418
      %v3465 = vunpack.c.h.b16 %v3418
      %v3466 = vunpack.c.l.b16 %v3419
      %v3467 = vunpack.c.h.b16 %v3419
      %v3468 = vpack.c.b16 %v3436, %v3436
      %v3469 = vpack.c.b16 %v3437, %v3437
      %v3470 = vpack.c.b16 %v3438, %v3438
      %v3471 = vpack.c.b16 %v3439, %v3439
      %v3472 = vpack.c.b16 %v3440, %v3440
      %v3473 = vpack.c.b16 %v3441, %v3441
      %v3474 = vpack.c.b16 %v3442, %v3442
      %v3475 = vpack.c.b16 %v3443, %v3443
      %v3476 = vpack.c.b16 %v3444, %v3444
      %v3477 = vpack.c.b16 %v3445, %v3445
      %v3478 = vpack.c.b16 %v3446, %v3446
      %v3479 = vpack.c.b16 %v3447, %v3447
      %v3480 = vpack.c.b16 %v3448, %v3448
      %v3481 = vpack.c.b16 %v3449, %v3449
      %v3482 = vpack.c.b16 %v3450, %v3450
      %v3483 = vpack.c.b16 %v3451, %v3451
      %v3484 = vpack.c.b16 %v3452, %v3452
      %v3485 = vpack.c.b16 %v3453, %v3453
      %v3486 = vpack.c.b16 %v3454, %v3454
      %v3487 = vpack.c.b16 %v3455, %v3455
      %v3488 = vpack.c.b16 %v3456, %v3456
      %v3489 = vpack.c.b16 %v3457, %v3457
      %v3490 = vpack.c.b16 %v3458, %v3458
      %v3491 = vpack.c.b16 %v3459, %v3459
      %v3492 = vpack.c.b16 %v3460, %v3460
      %v3493 = vpack.c.b16 %v3461, %v3461
      %v3494 = vpack.c.b16 %v3462, %v3462
      %v3495 = vpack.c.b16 %v3463, %v3463
      %v3496 = vpack.c.b16 %v3464, %v3464
      %v3497 = vpack.c.b16 %v3465, %v3465
      %v3498 = vpack.c.b16 %v3466, %v3466
      %v3499 = vpack.c.b16 %v3467, %v3467
      %v3501 = vshrl.u32 %v3468, 16
      %v3503 = vrot.slane %v3501, 7
      %v3504 = vshll.u32 %v3468, 16
      %v3506 = vor.u32 %v3503, %v3504
      %v3507 = vrot.slane %v3503, 4
      %v3509 = vshrl.u32 %v3469, 16
      %v3511 = vrot.slane %v3509, 7
      %v3512 = vshll.u32 %v3469, 16
      %v3514 = vor.u32 %v3511, %v3512
      %v3515 = vsel %vm483, %v3507, %v3514
      %v3516 = vrot.slane %v3511, 4
      %v3518 = vshrl.u32 %v3470, 16
      %v3520 = vrot.slane %v3518, 7
      %v3521 = vshll.u32 %v3470, 16
      %v3523 = vor.u32 %v3520, %v3521
      %v3524 = vrot.slane %v3520, 4
      %v3526 = vshrl.u32 %v3471, 16
      %v3528 = vrot.slane %v3526, 7
      %v3529 = vshll.u32 %v3471, 16
      %v3531 = vor.u32 %v3528, %v3529
      %v3532 = vsel %vm483, %v3524, %v3531
      %v3533 = vrot.slane %v3528, 4
      %v3535 = vshrl.u32 %v3472, 16
      %v3537 = vrot.slane %v3535, 7
      %v3538 = vshll.u32 %v3472, 16
      %v3540 = vor.u32 %v3537, %v3538
      %v3541 = vrot.slane %v3537, 4
      %v3543 = vshrl.u32 %v3473, 16
      %v3545 = vrot.slane %v3543, 7
      %v3546 = vshll.u32 %v3473, 16
      %v3548 = vor.u32 %v3545, %v3546
      %v3549 = vsel %vm483, %v3541, %v3548
      %v3550 = vrot.slane %v3545, 4
      %v3552 = vshrl.u32 %v3474, 16
      %v3554 = vrot.slane %v3552, 7
      %v3555 = vshll.u32 %v3474, 16
      %v3557 = vor.u32 %v3554, %v3555
      %v3558 = vrot.slane %v3554, 4
      %v3560 = vshrl.u32 %v3475, 16
      %v3562 = vrot.slane %v3560, 7
      %v3563 = vshll.u32 %v3475, 16
      %v3565 = vor.u32 %v3562, %v3563
      %v3566 = vsel %vm483, %v3558, %v3565
      %v3567 = vrot.slane %v3562, 4
      %v3569 = vshrl.u32 %v3476, 16
      %v3571 = vrot.slane %v3569, 7
      %v3572 = vshll.u32 %v3476, 16
      %v3574 = vor.u32 %v3571, %v3572
      %v3575 = vrot.slane %v3571, 4
      %v3577 = vshrl.u32 %v3477, 16
      %v3579 = vrot.slane %v3577, 7
      %v3580 = vshll.u32 %v3477, 16
      %v3582 = vor.u32 %v3579, %v3580
      %v3583 = vsel %vm483, %v3575, %v3582
      %v3584 = vrot.slane %v3579, 4
      %v3586 = vshrl.u32 %v3478, 16
      %v3588 = vrot.slane %v3586, 7
      %v3589 = vshll.u32 %v3478, 16
      %v3591 = vor.u32 %v3588, %v3589
      %v3592 = vrot.slane %v3588, 4
      %v3594 = vshrl.u32 %v3479, 16
      %v3596 = vrot.slane %v3594, 7
      %v3597 = vshll.u32 %v3479, 16
      %v3599 = vor.u32 %v3596, %v3597
      %v3600 = vsel %vm483, %v3592, %v3599
      %v3601 = vrot.slane %v3596, 4
      %v3603 = vshrl.u32 %v3480, 16
      %v3605 = vrot.slane %v3603, 7
      %v3606 = vshll.u32 %v3480, 16
      %v3608 = vor.u32 %v3605, %v3606
      %v3609 = vrot.slane %v3605, 4
      %v3611 = vshrl.u32 %v3481, 16
      %v3613 = vrot.slane %v3611, 7
      %v3614 = vshll.u32 %v3481, 16
      %v3616 = vor.u32 %v3613, %v3614
      %v3617 = vsel %vm483, %v3609, %v3616
      %v3618 = vrot.slane %v3613, 4
      %v3620 = vshrl.u32 %v3482, 16
      %v3622 = vrot.slane %v3620, 7
      %v3623 = vshll.u32 %v3482, 16
      %v3625 = vor.u32 %v3622, %v3623
      %v3626 = vrot.slane %v3622, 4
      %v3628 = vshrl.u32 %v3483, 16
      %v3630 = vrot.slane %v3628, 7
      %v3631 = vshll.u32 %v3483, 16
      %v3633 = vor.u32 %v3630, %v3631
      %v3634 = vsel %vm483, %v3626, %v3633
      %v3635 = vrot.slane %v3630, 4
      %v3637 = vshrl.u32 %v3484, 16
      %v3639 = vrot.slane %v3637, 7
      %v3640 = vshll.u32 %v3484, 16
      %v3642 = vor.u32 %v3639, %v3640
      %v3643 = vrot.slane %v3639, 4
      %v3645 = vshrl.u32 %v3485, 16
      %v3647 = vrot.slane %v3645, 7
      %v3648 = vshll.u32 %v3485, 16
      %v3650 = vor.u32 %v3647, %v3648
      %v3651 = vsel %vm483, %v3643, %v3650
      %v3652 = vrot.slane %v3647, 4
      %v3654 = vshrl.u32 %v3486, 16
      %v3656 = vrot.slane %v3654, 7
      %v3657 = vshll.u32 %v3486, 16
      %v3659 = vor.u32 %v3656, %v3657
      %v3660 = vrot.slane %v3656, 4
      %v3662 = vshrl.u32 %v3487, 16
      %v3664 = vrot.slane %v3662, 7
      %v3665 = vshll.u32 %v3487, 16
      %v3667 = vor.u32 %v3664, %v3665
      %v3668 = vsel %vm483, %v3660, %v3667
      %v3669 = vrot.slane %v3664, 4
      %v3671 = vshrl.u32 %v3488, 16
      %v3673 = vrot.slane %v3671, 7
      %v3674 = vshll.u32 %v3488, 16
      %v3676 = vor.u32 %v3673, %v3674
      %v3677 = vrot.slane %v3673, 4
      %v3679 = vshrl.u32 %v3489, 16
      %v3681 = vrot.slane %v3679, 7
      %v3682 = vshll.u32 %v3489, 16
      %v3684 = vor.u32 %v3681, %v3682
      %v3685 = vsel %vm483, %v3677, %v3684
      %v3686 = vrot.slane %v3681, 4
      %v3688 = vshrl.u32 %v3490, 16
      %v3690 = vrot.slane %v3688, 7
      %v3691 = vshll.u32 %v3490, 16
      %v3693 = vor.u32 %v3690, %v3691
      %v3694 = vrot.slane %v3690, 4
      %v3696 = vshrl.u32 %v3491, 16
      %v3698 = vrot.slane %v3696, 7
      %v3699 = vshll.u32 %v3491, 16
      %v3701 = vor.u32 %v3698, %v3699
      %v3702 = vsel %vm483, %v3694, %v3701
      %v3703 = vrot.slane %v3698, 4
      %v3705 = vshrl.u32 %v3492, 16
      %v3707 = vrot.slane %v3705, 7
      %v3708 = vshll.u32 %v3492, 16
      %v3710 = vor.u32 %v3707, %v3708
      %v3711 = vrot.slane %v3707, 4
      %v3713 = vshrl.u32 %v3493, 16
      %v3715 = vrot.slane %v3713, 7
      %v3716 = vshll.u32 %v3493, 16
      %v3718 = vor.u32 %v3715, %v3716
      %v3719 = vsel %vm483, %v3711, %v3718
      %v3720 = vrot.slane %v3715, 4
      %v3722 = vshrl.u32 %v3494, 16
      %v3724 = vrot.slane %v3722, 7
      %v3725 = vshll.u32 %v3494, 16
      %v3727 = vor.u32 %v3724, %v3725
      %v3728 = vrot.slane %v3724, 4
      %v3730 = vshrl.u32 %v3495, 16
      %v3732 = vrot.slane %v3730, 7
      %v3733 = vshll.u32 %v3495, 16
      %v3735 = vor.u32 %v3732, %v3733
      %v3736 = vsel %vm483, %v3728, %v3735
      %v3737 = vrot.slane %v3732, 4
      %v3739 = vshrl.u32 %v3496, 16
      %v3741 = vrot.slane %v3739, 7
      %v3742 = vshll.u32 %v3496, 16
      %v3744 = vor.u32 %v3741, %v3742
      %v3745 = vrot.slane %v3741, 4
      %v3747 = vshrl.u32 %v3497, 16
      %v3749 = vrot.slane %v3747, 7
      %v3750 = vshll.u32 %v3497, 16
      %v3752 = vor.u32 %v3749, %v3750
      %v3753 = vsel %vm483, %v3745, %v3752
      %v3754 = vrot.slane %v3749, 4
      %v3756 = vshrl.u32 %v3498, 16
      %v3758 = vrot.slane %v3756, 7
      %v3759 = vshll.u32 %v3498, 16
      %v3761 = vor.u32 %v3758, %v3759
      %v3762 = vrot.slane %v3758, 4
      %v3764 = vshrl.u32 %v3499, 16
      %v3766 = vrot.slane %v3764, 7
      %v3767 = vshll.u32 %v3499, 16
      %v3769 = vor.u32 %v3766, %v3767
      %v3770 = vsel %vm483, %v3762, %v3769
      %v3771 = vrot.slane %v3766, 4
      %v3820 = vld [vmem:[%s250] sm:$0xf]
      %v3821 = vsel %vm806, %v3506, %v3820
      %3822 = vst [vmem:[%s250] sm:$0xf] %v3821
      %3823 = vst.msk [vmem:[%s250 + $0x4] sm:$0xf] %vm226, %v3515
      %v3824 = vld [vmem:[%s250 + $0x8] sm:$0x1]
      %v3825 = vsel %vm253, %v3516, %v3824
      %3826 = vst [vmem:[%s250 + $0x8] sm:$0x1] %v3825
      %v3827 = vld [vmem:[%s250 + $0xc] sm:$0xf]
      %v3828 = vsel %vm806, %v3523, %v3827
      %3829 = vst [vmem:[%s250 + $0xc] sm:$0xf] %v3828
      %3830 = vst.msk [vmem:[%s250 + $0x10] sm:$0xf] %vm226, %v3532
      %v3831 = vld [vmem:[%s250 + $0x14] sm:$0x1]
      %v3832 = vsel %vm253, %v3533, %v3831
      %3833 = vst [vmem:[%s250 + $0x14] sm:$0x1] %v3832
      %v3834 = vld [vmem:[%s250 + $0x18] sm:$0xf]
      %v3835 = vsel %vm806, %v3540, %v3834
      %3836 = vst [vmem:[%s250 + $0x18] sm:$0xf] %v3835
      %3837 = vst.msk [vmem:[%s250 + $0x1c] sm:$0xf] %vm226, %v3549
      %v3838 = vld [vmem:[%s250 + $0x20] sm:$0x1]
      %v3839 = vsel %vm253, %v3550, %v3838
      %3840 = vst [vmem:[%s250 + $0x20] sm:$0x1] %v3839
      %v3841 = vld [vmem:[%s250 + $0x24] sm:$0xf]
      %v3842 = vsel %vm806, %v3557, %v3841
      %3843 = vst [vmem:[%s250 + $0x24] sm:$0xf] %v3842
      %3844 = vst.msk [vmem:[%s250 + $0x28] sm:$0xf] %vm226, %v3566
      %v3845 = vld [vmem:[%s250 + $0x2c] sm:$0x1]
      %v3846 = vsel %vm253, %v3567, %v3845
      %3847 = vst [vmem:[%s250 + $0x2c] sm:$0x1] %v3846
      %v3848 = vld [vmem:[%s250 + $0x30] sm:$0xf]
      %v3849 = vsel %vm806, %v3574, %v3848
      %3850 = vst [vmem:[%s250 + $0x30] sm:$0xf] %v3849
      %3851 = vst.msk [vmem:[%s250 + $0x34] sm:$0xf] %vm226, %v3583
      %v3852 = vld [vmem:[%s250 + $0x38] sm:$0x1]
      %v3853 = vsel %vm253, %v3584, %v3852
      %3854 = vst [vmem:[%s250 + $0x38] sm:$0x1] %v3853
      %v3855 = vld [vmem:[%s250 + $0x3c] sm:$0xf]
      %v3856 = vsel %vm806, %v3591, %v3855
      %3857 = vst [vmem:[%s250 + $0x3c] sm:$0xf] %v3856
      %3858 = vst.msk [vmem:[%s250 + $0x40] sm:$0xf] %vm226, %v3600
      %v3859 = vld [vmem:[%s250 + $0x44] sm:$0x1]
      %v3860 = vsel %vm253, %v3601, %v3859
      %3861 = vst [vmem:[%s250 + $0x44] sm:$0x1] %v3860
      %v3862 = vld [vmem:[%s250 + $0x48] sm:$0xf]
      %v3863 = vsel %vm806, %v3608, %v3862
      %3864 = vst [vmem:[%s250 + $0x48] sm:$0xf] %v3863
      %3865 = vst.msk [vmem:[%s250 + $0x4c] sm:$0xf] %vm226, %v3617
      %v3866 = vld [vmem:[%s250 + $0x50] sm:$0x1]
      %v3867 = vsel %vm253, %v3618, %v3866
      %3868 = vst [vmem:[%s250 + $0x50] sm:$0x1] %v3867
      %v3869 = vld [vmem:[%s250 + $0x54] sm:$0xf]
      %v3870 = vsel %vm806, %v3625, %v3869
      %3871 = vst [vmem:[%s250 + $0x54] sm:$0xf] %v3870
      %3872 = vst.msk [vmem:[%s250 + $0x58] sm:$0xf] %vm226, %v3634
      %v3873 = vld [vmem:[%s250 + $0x5c] sm:$0x1]
      %v3874 = vsel %vm253, %v3635, %v3873
      %3875 = vst [vmem:[%s250 + $0x5c] sm:$0x1] %v3874
      %v3876 = vld [vmem:[%s250 + $0x60] sm:$0xf]
      %v3877 = vsel %vm806, %v3642, %v3876
      %3878 = vst [vmem:[%s250 + $0x60] sm:$0xf] %v3877
      %3879 = vst.msk [vmem:[%s250 + $0x64] sm:$0xf] %vm226, %v3651
      %v3880 = vld [vmem:[%s250 + $0x68] sm:$0x1]
      %v3881 = vsel %vm253, %v3652, %v3880
      %3882 = vst [vmem:[%s250 + $0x68] sm:$0x1] %v3881
      %v3883 = vld [vmem:[%s250 + $0x6c] sm:$0xf]
      %v3884 = vsel %vm806, %v3659, %v3883
      %3885 = vst [vmem:[%s250 + $0x6c] sm:$0xf] %v3884
      %3886 = vst.msk [vmem:[%s250 + $0x70] sm:$0xf] %vm226, %v3668
      %v3887 = vld [vmem:[%s250 + $0x74] sm:$0x1]
      %v3888 = vsel %vm253, %v3669, %v3887
      %3889 = vst [vmem:[%s250 + $0x74] sm:$0x1] %v3888
      %v3890 = vld [vmem:[%s250 + $0x78] sm:$0xf]
      %v3891 = vsel %vm806, %v3676, %v3890
      %3892 = vst [vmem:[%s250 + $0x78] sm:$0xf] %v3891
      %3893 = vst.msk [vmem:[%s250 + $0x7c] sm:$0xf] %vm226, %v3685
      %v3894 = vld [vmem:[%s250 + $0x80] sm:$0x1]
      %v3895 = vsel %vm253, %v3686, %v3894
      %3896 = vst [vmem:[%s250 + $0x80] sm:$0x1] %v3895
      %v3897 = vld [vmem:[%s250 + $0x84] sm:$0xf]
      %v3898 = vsel %vm806, %v3693, %v3897
      %3899 = vst [vmem:[%s250 + $0x84] sm:$0xf] %v3898
      %3900 = vst.msk [vmem:[%s250 + $0x88] sm:$0xf] %vm226, %v3702
      %v3901 = vld [vmem:[%s250 + $0x8c] sm:$0x1]
      %v3902 = vsel %vm253, %v3703, %v3901
      %3903 = vst [vmem:[%s250 + $0x8c] sm:$0x1] %v3902
      %v3904 = vld [vmem:[%s250 + $0x90] sm:$0xf]
      %v3905 = vsel %vm806, %v3710, %v3904
      %3906 = vst [vmem:[%s250 + $0x90] sm:$0xf] %v3905
      %3907 = vst.msk [vmem:[%s250 + $0x94] sm:$0xf] %vm226, %v3719
      %v3908 = vld [vmem:[%s250 + $0x98] sm:$0x1]
      %v3909 = vsel %vm253, %v3720, %v3908
      %3910 = vst [vmem:[%s250 + $0x98] sm:$0x1] %v3909
      %v3911 = vld [vmem:[%s250 + $0x9c] sm:$0xf]
      %v3912 = vsel %vm806, %v3727, %v3911
      %3913 = vst [vmem:[%s250 + $0x9c] sm:$0xf] %v3912
      %3914 = vst.msk [vmem:[%s250 + $0xa0] sm:$0xf] %vm226, %v3736
      %v3915 = vld [vmem:[%s250 + $0xa4] sm:$0x1]
      %v3916 = vsel %vm253, %v3737, %v3915
      %3917 = vst [vmem:[%s250 + $0xa4] sm:$0x1] %v3916
      %v3918 = vld [vmem:[%s250 + $0xa8] sm:$0xf]
      %v3919 = vsel %vm806, %v3744, %v3918
      %3920 = vst [vmem:[%s250 + $0xa8] sm:$0xf] %v3919
      %3921 = vst.msk [vmem:[%s250 + $0xac] sm:$0xf] %vm226, %v3753
      %v3922 = vld [vmem:[%s250 + $0xb0] sm:$0x1]
      %v3923 = vsel %vm253, %v3754, %v3922
      %3924 = vst [vmem:[%s250 + $0xb0] sm:$0x1] %v3923
      %v3925 = vld [vmem:[%s250 + $0xb4] sm:$0xf]
      %v3926 = vsel %vm806, %v3761, %v3925
      %3927 = vst [vmem:[%s250 + $0xb4] sm:$0xf] %v3926
      %3928 = vst.msk [vmem:[%s250 + $0xb8] sm:$0xf] %vm226, %v3770
      %v3929 = vld [vmem:[%s250 + $0xbc] sm:$0x1]
      %v3930 = vsel %vm253, %v3771, %v3929
      %3931 = vst [vmem:[%s250 + $0xbc] sm:$0x1] %v3930
      %3964 = vst.msk [vmem:[%s951] sm:$0xf] %vm226, %v3468
      %3965 = vst.msk [vmem:[%s951 + $0x4] sm:$0xf] %vm226, %v3469
      %3966 = vst.msk [vmem:[%s951 + $0xc] sm:$0xf] %vm226, %v3470
      %3967 = vst.msk [vmem:[%s951 + $0x10] sm:$0xf] %vm226, %v3471
      %3968 = vst.msk [vmem:[%s951 + $0x18] sm:$0xf] %vm226, %v3472
      %3969 = vst.msk [vmem:[%s951 + $0x1c] sm:$0xf] %vm226, %v3473
      %3970 = vst.msk [vmem:[%s951 + $0x24] sm:$0xf] %vm226, %v3474
      %3971 = vst.msk [vmem:[%s951 + $0x28] sm:$0xf] %vm226, %v3475
      %3972 = vst.msk [vmem:[%s951 + $0x30] sm:$0xf] %vm226, %v3476
      %3973 = vst.msk [vmem:[%s951 + $0x34] sm:$0xf] %vm226, %v3477
      %3974 = vst.msk [vmem:[%s951 + $0x3c] sm:$0xf] %vm226, %v3478
      %3975 = vst.msk [vmem:[%s951 + $0x40] sm:$0xf] %vm226, %v3479
      %3976 = vst.msk [vmem:[%s951 + $0x48] sm:$0xf] %vm226, %v3480
      %3977 = vst.msk [vmem:[%s951 + $0x4c] sm:$0xf] %vm226, %v3481
      %3978 = vst.msk [vmem:[%s951 + $0x54] sm:$0xf] %vm226, %v3482
      %3979 = vst.msk [vmem:[%s951 + $0x58] sm:$0xf] %vm226, %v3483
      %3980 = vst.msk [vmem:[%s951 + $0x60] sm:$0xf] %vm226, %v3484
      %3981 = vst.msk [vmem:[%s951 + $0x64] sm:$0xf] %vm226, %v3485
      %3982 = vst.msk [vmem:[%s951 + $0x6c] sm:$0xf] %vm226, %v3486
      %3983 = vst.msk [vmem:[%s951 + $0x70] sm:$0xf] %vm226, %v3487
      %3984 = vst.msk [vmem:[%s951 + $0x78] sm:$0xf] %vm226, %v3488
      %3985 = vst.msk [vmem:[%s951 + $0x7c] sm:$0xf] %vm226, %v3489
      %3986 = vst.msk [vmem:[%s951 + $0x84] sm:$0xf] %vm226, %v3490
      %3987 = vst.msk [vmem:[%s951 + $0x88] sm:$0xf] %vm226, %v3491
      %3988 = vst.msk [vmem:[%s951 + $0x90] sm:$0xf] %vm226, %v3492
      %3989 = vst.msk [vmem:[%s951 + $0x94] sm:$0xf] %vm226, %v3493
      %3990 = vst.msk [vmem:[%s951 + $0x9c] sm:$0xf] %vm226, %v3494
      %3991 = vst.msk [vmem:[%s951 + $0xa0] sm:$0xf] %vm226, %v3495
      %3992 = vst.msk [vmem:[%s951 + $0xa8] sm:$0xf] %vm226, %v3496
      %3993 = vst.msk [vmem:[%s951 + $0xac] sm:$0xf] %vm226, %v3497
      %3994 = vst.msk [vmem:[%s951 + $0xb4] sm:$0xf] %vm226, %v3498
      %3995 = vst.msk [vmem:[%s951 + $0xb8] sm:$0xf] %vm226, %v3499
      %v3996 = vrot.slane %v3501, 4
      %v3997 = vrot.slane %v3504, 5
      %v3998 = vor.u32 %v3996, %v3997
      %v3999 = vrot.slane %v3998, 4
      %v4000 = vrot.slane %v3512, 5
      %v4001 = vsel %vm986, %v3999, %v4000
      %v4002 = vrot.slane %v3509, 4
      %v4003 = vor.u32 %v4002, %v4000
      %v4004 = vrot.slane %v4003, 4
      %v4005 = vrot.slane %v3518, 4
      %v4006 = vrot.slane %v3521, 5
      %v4007 = vor.u32 %v4005, %v4006
      %v4008 = vrot.slane %v4007, 4
      %v4009 = vrot.slane %v3529, 5
      %v4010 = vsel %vm986, %v4008, %v4009
      %v4011 = vrot.slane %v3526, 4
      %v4012 = vor.u32 %v4011, %v4009
      %v4013 = vrot.slane %v4012, 4
      %v4014 = vrot.slane %v3535, 4
      %v4015 = vrot.slane %v3538, 5
      %v4016 = vor.u32 %v4014, %v4015
      %v4017 = vrot.slane %v4016, 4
      %v4018 = vrot.slane %v3546, 5
      %v4019 = vsel %vm986, %v4017, %v4018
      %v4020 = vrot.slane %v3543, 4
      %v4021 = vor.u32 %v4020, %v4018
      %v4022 = vrot.slane %v4021, 4
      %v4023 = vrot.slane %v3552, 4
      %v4024 = vrot.slane %v3555, 5
      %v4025 = vor.u32 %v4023, %v4024
      %v4026 = vrot.slane %v4025, 4
      %v4027 = vrot.slane %v3563, 5
      %v4028 = vsel %vm986, %v4026, %v4027
      %v4029 = vrot.slane %v3560, 4
      %v4030 = vor.u32 %v4029, %v4027
      %v4031 = vrot.slane %v4030, 4
      %v4032 = vrot.slane %v3569, 4
      %v4033 = vrot.slane %v3572, 5
      %v4034 = vor.u32 %v4032, %v4033
      %v4035 = vrot.slane %v4034, 4
      %v4036 = vrot.slane %v3580, 5
      %v4037 = vsel %vm986, %v4035, %v4036
      %v4038 = vrot.slane %v3577, 4
      %v4039 = vor.u32 %v4038, %v4036
      %v4040 = vrot.slane %v4039, 4
      %v4041 = vrot.slane %v3586, 4
      %v4042 = vrot.slane %v3589, 5
      %v4043 = vor.u32 %v4041, %v4042
      %v4044 = vrot.slane %v4043, 4
      %v4045 = vrot.slane %v3597, 5
      %v4046 = vsel %vm986, %v4044, %v4045
      %v4047 = vrot.slane %v3594, 4
      %v4048 = vor.u32 %v4047, %v4045
      %v4049 = vrot.slane %v4048, 4
      %v4050 = vrot.slane %v3603, 4
      %v4051 = vrot.slane %v3606, 5
      %v4052 = vor.u32 %v4050, %v4051
      %v4053 = vrot.slane %v4052, 4
      %v4054 = vrot.slane %v3614, 5
      %v4055 = vsel %vm986, %v4053, %v4054
      %v4056 = vrot.slane %v3611, 4
      %v4057 = vor.u32 %v4056, %v4054
      %v4058 = vrot.slane %v4057, 4
      %v4059 = vrot.slane %v3620, 4
      %v4060 = vrot.slane %v3623, 5
      %v4061 = vor.u32 %v4059, %v4060
      %v4062 = vrot.slane %v4061, 4
      %v4063 = vrot.slane %v3631, 5
      %v4064 = vsel %vm986, %v4062, %v4063
      %v4065 = vrot.slane %v3628, 4
      %v4066 = vor.u32 %v4065, %v4063
      %v4067 = vrot.slane %v4066, 4
      %v4068 = vrot.slane %v3637, 4
      %v4069 = vrot.slane %v3640, 5
      %v4070 = vor.u32 %v4068, %v4069
      %v4071 = vrot.slane %v4070, 4
      %v4072 = vrot.slane %v3648, 5
      %v4073 = vsel %vm986, %v4071, %v4072
      %v4074 = vrot.slane %v3645, 4
      %v4075 = vor.u32 %v4074, %v4072
      %v4076 = vrot.slane %v4075, 4
      %v4077 = vrot.slane %v3654, 4
      %v4078 = vrot.slane %v3657, 5
      %v4079 = vor.u32 %v4077, %v4078
      %v4080 = vrot.slane %v4079, 4
      %v4081 = vrot.slane %v3665, 5
      %v4082 = vsel %vm986, %v4080, %v4081
      %v4083 = vrot.slane %v3662, 4
      %v4084 = vor.u32 %v4083, %v4081
      %v4085 = vrot.slane %v4084, 4
      %v4086 = vrot.slane %v3671, 4
      %v4087 = vrot.slane %v3674, 5
      %v4088 = vor.u32 %v4086, %v4087
      %v4089 = vrot.slane %v4088, 4
      %v4090 = vrot.slane %v3682, 5
      %v4091 = vsel %vm986, %v4089, %v4090
      %v4092 = vrot.slane %v3679, 4
      %v4093 = vor.u32 %v4092, %v4090
      %v4094 = vrot.slane %v4093, 4
      %v4095 = vrot.slane %v3688, 4
      %v4096 = vrot.slane %v3691, 5
      %v4097 = vor.u32 %v4095, %v4096
      %v4098 = vrot.slane %v4097, 4
      %v4099 = vrot.slane %v3699, 5
      %v4100 = vsel %vm986, %v4098, %v4099
      %v4101 = vrot.slane %v3696, 4
      %v4102 = vor.u32 %v4101, %v4099
      %v4103 = vrot.slane %v4102, 4
      %v4104 = vrot.slane %v3705, 4
      %v4105 = vrot.slane %v3708, 5
      %v4106 = vor.u32 %v4104, %v4105
      %v4107 = vrot.slane %v4106, 4
      %v4108 = vrot.slane %v3716, 5
      %v4109 = vsel %vm986, %v4107, %v4108
      %v4110 = vrot.slane %v3713, 4
      %v4111 = vor.u32 %v4110, %v4108
      %v4112 = vrot.slane %v4111, 4
      %v4113 = vrot.slane %v3722, 4
      %v4114 = vrot.slane %v3725, 5
      %v4115 = vor.u32 %v4113, %v4114
      %v4116 = vrot.slane %v4115, 4
      %v4117 = vrot.slane %v3733, 5
      %v4118 = vsel %vm986, %v4116, %v4117
      %v4119 = vrot.slane %v3730, 4
      %v4120 = vor.u32 %v4119, %v4117
      %v4121 = vrot.slane %v4120, 4
      %v4122 = vrot.slane %v3739, 4
      %v4123 = vrot.slane %v3742, 5
      %v4124 = vor.u32 %v4122, %v4123
      %v4125 = vrot.slane %v4124, 4
      %v4126 = vrot.slane %v3750, 5
      %v4127 = vsel %vm986, %v4125, %v4126
      %v4128 = vrot.slane %v3747, 4
      %v4129 = vor.u32 %v4128, %v4126
      %v4130 = vrot.slane %v4129, 4
      %v4131 = vrot.slane %v3756, 4
      %v4132 = vrot.slane %v3759, 5
      %v4133 = vor.u32 %v4131, %v4132
      %v4134 = vrot.slane %v4133, 4
      %v4135 = vrot.slane %v3767, 5
      %v4136 = vsel %vm986, %v4134, %v4135
      %v4137 = vrot.slane %v3764, 4
      %v4138 = vor.u32 %v4137, %v4135
      %v4139 = vrot.slane %v4138, 4
      %4172 = vst.msk [vmem:[%s302] sm:$0xf] %vm226, %v4001
      %v4173 = vld [vmem:[%s302 + $0x4] sm:$0xf]
      %v4174 = vsel %vm1164, %v4004, %v4173
      %4175 = vst [vmem:[%s302 + $0x4] sm:$0xf] %v4174
      %4176 = vst.msk [vmem:[%s302 + $0xc] sm:$0xf] %vm226, %v4010
      %v4177 = vld [vmem:[%s302 + $0x10] sm:$0xf]
      %v4178 = vsel %vm1164, %v4013, %v4177
      %4179 = vst [vmem:[%s302 + $0x10] sm:$0xf] %v4178
      %4180 = vst.msk [vmem:[%s302 + $0x18] sm:$0xf] %vm226, %v4019
      %v4181 = vld [vmem:[%s302 + $0x1c] sm:$0xf]
      %v4182 = vsel %vm1164, %v4022, %v4181
      %4183 = vst [vmem:[%s302 + $0x1c] sm:$0xf] %v4182
      %4184 = vst.msk [vmem:[%s302 + $0x24] sm:$0xf] %vm226, %v4028
      %v4185 = vld [vmem:[%s302 + $0x28] sm:$0xf]
      %v4186 = vsel %vm1164, %v4031, %v4185
      %4187 = vst [vmem:[%s302 + $0x28] sm:$0xf] %v4186
      %4188 = vst.msk [vmem:[%s302 + $0x30] sm:$0xf] %vm226, %v4037
      %v4189 = vld [vmem:[%s302 + $0x34] sm:$0xf]
      %v4190 = vsel %vm1164, %v4040, %v4189
      %4191 = vst [vmem:[%s302 + $0x34] sm:$0xf] %v4190
      %4192 = vst.msk [vmem:[%s302 + $0x3c] sm:$0xf] %vm226, %v4046
      %v4193 = vld [vmem:[%s302 + $0x40] sm:$0xf]
      %v4194 = vsel %vm1164, %v4049, %v4193
      %4195 = vst [vmem:[%s302 + $0x40] sm:$0xf] %v4194
      %4196 = vst.msk [vmem:[%s302 + $0x48] sm:$0xf] %vm226, %v4055
      %v4197 = vld [vmem:[%s302 + $0x4c] sm:$0xf]
      %v4198 = vsel %vm1164, %v4058, %v4197
      %4199 = vst [vmem:[%s302 + $0x4c] sm:$0xf] %v4198
      %4200 = vst.msk [vmem:[%s302 + $0x54] sm:$0xf] %vm226, %v4064
      %v4201 = vld [vmem:[%s302 + $0x58] sm:$0xf]
      %v4202 = vsel %vm1164, %v4067, %v4201
      %4203 = vst [vmem:[%s302 + $0x58] sm:$0xf] %v4202
      %4204 = vst.msk [vmem:[%s302 + $0x60] sm:$0xf] %vm226, %v4073
      %v4205 = vld [vmem:[%s302 + $0x64] sm:$0xf]
      %v4206 = vsel %vm1164, %v4076, %v4205
      %4207 = vst [vmem:[%s302 + $0x64] sm:$0xf] %v4206
      %4208 = vst.msk [vmem:[%s302 + $0x6c] sm:$0xf] %vm226, %v4082
      %v4209 = vld [vmem:[%s302 + $0x70] sm:$0xf]
      %v4210 = vsel %vm1164, %v4085, %v4209
      %4211 = vst [vmem:[%s302 + $0x70] sm:$0xf] %v4210
      %4212 = vst.msk [vmem:[%s302 + $0x78] sm:$0xf] %vm226, %v4091
      %v4213 = vld [vmem:[%s302 + $0x7c] sm:$0xf]
      %v4214 = vsel %vm1164, %v4094, %v4213
      %4215 = vst [vmem:[%s302 + $0x7c] sm:$0xf] %v4214
      %4216 = vst.msk [vmem:[%s302 + $0x84] sm:$0xf] %vm226, %v4100
      %v4217 = vld [vmem:[%s302 + $0x88] sm:$0xf]
      %v4218 = vsel %vm1164, %v4103, %v4217
      %4219 = vst [vmem:[%s302 + $0x88] sm:$0xf] %v4218
      %4220 = vst.msk [vmem:[%s302 + $0x90] sm:$0xf] %vm226, %v4109
      %v4221 = vld [vmem:[%s302 + $0x94] sm:$0xf]
      %v4222 = vsel %vm1164, %v4112, %v4221
      %4223 = vst [vmem:[%s302 + $0x94] sm:$0xf] %v4222
      %4224 = vst.msk [vmem:[%s302 + $0x9c] sm:$0xf] %vm226, %v4118
      %v4225 = vld [vmem:[%s302 + $0xa0] sm:$0xf]
      %v4226 = vsel %vm1164, %v4121, %v4225
      %4227 = vst [vmem:[%s302 + $0xa0] sm:$0xf] %v4226
      %4228 = vst.msk [vmem:[%s302 + $0xa8] sm:$0xf] %vm226, %v4127
      %v4229 = vld [vmem:[%s302 + $0xac] sm:$0xf]
      %v4230 = vsel %vm1164, %v4130, %v4229
      %4231 = vst [vmem:[%s302 + $0xac] sm:$0xf] %v4230
      %4232 = vst.msk [vmem:[%s302 + $0xb4] sm:$0xf] %vm226, %v4136
      %v4233 = vld [vmem:[%s302 + $0xb8] sm:$0xf]
      %v4234 = vsel %vm1164, %v4139, %v4233
      %4235 = vst [vmem:[%s302 + $0xb8] sm:$0xf] %v4234
      %v4236 = vld [vmem:[#allocation2] sm:$0xf]
      %v4237 = vld [vmem:[#allocation2 + $0x4] sm:$0xf]
      %v4238 = vld [vmem:[#allocation2 + $0xc] sm:$0xf]
      %v4239 = vld [vmem:[#allocation2 + $0x10] sm:$0xf]
      %v4240 = vld [vmem:[#allocation2 + $0x18] sm:$0xf]
      %v4241 = vld [vmem:[#allocation2 + $0x1c] sm:$0xf]
      %v4242 = vld [vmem:[#allocation2 + $0x24] sm:$0xf]
      %v4243 = vld [vmem:[#allocation2 + $0x28] sm:$0xf]
      %v4244 = vld [vmem:[#allocation2 + $0x30] sm:$0xf]
      %v4245 = vld [vmem:[#allocation2 + $0x34] sm:$0xf]
      %v4246 = vld [vmem:[#allocation2 + $0x3c] sm:$0xf]
      %v4247 = vld [vmem:[#allocation2 + $0x40] sm:$0xf]
      %v4248 = vld [vmem:[#allocation2 + $0x48] sm:$0xf]
      %v4249 = vld [vmem:[#allocation2 + $0x4c] sm:$0xf]
      %v4250 = vld [vmem:[#allocation2 + $0x54] sm:$0xf]
      %v4251 = vld [vmem:[#allocation2 + $0x58] sm:$0xf]
      %v4252 = vld [vmem:[#allocation2 + $0x60] sm:$0xf]
      %v4253 = vld [vmem:[#allocation2 + $0x64] sm:$0xf]
      %v4254 = vld [vmem:[#allocation2 + $0x6c] sm:$0xf]
      %v4255 = vld [vmem:[#allocation2 + $0x70] sm:$0xf]
      %v4256 = vld [vmem:[#allocation2 + $0x78] sm:$0xf]
      %v4257 = vld [vmem:[#allocation2 + $0x7c] sm:$0xf]
      %v4258 = vld [vmem:[#allocation2 + $0x84] sm:$0xf]
      %v4259 = vld [vmem:[#allocation2 + $0x88] sm:$0xf]
      %v4260 = vld [vmem:[#allocation2 + $0x90] sm:$0xf]
      %v4261 = vld [vmem:[#allocation2 + $0x94] sm:$0xf]
      %v4262 = vld [vmem:[#allocation2 + $0x9c] sm:$0xf]
      %v4263 = vld [vmem:[#allocation2 + $0xa0] sm:$0xf]
      %v4264 = vld [vmem:[#allocation2 + $0xa8] sm:$0xf]
      %v4265 = vld [vmem:[#allocation2 + $0xac] sm:$0xf]
      %v4266 = vld [vmem:[#allocation2 + $0xb4] sm:$0xf]
      %v4267 = vld [vmem:[#allocation2 + $0xb8] sm:$0xf]
      %v4268 = vld [vmem:[%s234] sm:$0xf]
      %v4269 = vld [vmem:[%s234 + $0x4] sm:$0xf]
      %v4270 = vld [vmem:[%s234 + $0xc] sm:$0xf]
      %v4271 = vld [vmem:[%s234 + $0x10] sm:$0xf]
      %v4272 = vld [vmem:[%s234 + $0x18] sm:$0xf]
      %v4273 = vld [vmem:[%s234 + $0x1c] sm:$0xf]
      %v4274 = vld [vmem:[%s234 + $0x24] sm:$0xf]
      %v4275 = vld [vmem:[%s234 + $0x28] sm:$0xf]
      %v4276 = vld [vmem:[%s234 + $0x30] sm:$0xf]
      %v4277 = vld [vmem:[%s234 + $0x34] sm:$0xf]
      %v4278 = vld [vmem:[%s234 + $0x3c] sm:$0xf]
      %v4279 = vld [vmem:[%s234 + $0x40] sm:$0xf]
      %v4280 = vld [vmem:[%s234 + $0x48] sm:$0xf]
      %v4281 = vld [vmem:[%s234 + $0x4c] sm:$0xf]
      %v4282 = vld [vmem:[%s234 + $0x54] sm:$0xf]
      %v4283 = vld [vmem:[%s234 + $0x58] sm:$0xf]
      %v4284 = vld [vmem:[%s234 + $0x60] sm:$0xf]
      %v4285 = vld [vmem:[%s234 + $0x64] sm:$0xf]
      %v4286 = vld [vmem:[%s234 + $0x6c] sm:$0xf]
      %v4287 = vld [vmem:[%s234 + $0x70] sm:$0xf]
      %v4288 = vld [vmem:[%s234 + $0x78] sm:$0xf]
      %v4289 = vld [vmem:[%s234 + $0x7c] sm:$0xf]
      %v4290 = vld [vmem:[%s234 + $0x84] sm:$0xf]
      %v4291 = vld [vmem:[%s234 + $0x88] sm:$0xf]
      %v4292 = vld [vmem:[%s234 + $0x90] sm:$0xf]
      %v4293 = vld [vmem:[%s234 + $0x94] sm:$0xf]
      %v4294 = vld [vmem:[%s234 + $0x9c] sm:$0xf]
      %v4295 = vld [vmem:[%s234 + $0xa0] sm:$0xf]
      %v4296 = vld [vmem:[%s234 + $0xa8] sm:$0xf]
      %v4297 = vld [vmem:[%s234 + $0xac] sm:$0xf]
      %v4298 = vld [vmem:[%s234 + $0xb4] sm:$0xf]
      %v4299 = vld [vmem:[%s234 + $0xb8] sm:$0xf]
      %v4300 = vld [vmem:[%s242] sm:$0xf]
      %v4301 = vld [vmem:[%s242 + $0x4] sm:$0xf]
      %v4302 = vld [vmem:[%s242 + $0xc] sm:$0xf]
      %v4303 = vld [vmem:[%s242 + $0x10] sm:$0xf]
      %v4304 = vld [vmem:[%s242 + $0x18] sm:$0xf]
      %v4305 = vld [vmem:[%s242 + $0x1c] sm:$0xf]
      %v4306 = vld [vmem:[%s242 + $0x24] sm:$0xf]
      %v4307 = vld [vmem:[%s242 + $0x28] sm:$0xf]
      %v4308 = vld [vmem:[%s242 + $0x30] sm:$0xf]
      %v4309 = vld [vmem:[%s242 + $0x34] sm:$0xf]
      %v4310 = vld [vmem:[%s242 + $0x3c] sm:$0xf]
      %v4311 = vld [vmem:[%s242 + $0x40] sm:$0xf]
      %v4312 = vld [vmem:[%s242 + $0x48] sm:$0xf]
      %v4313 = vld [vmem:[%s242 + $0x4c] sm:$0xf]
      %v4314 = vld [vmem:[%s242 + $0x54] sm:$0xf]
      %v4315 = vld [vmem:[%s242 + $0x58] sm:$0xf]
      %v4316 = vld [vmem:[%s242 + $0x60] sm:$0xf]
      %v4317 = vld [vmem:[%s242 + $0x64] sm:$0xf]
      %v4318 = vld [vmem:[%s242 + $0x6c] sm:$0xf]
      %v4319 = vld [vmem:[%s242 + $0x70] sm:$0xf]
      %v4320 = vld [vmem:[%s242 + $0x78] sm:$0xf]
      %v4321 = vld [vmem:[%s242 + $0x7c] sm:$0xf]
      %v4322 = vld [vmem:[%s242 + $0x84] sm:$0xf]
      %v4323 = vld [vmem:[%s242 + $0x88] sm:$0xf]
      %v4324 = vld [vmem:[%s242 + $0x90] sm:$0xf]
      %v4325 = vld [vmem:[%s242 + $0x94] sm:$0xf]
      %v4326 = vld [vmem:[%s242 + $0x9c] sm:$0xf]
      %v4327 = vld [vmem:[%s242 + $0xa0] sm:$0xf]
      %v4328 = vld [vmem:[%s242 + $0xa8] sm:$0xf]
      %v4329 = vld [vmem:[%s242 + $0xac] sm:$0xf]
      %v4330 = vld [vmem:[%s242 + $0xb4] sm:$0xf]
      %v4331 = vld [vmem:[%s242 + $0xb8] sm:$0xf]
      %v4364 = vunpack.c.l.b16 %v4236
      %v4365 = vunpack.c.l.b16 %v4237
      %v4366 = vunpack.c.l.b16 %v4238
      %v4367 = vunpack.c.l.b16 %v4239
      %v4368 = vunpack.c.l.b16 %v4240
      %v4369 = vunpack.c.l.b16 %v4241
      %v4370 = vunpack.c.l.b16 %v4242
      %v4371 = vunpack.c.l.b16 %v4243
      %v4372 = vunpack.c.l.b16 %v4244
      %v4373 = vunpack.c.l.b16 %v4245
      %v4374 = vunpack.c.l.b16 %v4246
      %v4375 = vunpack.c.l.b16 %v4247
      %v4376 = vunpack.c.l.b16 %v4248
      %v4377 = vunpack.c.l.b16 %v4249
      %v4378 = vunpack.c.l.b16 %v4250
      %v4379 = vunpack.c.l.b16 %v4251
      %v4380 = vunpack.c.l.b16 %v4252
      %v4381 = vunpack.c.l.b16 %v4253
      %v4382 = vunpack.c.l.b16 %v4254
      %v4383 = vunpack.c.l.b16 %v4255
      %v4384 = vunpack.c.l.b16 %v4256
      %v4385 = vunpack.c.l.b16 %v4257
      %v4386 = vunpack.c.l.b16 %v4258
      %v4387 = vunpack.c.l.b16 %v4259
      %v4388 = vunpack.c.l.b16 %v4260
      %v4389 = vunpack.c.l.b16 %v4261
      %v4390 = vunpack.c.l.b16 %v4262
      %v4391 = vunpack.c.l.b16 %v4263
      %v4392 = vunpack.c.l.b16 %v4264
      %v4393 = vunpack.c.l.b16 %v4265
      %v4394 = vunpack.c.l.b16 %v4266
      %v4395 = vunpack.c.l.b16 %v4267
      %v4396 = vpack.c.b16 %v4365, %v4364
      %v4397 = vpack.c.b16 %v4367, %v4366
      %v4398 = vpack.c.b16 %v4369, %v4368
      %v4399 = vpack.c.b16 %v4371, %v4370
      %v4400 = vpack.c.b16 %v4373, %v4372
      %v4401 = vpack.c.b16 %v4375, %v4374
      %v4402 = vpack.c.b16 %v4377, %v4376
      %v4403 = vpack.c.b16 %v4379, %v4378
      %v4404 = vpack.c.b16 %v4381, %v4380
      %v4405 = vpack.c.b16 %v4383, %v4382
      %v4406 = vpack.c.b16 %v4385, %v4384
      %v4407 = vpack.c.b16 %v4387, %v4386
      %v4408 = vpack.c.b16 %v4389, %v4388
      %v4409 = vpack.c.b16 %v4391, %v4390
      %v4410 = vpack.c.b16 %v4393, %v4392
      %v4411 = vpack.c.b16 %v4395, %v4394
      %v4444 = vunpack.c.l.b16 %v4268
      %v4445 = vunpack.c.l.b16 %v4269
      %v4446 = vunpack.c.l.b16 %v4270
      %v4447 = vunpack.c.l.b16 %v4271
      %v4448 = vunpack.c.l.b16 %v4272
      %v4449 = vunpack.c.l.b16 %v4273
      %v4450 = vunpack.c.l.b16 %v4274
      %v4451 = vunpack.c.l.b16 %v4275
      %v4452 = vunpack.c.l.b16 %v4276
      %v4453 = vunpack.c.l.b16 %v4277
      %v4454 = vunpack.c.l.b16 %v4278
      %v4455 = vunpack.c.l.b16 %v4279
      %v4456 = vunpack.c.l.b16 %v4280
      %v4457 = vunpack.c.l.b16 %v4281
      %v4458 = vunpack.c.l.b16 %v4282
      %v4459 = vunpack.c.l.b16 %v4283
      %v4460 = vunpack.c.l.b16 %v4284
      %v4461 = vunpack.c.l.b16 %v4285
      %v4462 = vunpack.c.l.b16 %v4286
      %v4463 = vunpack.c.l.b16 %v4287
      %v4464 = vunpack.c.l.b16 %v4288
      %v4465 = vunpack.c.l.b16 %v4289
      %v4466 = vunpack.c.l.b16 %v4290
      %v4467 = vunpack.c.l.b16 %v4291
      %v4468 = vunpack.c.l.b16 %v4292
      %v4469 = vunpack.c.l.b16 %v4293
      %v4470 = vunpack.c.l.b16 %v4294
      %v4471 = vunpack.c.l.b16 %v4295
      %v4472 = vunpack.c.l.b16 %v4296
      %v4473 = vunpack.c.l.b16 %v4297
      %v4474 = vunpack.c.l.b16 %v4298
      %v4475 = vunpack.c.l.b16 %v4299
      %v4476 = vpack.c.b16 %v4445, %v4444
      %v4477 = vpack.c.b16 %v4447, %v4446
      %v4478 = vpack.c.b16 %v4449, %v4448
      %v4479 = vpack.c.b16 %v4451, %v4450
      %v4480 = vpack.c.b16 %v4453, %v4452
      %v4481 = vpack.c.b16 %v4455, %v4454
      %v4482 = vpack.c.b16 %v4457, %v4456
      %v4483 = vpack.c.b16 %v4459, %v4458
      %v4484 = vpack.c.b16 %v4461, %v4460
      %v4485 = vpack.c.b16 %v4463, %v4462
      %v4486 = vpack.c.b16 %v4465, %v4464
      %v4487 = vpack.c.b16 %v4467, %v4466
      %v4488 = vpack.c.b16 %v4469, %v4468
      %v4489 = vpack.c.b16 %v4471, %v4470
      %v4490 = vpack.c.b16 %v4473, %v4472
      %v4491 = vpack.c.b16 %v4475, %v4474
      %4492 = vrot.lane.b32.xlu0 %v4476, 8
      %v4493 = vpop.permute.xlu0 %4492
      %4494 = vrot.lane.b32.xlu0 %v4477, 8
      %v4495 = vpop.permute.xlu0 %4494
      %4496 = vrot.lane.b32.xlu0 %v4478, 8
      %v4497 = vpop.permute.xlu0 %4496
      %4498 = vrot.lane.b32.xlu0 %v4479, 8
      %v4499 = vpop.permute.xlu0 %4498
      %4500 = vrot.lane.b32.xlu0 %v4480, 8
      %v4501 = vpop.permute.xlu0 %4500
      %4502 = vrot.lane.b32.xlu0 %v4481, 8
      %v4503 = vpop.permute.xlu0 %4502
      %4504 = vrot.lane.b32.xlu0 %v4482, 8
      %v4505 = vpop.permute.xlu0 %4504
      %4506 = vrot.lane.b32.xlu0 %v4483, 8
      %v4507 = vpop.permute.xlu0 %4506
      %4508 = vrot.lane.b32.xlu0 %v4484, 8
      %v4509 = vpop.permute.xlu0 %4508
      %4510 = vrot.lane.b32.xlu0 %v4485, 8
      %v4511 = vpop.permute.xlu0 %4510
      %4512 = vrot.lane.b32.xlu0 %v4486, 8
      %v4513 = vpop.permute.xlu0 %4512
      %4514 = vrot.lane.b32.xlu0 %v4487, 8
      %v4515 = vpop.permute.xlu0 %4514
      %4516 = vrot.lane.b32.xlu0 %v4488, 8
      %v4517 = vpop.permute.xlu0 %4516
      %4518 = vrot.lane.b32.xlu0 %v4489, 8
      %v4519 = vpop.permute.xlu0 %4518
      %4520 = vrot.lane.b32.xlu0 %v4490, 8
      %v4521 = vpop.permute.xlu0 %4520
      %4522 = vrot.lane.b32.xlu0 %v4491, 8
      %v4523 = vpop.permute.xlu0 %4522
      %v4556 = vunpack.c.l.b16 %v4300
      %v4557 = vunpack.c.l.b16 %v4301
      %v4558 = vunpack.c.l.b16 %v4302
      %v4559 = vunpack.c.l.b16 %v4303
      %v4560 = vunpack.c.l.b16 %v4304
      %v4561 = vunpack.c.l.b16 %v4305
      %v4562 = vunpack.c.l.b16 %v4306
      %v4563 = vunpack.c.l.b16 %v4307
      %v4564 = vunpack.c.l.b16 %v4308
      %v4565 = vunpack.c.l.b16 %v4309
      %v4566 = vunpack.c.l.b16 %v4310
      %v4567 = vunpack.c.l.b16 %v4311
      %v4568 = vunpack.c.l.b16 %v4312
      %v4569 = vunpack.c.l.b16 %v4313
      %v4570 = vunpack.c.l.b16 %v4314
      %v4571 = vunpack.c.l.b16 %v4315
      %v4572 = vunpack.c.l.b16 %v4316
      %v4573 = vunpack.c.l.b16 %v4317
      %v4574 = vunpack.c.l.b16 %v4318
      %v4575 = vunpack.c.l.b16 %v4319
      %v4576 = vunpack.c.l.b16 %v4320
      %v4577 = vunpack.c.l.b16 %v4321
      %v4578 = vunpack.c.l.b16 %v4322
      %v4579 = vunpack.c.l.b16 %v4323
      %v4580 = vunpack.c.l.b16 %v4324
      %v4581 = vunpack.c.l.b16 %v4325
      %v4582 = vunpack.c.l.b16 %v4326
      %v4583 = vunpack.c.l.b16 %v4327
      %v4584 = vunpack.c.l.b16 %v4328
      %v4585 = vunpack.c.l.b16 %v4329
      %v4586 = vunpack.c.l.b16 %v4330
      %v4587 = vunpack.c.l.b16 %v4331
      %v4588 = vpack.c.b16 %v4557, %v4556
      %v4589 = vpack.c.b16 %v4559, %v4558
      %v4590 = vpack.c.b16 %v4561, %v4560
      %v4591 = vpack.c.b16 %v4563, %v4562
      %v4592 = vpack.c.b16 %v4565, %v4564
      %v4593 = vpack.c.b16 %v4567, %v4566
      %v4594 = vpack.c.b16 %v4569, %v4568
      %v4595 = vpack.c.b16 %v4571, %v4570
      %v4596 = vpack.c.b16 %v4573, %v4572
      %v4597 = vpack.c.b16 %v4575, %v4574
      %v4598 = vpack.c.b16 %v4577, %v4576
      %v4599 = vpack.c.b16 %v4579, %v4578
      %v4600 = vpack.c.b16 %v4581, %v4580
      %v4601 = vpack.c.b16 %v4583, %v4582
      %v4602 = vpack.c.b16 %v4585, %v4584
      %v4603 = vpack.c.b16 %v4587, %v4586
      %4604 = vrot.lane.b32.xlu0 %v4588, 16
      %v4605 = vpop.permute.xlu0 %4604
      %4606 = vrot.lane.b32.xlu0 %v4589, 16
      %v4607 = vpop.permute.xlu0 %4606
      %4608 = vrot.lane.b32.xlu0 %v4590, 16
      %v4609 = vpop.permute.xlu0 %4608
      %4610 = vrot.lane.b32.xlu0 %v4591, 16
      %v4611 = vpop.permute.xlu0 %4610
      %4612 = vrot.lane.b32.xlu0 %v4592, 16
      %v4613 = vpop.permute.xlu0 %4612
      %4614 = vrot.lane.b32.xlu0 %v4593, 16
      %v4615 = vpop.permute.xlu0 %4614
      %4616 = vrot.lane.b32.xlu0 %v4594, 16
      %v4617 = vpop.permute.xlu0 %4616
      %4618 = vrot.lane.b32.xlu0 %v4595, 16
      %v4619 = vpop.permute.xlu0 %4618
      %4620 = vrot.lane.b32.xlu0 %v4596, 16
      %v4621 = vpop.permute.xlu0 %4620
      %4622 = vrot.lane.b32.xlu0 %v4597, 16
      %v4623 = vpop.permute.xlu0 %4622
      %4624 = vrot.lane.b32.xlu0 %v4598, 16
      %v4625 = vpop.permute.xlu0 %4624
      %4626 = vrot.lane.b32.xlu0 %v4599, 16
      %v4627 = vpop.permute.xlu0 %4626
      %4628 = vrot.lane.b32.xlu0 %v4600, 16
      %v4629 = vpop.permute.xlu0 %4628
      %4630 = vrot.lane.b32.xlu0 %v4601, 16
      %v4631 = vpop.permute.xlu0 %4630
      %4632 = vrot.lane.b32.xlu0 %v4602, 16
      %v4633 = vpop.permute.xlu0 %4632
      %4634 = vrot.lane.b32.xlu0 %v4603, 16
      %v4635 = vpop.permute.xlu0 %4634
      %v4638 = vsel %vm1628, %v4396, %v4493
      %v4641 = vsel %vm1628, %v4397, %v4495
      %v4644 = vsel %vm1628, %v4398, %v4497
      %v4647 = vsel %vm1628, %v4399, %v4499
      %v4650 = vsel %vm1628, %v4400, %v4501
      %v4653 = vsel %vm1628, %v4401, %v4503
      %v4656 = vsel %vm1628, %v4402, %v4505
      %v4659 = vsel %vm1628, %v4403, %v4507
      %v4662 = vsel %vm1628, %v4404, %v4509
      %v4665 = vsel %vm1628, %v4405, %v4511
      %v4668 = vsel %vm1628, %v4406, %v4513
      %v4671 = vsel %vm1628, %v4407, %v4515
      %v4674 = vsel %vm1628, %v4408, %v4517
      %v4677 = vsel %vm1628, %v4409, %v4519
      %v4680 = vsel %vm1628, %v4410, %v4521
      %v4683 = vsel %vm1628, %v4411, %v4523
      %v4685 = vsel %vm1677, %v4638, %v4605
      %v4687 = vsel %vm1677, %v4641, %v4607
      %v4689 = vsel %vm1677, %v4644, %v4609
      %v4691 = vsel %vm1677, %v4647, %v4611
      %v4693 = vsel %vm1677, %v4650, %v4613
      %v4695 = vsel %vm1677, %v4653, %v4615
      %v4697 = vsel %vm1677, %v4656, %v4617
      %v4699 = vsel %vm1677, %v4659, %v4619
      %v4701 = vsel %vm1677, %v4662, %v4621
      %v4703 = vsel %vm1677, %v4665, %v4623
      %v4705 = vsel %vm1677, %v4668, %v4625
      %v4707 = vsel %vm1677, %v4671, %v4627
      %v4709 = vsel %vm1677, %v4674, %v4629
      %v4711 = vsel %vm1677, %v4677, %v4631
      %v4713 = vsel %vm1677, %v4680, %v4633
      %v4715 = vsel %vm1677, %v4683, %v4635
      %v4716 = vld [vmem:[%s3] sm:$0xf]
      %v4717 = vld [vmem:[%s3 + $0x4] sm:$0xf]
      %v4718 = vld [vmem:[%s3 + $0x8] sm:$0xf]
      %v4719 = vld [vmem:[%s250] sm:$0xf]
      %v4720 = vld [vmem:[%s250 + $0x4] sm:$0xf]
      %v4721 = vld [vmem:[%s250 + $0xc] sm:$0xf]
      %v4722 = vld [vmem:[%s250 + $0x10] sm:$0xf]
      %v4723 = vld [vmem:[%s250 + $0x18] sm:$0xf]
      %v4724 = vld [vmem:[%s250 + $0x1c] sm:$0xf]
      %v4725 = vld [vmem:[%s250 + $0x24] sm:$0xf]
      %v4726 = vld [vmem:[%s250 + $0x28] sm:$0xf]
      %v4727 = vld [vmem:[%s250 + $0x30] sm:$0xf]
      %v4728 = vld [vmem:[%s250 + $0x34] sm:$0xf]
      %v4729 = vld [vmem:[%s250 + $0x3c] sm:$0xf]
      %v4730 = vld [vmem:[%s250 + $0x40] sm:$0xf]
      %v4731 = vld [vmem:[%s250 + $0x48] sm:$0xf]
      %v4732 = vld [vmem:[%s250 + $0x4c] sm:$0xf]
      %v4733 = vld [vmem:[%s250 + $0x54] sm:$0xf]
      %v4734 = vld [vmem:[%s250 + $0x58] sm:$0xf]
      %v4735 = vld [vmem:[%s250 + $0x60] sm:$0xf]
      %v4736 = vld [vmem:[%s250 + $0x64] sm:$0xf]
      %v4737 = vld [vmem:[%s250 + $0x6c] sm:$0xf]
      %v4738 = vld [vmem:[%s250 + $0x70] sm:$0xf]
      %v4739 = vld [vmem:[%s250 + $0x78] sm:$0xf]
      %v4740 = vld [vmem:[%s250 + $0x7c] sm:$0xf]
      %v4741 = vld [vmem:[%s250 + $0x84] sm:$0xf]
      %v4742 = vld [vmem:[%s250 + $0x88] sm:$0xf]
      %v4743 = vld [vmem:[%s250 + $0x90] sm:$0xf]
      %v4744 = vld [vmem:[%s250 + $0x94] sm:$0xf]
      %v4745 = vld [vmem:[%s250 + $0x9c] sm:$0xf]
      %v4746 = vld [vmem:[%s250 + $0xa0] sm:$0xf]
      %v4747 = vld [vmem:[%s250 + $0xa8] sm:$0xf]
      %v4748 = vld [vmem:[%s250 + $0xac] sm:$0xf]
      %v4749 = vld [vmem:[%s250 + $0xb4] sm:$0xf]
      %v4750 = vld [vmem:[%s250 + $0xb8] sm:$0xf]
      %v4751 = vld [vmem:[%s951] sm:$0xf]
      %v4752 = vld [vmem:[%s951 + $0x4] sm:$0xf]
      %v4753 = vld [vmem:[%s951 + $0xc] sm:$0xf]
      %v4754 = vld [vmem:[%s951 + $0x10] sm:$0xf]
      %v4755 = vld [vmem:[%s951 + $0x18] sm:$0xf]
      %v4756 = vld [vmem:[%s951 + $0x1c] sm:$0xf]
      %v4757 = vld [vmem:[%s951 + $0x24] sm:$0xf]
      %v4758 = vld [vmem:[%s951 + $0x28] sm:$0xf]
      %v4759 = vld [vmem:[%s951 + $0x30] sm:$0xf]
      %v4760 = vld [vmem:[%s951 + $0x34] sm:$0xf]
      %v4761 = vld [vmem:[%s951 + $0x3c] sm:$0xf]
      %v4762 = vld [vmem:[%s951 + $0x40] sm:$0xf]
      %v4763 = vld [vmem:[%s951 + $0x48] sm:$0xf]
      %v4764 = vld [vmem:[%s951 + $0x4c] sm:$0xf]
      %v4765 = vld [vmem:[%s951 + $0x54] sm:$0xf]
      %v4766 = vld [vmem:[%s951 + $0x58] sm:$0xf]
      %v4767 = vld [vmem:[%s951 + $0x60] sm:$0xf]
      %v4768 = vld [vmem:[%s951 + $0x64] sm:$0xf]
      %v4769 = vld [vmem:[%s951 + $0x6c] sm:$0xf]
      %v4770 = vld [vmem:[%s951 + $0x70] sm:$0xf]
      %v4771 = vld [vmem:[%s951 + $0x78] sm:$0xf]
      %v4772 = vld [vmem:[%s951 + $0x7c] sm:$0xf]
      %v4773 = vld [vmem:[%s951 + $0x84] sm:$0xf]
      %v4774 = vld [vmem:[%s951 + $0x88] sm:$0xf]
      %v4775 = vld [vmem:[%s951 + $0x90] sm:$0xf]
      %v4776 = vld [vmem:[%s951 + $0x94] sm:$0xf]
      %v4777 = vld [vmem:[%s951 + $0x9c] sm:$0xf]
      %v4778 = vld [vmem:[%s951 + $0xa0] sm:$0xf]
      %v4779 = vld [vmem:[%s951 + $0xa8] sm:$0xf]
      %v4780 = vld [vmem:[%s951 + $0xac] sm:$0xf]
      %v4781 = vld [vmem:[%s951 + $0xb4] sm:$0xf]
      %v4782 = vld [vmem:[%s951 + $0xb8] sm:$0xf]
      %v4783 = vld [vmem:[%s302] sm:$0xf]
      %v4784 = vld [vmem:[%s302 + $0x4] sm:$0xf]
      %v4785 = vld [vmem:[%s302 + $0xc] sm:$0xf]
      %v4786 = vld [vmem:[%s302 + $0x10] sm:$0xf]
      %v4787 = vld [vmem:[%s302 + $0x18] sm:$0xf]
      %v4788 = vld [vmem:[%s302 + $0x1c] sm:$0xf]
      %v4789 = vld [vmem:[%s302 + $0x24] sm:$0xf]
      %v4790 = vld [vmem:[%s302 + $0x28] sm:$0xf]
      %v4791 = vld [vmem:[%s302 + $0x30] sm:$0xf]
      %v4792 = vld [vmem:[%s302 + $0x34] sm:$0xf]
      %v4793 = vld [vmem:[%s302 + $0x3c] sm:$0xf]
      %v4794 = vld [vmem:[%s302 + $0x40] sm:$0xf]
      %v4795 = vld [vmem:[%s302 + $0x48] sm:$0xf]
      %v4796 = vld [vmem:[%s302 + $0x4c] sm:$0xf]
      %v4797 = vld [vmem:[%s302 + $0x54] sm:$0xf]
      %v4798 = vld [vmem:[%s302 + $0x58] sm:$0xf]
      %v4799 = vld [vmem:[%s302 + $0x60] sm:$0xf]
      %v4800 = vld [vmem:[%s302 + $0x64] sm:$0xf]
      %v4801 = vld [vmem:[%s302 + $0x6c] sm:$0xf]
      %v4802 = vld [vmem:[%s302 + $0x70] sm:$0xf]
      %v4803 = vld [vmem:[%s302 + $0x78] sm:$0xf]
      %v4804 = vld [vmem:[%s302 + $0x7c] sm:$0xf]
      %v4805 = vld [vmem:[%s302 + $0x84] sm:$0xf]
      %v4806 = vld [vmem:[%s302 + $0x88] sm:$0xf]
      %v4807 = vld [vmem:[%s302 + $0x90] sm:$0xf]
      %v4808 = vld [vmem:[%s302 + $0x94] sm:$0xf]
      %v4809 = vld [vmem:[%s302 + $0x9c] sm:$0xf]
      %v4810 = vld [vmem:[%s302 + $0xa0] sm:$0xf]
      %v4811 = vld [vmem:[%s302 + $0xa8] sm:$0xf]
      %v4812 = vld [vmem:[%s302 + $0xac] sm:$0xf]
      %v4813 = vld [vmem:[%s302 + $0xb4] sm:$0xf]
      %v4814 = vld [vmem:[%s302 + $0xb8] sm:$0xf]
      %v4847 = vunpack.c.l.b16 %v4719
      %v4848 = vunpack.c.l.b16 %v4720
      %v4849 = vunpack.c.l.b16 %v4721
      %v4850 = vunpack.c.l.b16 %v4722
      %v4851 = vunpack.c.l.b16 %v4723
      %v4852 = vunpack.c.l.b16 %v4724
      %v4853 = vunpack.c.l.b16 %v4725
      %v4854 = vunpack.c.l.b16 %v4726
      %v4855 = vunpack.c.l.b16 %v4727
      %v4856 = vunpack.c.l.b16 %v4728
      %v4857 = vunpack.c.l.b16 %v4729
      %v4858 = vunpack.c.l.b16 %v4730
      %v4859 = vunpack.c.l.b16 %v4731
      %v4860 = vunpack.c.l.b16 %v4732
      %v4861 = vunpack.c.l.b16 %v4733
      %v4862 = vunpack.c.l.b16 %v4734
      %v4863 = vunpack.c.l.b16 %v4735
      %v4864 = vunpack.c.l.b16 %v4736
      %v4865 = vunpack.c.l.b16 %v4737
      %v4866 = vunpack.c.l.b16 %v4738
      %v4867 = vunpack.c.l.b16 %v4739
      %v4868 = vunpack.c.l.b16 %v4740
      %v4869 = vunpack.c.l.b16 %v4741
      %v4870 = vunpack.c.l.b16 %v4742
      %v4871 = vunpack.c.l.b16 %v4743
      %v4872 = vunpack.c.l.b16 %v4744
      %v4873 = vunpack.c.l.b16 %v4745
      %v4874 = vunpack.c.l.b16 %v4746
      %v4875 = vunpack.c.l.b16 %v4747
      %v4876 = vunpack.c.l.b16 %v4748
      %v4877 = vunpack.c.l.b16 %v4749
      %v4878 = vunpack.c.l.b16 %v4750
      %v4879 = vpack.c.b16 %v4848, %v4847
      %v4880 = vpack.c.b16 %v4850, %v4849
      %v4881 = vpack.c.b16 %v4852, %v4851
      %v4882 = vpack.c.b16 %v4854, %v4853
      %v4883 = vpack.c.b16 %v4856, %v4855
      %v4884 = vpack.c.b16 %v4858, %v4857
      %v4885 = vpack.c.b16 %v4860, %v4859
      %v4886 = vpack.c.b16 %v4862, %v4861
      %v4887 = vpack.c.b16 %v4864, %v4863
      %v4888 = vpack.c.b16 %v4866, %v4865
      %v4889 = vpack.c.b16 %v4868, %v4867
      %v4890 = vpack.c.b16 %v4870, %v4869
      %v4891 = vpack.c.b16 %v4872, %v4871
      %v4892 = vpack.c.b16 %v4874, %v4873
      %v4893 = vpack.c.b16 %v4876, %v4875
      %v4894 = vpack.c.b16 %v4878, %v4877
      %v4927 = vunpack.c.l.b16 %v4751
      %v4928 = vunpack.c.l.b16 %v4752
      %v4929 = vunpack.c.l.b16 %v4753
      %v4930 = vunpack.c.l.b16 %v4754
      %v4931 = vunpack.c.l.b16 %v4755
      %v4932 = vunpack.c.l.b16 %v4756
      %v4933 = vunpack.c.l.b16 %v4757
      %v4934 = vunpack.c.l.b16 %v4758
      %v4935 = vunpack.c.l.b16 %v4759
      %v4936 = vunpack.c.l.b16 %v4760
      %v4937 = vunpack.c.l.b16 %v4761
      %v4938 = vunpack.c.l.b16 %v4762
      %v4939 = vunpack.c.l.b16 %v4763
      %v4940 = vunpack.c.l.b16 %v4764
      %v4941 = vunpack.c.l.b16 %v4765
      %v4942 = vunpack.c.l.b16 %v4766
      %v4943 = vunpack.c.l.b16 %v4767
      %v4944 = vunpack.c.l.b16 %v4768
      %v4945 = vunpack.c.l.b16 %v4769
      %v4946 = vunpack.c.l.b16 %v4770
      %v4947 = vunpack.c.l.b16 %v4771
      %v4948 = vunpack.c.l.b16 %v4772
      %v4949 = vunpack.c.l.b16 %v4773
      %v4950 = vunpack.c.l.b16 %v4774
      %v4951 = vunpack.c.l.b16 %v4775
      %v4952 = vunpack.c.l.b16 %v4776
      %v4953 = vunpack.c.l.b16 %v4777
      %v4954 = vunpack.c.l.b16 %v4778
      %v4955 = vunpack.c.l.b16 %v4779
      %v4956 = vunpack.c.l.b16 %v4780
      %v4957 = vunpack.c.l.b16 %v4781
      %v4958 = vunpack.c.l.b16 %v4782
      %v4959 = vpack.c.b16 %v4928, %v4927
      %v4960 = vpack.c.b16 %v4930, %v4929
      %v4961 = vpack.c.b16 %v4932, %v4931
      %v4962 = vpack.c.b16 %v4934, %v4933
      %v4963 = vpack.c.b16 %v4936, %v4935
      %v4964 = vpack.c.b16 %v4938, %v4937
      %v4965 = vpack.c.b16 %v4940, %v4939
      %v4966 = vpack.c.b16 %v4942, %v4941
      %v4967 = vpack.c.b16 %v4944, %v4943
      %v4968 = vpack.c.b16 %v4946, %v4945
      %v4969 = vpack.c.b16 %v4948, %v4947
      %v4970 = vpack.c.b16 %v4950, %v4949
      %v4971 = vpack.c.b16 %v4952, %v4951
      %v4972 = vpack.c.b16 %v4954, %v4953
      %v4973 = vpack.c.b16 %v4956, %v4955
      %v4974 = vpack.c.b16 %v4958, %v4957
      %4975 = vrot.lane.b32.xlu0 %v4959, 8
      %v4976 = vpop.permute.xlu0 %4975
      %4977 = vrot.lane.b32.xlu0 %v4960, 8
      %v4978 = vpop.permute.xlu0 %4977
      %4979 = vrot.lane.b32.xlu0 %v4961, 8
      %v4980 = vpop.permute.xlu0 %4979
      %4981 = vrot.lane.b32.xlu0 %v4962, 8
      %v4982 = vpop.permute.xlu0 %4981
      %4983 = vrot.lane.b32.xlu0 %v4963, 8
      %v4984 = vpop.permute.xlu0 %4983
      %4985 = vrot.lane.b32.xlu0 %v4964, 8
      %v4986 = vpop.permute.xlu0 %4985
      %4987 = vrot.lane.b32.xlu0 %v4965, 8
      %v4988 = vpop.permute.xlu0 %4987
      %4989 = vrot.lane.b32.xlu0 %v4966, 8
      %v4990 = vpop.permute.xlu0 %4989
      %4991 = vrot.lane.b32.xlu0 %v4967, 8
      %v4992 = vpop.permute.xlu0 %4991
      %4993 = vrot.lane.b32.xlu0 %v4968, 8
      %v4994 = vpop.permute.xlu0 %4993
      %4995 = vrot.lane.b32.xlu0 %v4969, 8
      %v4996 = vpop.permute.xlu0 %4995
      %4997 = vrot.lane.b32.xlu0 %v4970, 8
      %v4998 = vpop.permute.xlu0 %4997
      %4999 = vrot.lane.b32.xlu0 %v4971, 8
      %v5000 = vpop.permute.xlu0 %4999
      %5001 = vrot.lane.b32.xlu0 %v4972, 8
      %v5002 = vpop.permute.xlu0 %5001
      %5003 = vrot.lane.b32.xlu0 %v4973, 8
      %v5004 = vpop.permute.xlu0 %5003
      %5005 = vrot.lane.b32.xlu0 %v4974, 8
      %v5006 = vpop.permute.xlu0 %5005
      %v5039 = vunpack.c.l.b16 %v4783
      %v5040 = vunpack.c.l.b16 %v4784
      %v5041 = vunpack.c.l.b16 %v4785
      %v5042 = vunpack.c.l.b16 %v4786
      %v5043 = vunpack.c.l.b16 %v4787
      %v5044 = vunpack.c.l.b16 %v4788
      %v5045 = vunpack.c.l.b16 %v4789
      %v5046 = vunpack.c.l.b16 %v4790
      %v5047 = vunpack.c.l.b16 %v4791
      %v5048 = vunpack.c.l.b16 %v4792
      %v5049 = vunpack.c.l.b16 %v4793
      %v5050 = vunpack.c.l.b16 %v4794
      %v5051 = vunpack.c.l.b16 %v4795
      %v5052 = vunpack.c.l.b16 %v4796
      %v5053 = vunpack.c.l.b16 %v4797
      %v5054 = vunpack.c.l.b16 %v4798
      %v5055 = vunpack.c.l.b16 %v4799
      %v5056 = vunpack.c.l.b16 %v4800
      %v5057 = vunpack.c.l.b16 %v4801
      %v5058 = vunpack.c.l.b16 %v4802
      %v5059 = vunpack.c.l.b16 %v4803
      %v5060 = vunpack.c.l.b16 %v4804
      %v5061 = vunpack.c.l.b16 %v4805
      %v5062 = vunpack.c.l.b16 %v4806
      %v5063 = vunpack.c.l.b16 %v4807
      %v5064 = vunpack.c.l.b16 %v4808
      %v5065 = vunpack.c.l.b16 %v4809
      %v5066 = vunpack.c.l.b16 %v4810
      %v5067 = vunpack.c.l.b16 %v4811
      %v5068 = vunpack.c.l.b16 %v4812
      %v5069 = vunpack.c.l.b16 %v4813
      %v5070 = vunpack.c.l.b16 %v4814
      %v5071 = vpack.c.b16 %v5040, %v5039
      %v5072 = vpack.c.b16 %v5042, %v5041
      %v5073 = vpack.c.b16 %v5044, %v5043
      %v5074 = vpack.c.b16 %v5046, %v5045
      %v5075 = vpack.c.b16 %v5048, %v5047
      %v5076 = vpack.c.b16 %v5050, %v5049
      %v5077 = vpack.c.b16 %v5052, %v5051
      %v5078 = vpack.c.b16 %v5054, %v5053
      %v5079 = vpack.c.b16 %v5056, %v5055
      %v5080 = vpack.c.b16 %v5058, %v5057
      %v5081 = vpack.c.b16 %v5060, %v5059
      %v5082 = vpack.c.b16 %v5062, %v5061
      %v5083 = vpack.c.b16 %v5064, %v5063
      %v5084 = vpack.c.b16 %v5066, %v5065
      %v5085 = vpack.c.b16 %v5068, %v5067
      %v5086 = vpack.c.b16 %v5070, %v5069
      %5087 = vrot.lane.b32.xlu0 %v5071, 16
      %v5088 = vpop.permute.xlu0 %5087
      %5089 = vrot.lane.b32.xlu0 %v5072, 16
      %v5090 = vpop.permute.xlu0 %5089
      %5091 = vrot.lane.b32.xlu0 %v5073, 16
      %v5092 = vpop.permute.xlu0 %5091
      %5093 = vrot.lane.b32.xlu0 %v5074, 16
      %v5094 = vpop.permute.xlu0 %5093
      %5095 = vrot.lane.b32.xlu0 %v5075, 16
      %v5096 = vpop.permute.xlu0 %5095
      %5097 = vrot.lane.b32.xlu0 %v5076, 16
      %v5098 = vpop.permute.xlu0 %5097
      %5099 = vrot.lane.b32.xlu0 %v5077, 16
      %v5100 = vpop.permute.xlu0 %5099
      %5101 = vrot.lane.b32.xlu0 %v5078, 16
      %v5102 = vpop.permute.xlu0 %5101
      %5103 = vrot.lane.b32.xlu0 %v5079, 16
      %v5104 = vpop.permute.xlu0 %5103
      %5105 = vrot.lane.b32.xlu0 %v5080, 16
      %v5106 = vpop.permute.xlu0 %5105
      %5107 = vrot.lane.b32.xlu0 %v5081, 16
      %v5108 = vpop.permute.xlu0 %5107
      %5109 = vrot.lane.b32.xlu0 %v5082, 16
      %v5110 = vpop.permute.xlu0 %5109
      %5111 = vrot.lane.b32.xlu0 %v5083, 16
      %v5112 = vpop.permute.xlu0 %5111
      %5113 = vrot.lane.b32.xlu0 %v5084, 16
      %v5114 = vpop.permute.xlu0 %5113
      %5115 = vrot.lane.b32.xlu0 %v5085, 16
      %v5116 = vpop.permute.xlu0 %5115
      %5117 = vrot.lane.b32.xlu0 %v5086, 16
      %v5118 = vpop.permute.xlu0 %5117
      %v5121 = vsel %vm1628, %v4879, %v4976
      %v5124 = vsel %vm1628, %v4880, %v4978
      %v5127 = vsel %vm1628, %v4881, %v4980
      %v5130 = vsel %vm1628, %v4882, %v4982
      %v5133 = vsel %vm1628, %v4883, %v4984
      %v5136 = vsel %vm1628, %v4884, %v4986
      %v5139 = vsel %vm1628, %v4885, %v4988
      %v5142 = vsel %vm1628, %v4886, %v4990
      %v5145 = vsel %vm1628, %v4887, %v4992
      %v5148 = vsel %vm1628, %v4888, %v4994
      %v5151 = vsel %vm1628, %v4889, %v4996
      %v5154 = vsel %vm1628, %v4890, %v4998
      %v5157 = vsel %vm1628, %v4891, %v5000
      %v5160 = vsel %vm1628, %v4892, %v5002
      %v5163 = vsel %vm1628, %v4893, %v5004
      %v5166 = vsel %vm1628, %v4894, %v5006
      %v5168 = vsel %vm1677, %v5121, %v5088
      %v5170 = vsel %vm1677, %v5124, %v5090
      %v5172 = vsel %vm1677, %v5127, %v5092
      %v5174 = vsel %vm1677, %v5130, %v5094
      %v5176 = vsel %vm1677, %v5133, %v5096
      %v5178 = vsel %vm1677, %v5136, %v5098
      %v5180 = vsel %vm1677, %v5139, %v5100
      %v5182 = vsel %vm1677, %v5142, %v5102
      %v5184 = vsel %vm1677, %v5145, %v5104
      %v5186 = vsel %vm1677, %v5148, %v5106
      %v5188 = vsel %vm1677, %v5151, %v5108
      %v5190 = vsel %vm1677, %v5154, %v5110
      %v5192 = vsel %vm1677, %v5157, %v5112
      %v5194 = vsel %vm1677, %v5160, %v5114
      %v5196 = vsel %vm1677, %v5163, %v5116
      %v5198 = vsel %vm1677, %v5166, %v5118
      %s5199 = scalar_lea.vmem %s3, 12
      %v5200 = vld [vmem:[%s5199] sm:$0xf]
      %v5201 = vld [vmem:[%s5199 + $0x4] sm:$0xf]
      %v5202 = vld [vmem:[%s5199 + $0x8] sm:$0xf]
      %v5206 = vunpack.c.l.b16 %v5200
      %v5207 = vunpack.c.l.b16 %v5201
      %v5208 = vunpack.c.l.b16 %v5202
      %v5209 = vpack.c.b16 %v5207, %v5206
      %v5210 = vpack.c.b16 %v5208, %v5208
      %v5212 = vsel %vm2206, %v5168, 0
      %v5214 = vsel %vm2206, %v5170, 0
      %v5216 = vsel %vm2206, %v5172, 0
      %v5218 = vsel %vm2206, %v5174, 0
      %v5220 = vsel %vm2206, %v5176, 0
      %v5222 = vsel %vm2206, %v5178, 0
      %v5224 = vsel %vm2206, %v5180, 0
      %v5226 = vsel %vm2206, %v5182, 0
      %v5228 = vsel %vm2206, %v5184, 0
      %v5230 = vsel %vm2206, %v5186, 0
      %v5232 = vsel %vm2206, %v5188, 0
      %v5234 = vsel %vm2206, %v5190, 0
      %v5236 = vsel %vm2206, %v5192, 0
      %v5238 = vsel %vm2206, %v5194, 0
      %v5240 = vsel %vm2206, %v5196, 0
      %v5242 = vsel %vm2206, %v5198, 0
      %v5245 = vsel %vm2239, %v5210, 0
      %5247 = vmatprep.subr.bf16.mxu0 0
      %5248 = vmatpush1.bf16.msra.mxu0 %v5209
      %5249 = vmatprep.subr.bf16.mxu0 0
      %5250 = vmatpush1.bf16.msra.mxu0 %v5245
      %5251 = vmatprep.subr.bf16.mxu0 0
      %5252 = vmatpush1.bf16.msra.mxu0 0
      %5253 = vmatprep.subr.bf16.mxu0 0
      %5254 = vmatpush1.bf16.msra.mxu0 0
      %5255 = vmatprep.subr.bf16.mxu0 0
      %5256 = vmatpush1.bf16.msra.mxu0 0
      %5257 = vmatprep.subr.bf16.mxu0 0
      %5258 = vmatpush1.bf16.msra.mxu0 0
      %5259 = vmatprep.subr.bf16.mxu0 0
      %5260 = vmatpush1.bf16.msra.mxu0 0
      %5261 = vmatprep.subr.bf16.mxu0 0
      %5262 = vmatpush1.bf16.msra.mxu0 0
      %5263 = vmatprep.subr.bf16.mxu0 0
      %5264 = vmatpush1.bf16.msra.mxu0 0
      %5265 = vmatprep.subr.bf16.mxu0 0
      %5266 = vmatpush1.bf16.msra.mxu0 0
      %5267 = vmatprep.subr.bf16.mxu0 0
      %5268 = vmatpush1.bf16.msra.mxu0 0
      %5269 = vmatprep.subr.bf16.mxu0 0
      %5270 = vmatpush1.bf16.msra.mxu0 0
      %5271 = vmatprep.subr.bf16.mxu0 0
      %5272 = vmatpush1.bf16.msra.mxu0 0
      %5273 = vmatprep.subr.bf16.mxu0 0
      %5274 = vmatpush1.bf16.msra.mxu0 0
      %5275 = vmatprep.subr.bf16.mxu0 0
      %5276 = vmatpush1.bf16.msra.mxu0 0
      %5277 = vmatprep.subr.bf16.mxu0 0
      %5278 = vmatpush1.bf16.msra.mxu0 0
      %5279 = vmatprep.mubr.bf16.mxu0 0
      %5280 = vmatmul.mubr.bf16.gmra.mrb[0].mxu0 %v5212
      %v5281 = vpop.f32.mrb[0].mxu0
      %v5282 = vadd.f32 0.0, %v5281
      %v5283 = vpop.f32.mrb[0].mxu0
      %v5284 = vpop.f32.mrb[0].mxu0
      %v5285 = vadd.f32 0.0, %v5284
      %v5286 = vpop.f32.mrb[0].mxu0
      %5287 = vmatprep.mubr.bf16.mxu0 0
      %5288 = vmatmul.mubr.bf16.gmra.mrb[0].mxu0 %v5214
      %v5289 = vpop.f32.mrb[0].mxu0
      %v5290 = vadd.f32 0.0, %v5289
      %v5291 = vpop.f32.mrb[0].mxu0
      %v5292 = vpop.f32.mrb[0].mxu0
      %v5293 = vadd.f32 0.0, %v5292
      %v5294 = vpop.f32.mrb[0].mxu0
      %5295 = vmatprep.mubr.bf16.mxu0 0
      %5296 = vmatmul.mubr.bf16.gmra.mrb[0].mxu0 %v5216
      %v5297 = vpop.f32.mrb[0].mxu0
      %v5298 = vadd.f32 0.0, %v5297
      %v5299 = vpop.f32.mrb[0].mxu0
      %v5300 = vpop.f32.mrb[0].mxu0
      %v5301 = vadd.f32 0.0, %v5300
      %v5302 = vpop.f32.mrb[0].mxu0
      %5303 = vmatprep.mubr.bf16.mxu0 0
      %5304 = vmatmul.mubr.bf16.gmra.mrb[0].mxu0 %v5218
      %v5305 = vpop.f32.mrb[0].mxu0
      %v5306 = vadd.f32 0.0, %v5305
      %v5307 = vpop.f32.mrb[0].mxu0
      %v5308 = vpop.f32.mrb[0].mxu0
      %v5309 = vadd.f32 0.0, %v5308
      %v5310 = vpop.f32.mrb[0].mxu0
      %5311 = vmatprep.mubr.bf16.mxu0 0
      %5312 = vmatmul.mubr.bf16.gmra.mrb[0].mxu0 %v5220
      %v5313 = vpop.f32.mrb[0].mxu0
      %v5314 = vadd.f32 0.0, %v5313
      %v5315 = vpop.f32.mrb[0].mxu0
      %v5316 = vpop.f32.mrb[0].mxu0
      %v5317 = vadd.f32 0.0, %v5316
      %v5318 = vpop.f32.mrb[0].mxu0
      %5319 = vmatprep.mubr.bf16.mxu0 0
      %5320 = vmatmul.mubr.bf16.gmra.mrb[0].mxu0 %v5222
      %v5321 = vpop.f32.mrb[0].mxu0
      %v5322 = vadd.f32 0.0, %v5321
      %v5323 = vpop.f32.mrb[0].mxu0
      %v5324 = vpop.f32.mrb[0].mxu0
      %v5325 = vadd.f32 0.0, %v5324
      %v5326 = vpop.f32.mrb[0].mxu0
      %5327 = vmatprep.mubr.bf16.mxu0 0
      %5328 = vmatmul.mubr.bf16.gmra.mrb[0].mxu0 %v5224
      %v5329 = vpop.f32.mrb[0].mxu0
      %v5330 = vadd.f32 0.0, %v5329
      %v5331 = vpop.f32.mrb[0].mxu0
      %v5332 = vpop.f32.mrb[0].mxu0
      %v5333 = vadd.f32 0.0, %v5332
      %v5334 = vpop.f32.mrb[0].mxu0
      %5335 = vmatprep.mubr.bf16.mxu0 0
      %5336 = vmatmul.mubr.bf16.gmra.mrb[0].mxu0 %v5226
      %v5337 = vpop.f32.mrb[0].mxu0
      %v5338 = vadd.f32 0.0, %v5337
      %v5339 = vpop.f32.mrb[0].mxu0
      %v5340 = vpop.f32.mrb[0].mxu0
      %v5341 = vadd.f32 0.0, %v5340
      %v5342 = vpop.f32.mrb[0].mxu0
      %5343 = vmatprep.mubr.bf16.mxu0 0
      %5344 = vmatmul.mubr.bf16.gmra.mrb[0].mxu0 %v5228
      %v5345 = vpop.f32.mrb[0].mxu0
      %v5346 = vadd.f32 0.0, %v5345
      %v5347 = vpop.f32.mrb[0].mxu0
      %v5348 = vpop.f32.mrb[0].mxu0
      %v5349 = vadd.f32 0.0, %v5348
      %v5350 = vpop.f32.mrb[0].mxu0
      %5351 = vmatprep.mubr.bf16.mxu0 0
      %5352 = vmatmul.mubr.bf16.gmra.mrb[0].mxu0 %v5230
      %v5353 = vpop.f32.mrb[0].mxu0
      %v5354 = vadd.f32 0.0, %v5353
      %v5355 = vpop.f32.mrb[0].mxu0
      %v5356 = vpop.f32.mrb[0].mxu0
      %v5357 = vadd.f32 0.0, %v5356
      %v5358 = vpop.f32.mrb[0].mxu0
      %5359 = vmatprep.mubr.bf16.mxu0 0
      %5360 = vmatmul.mubr.bf16.gmra.mrb[0].mxu0 %v5232
      %v5361 = vpop.f32.mrb[0].mxu0
      %v5362 = vadd.f32 0.0, %v5361
      %v5363 = vpop.f32.mrb[0].mxu0
      %v5364 = vpop.f32.mrb[0].mxu0
      %v5365 = vadd.f32 0.0, %v5364
      %v5366 = vpop.f32.mrb[0].mxu0
      %5367 = vmatprep.mubr.bf16.mxu0 0
      %5368 = vmatmul.mubr.bf16.gmra.mrb[0].mxu0 %v5234
      %v5369 = vpop.f32.mrb[0].mxu0
      %v5370 = vadd.f32 0.0, %v5369
      %v5371 = vpop.f32.mrb[0].mxu0
      %v5372 = vpop.f32.mrb[0].mxu0
      %v5373 = vadd.f32 0.0, %v5372
      %v5374 = vpop.f32.mrb[0].mxu0
      %5375 = vmatprep.mubr.bf16.mxu0 0
      %5376 = vmatmul.mubr.bf16.gmra.mrb[0].mxu0 %v5236
      %v5377 = vpop.f32.mrb[0].mxu0
      %v5378 = vadd.f32 0.0, %v5377
      %v5379 = vpop.f32.mrb[0].mxu0
      %v5380 = vpop.f32.mrb[0].mxu0
      %v5381 = vadd.f32 0.0, %v5380
      %v5382 = vpop.f32.mrb[0].mxu0
      %5383 = vmatprep.mubr.bf16.mxu0 0
      %5384 = vmatmul.mubr.bf16.gmra.mrb[0].mxu0 %v5238
      %v5385 = vpop.f32.mrb[0].mxu0
      %v5386 = vadd.f32 0.0, %v5385
      %v5387 = vpop.f32.mrb[0].mxu0
      %v5388 = vpop.f32.mrb[0].mxu0
      %v5389 = vadd.f32 0.0, %v5388
      %v5390 = vpop.f32.mrb[0].mxu0
      %5391 = vmatprep.mubr.bf16.mxu0 0
      %5392 = vmatmul.mubr.bf16.gmra.mrb[0].mxu0 %v5240
      %v5393 = vpop.f32.mrb[0].mxu0
      %v5394 = vadd.f32 0.0, %v5393
      %v5395 = vpop.f32.mrb[0].mxu0
      %v5396 = vpop.f32.mrb[0].mxu0
      %v5397 = vadd.f32 0.0, %v5396
      %v5398 = vpop.f32.mrb[0].mxu0
      %5399 = vmatprep.mubr.bf16.mxu0 0
      %5400 = vmatmul.mubr.bf16.gmra.mrb[0].mxu0 %v5242
      %v5401 = vpop.f32.mrb[0].mxu0
      %v5402 = vadd.f32 0.0, %v5401
      %v5403 = vpop.f32.mrb[0].mxu0
      %v5404 = vpop.f32.mrb[0].mxu0
      %v5405 = vadd.f32 0.0, %v5404
      %v5406 = vpop.f32.mrb[0].mxu0
      %5407 = vdwg.mxu0
      %v5411 = vunpack.c.l.b16 %v4716
      %v5412 = vunpack.c.l.b16 %v4717
      %v5413 = vunpack.c.l.b16 %v4718
      %v5414 = vpack.c.b16 %v5412, %v5411
      %v5415 = vpack.c.b16 %v5413, %v5413
      %v5417 = vsel %vm2206, %v4685, 0
      %v5419 = vsel %vm2206, %v4687, 0
      %v5421 = vsel %vm2206, %v4689, 0
      %v5423 = vsel %vm2206, %v4691, 0
      %v5425 = vsel %vm2206, %v4693, 0
      %v5427 = vsel %vm2206, %v4695, 0
      %v5429 = vsel %vm2206, %v4697, 0
      %v5431 = vsel %vm2206, %v4699, 0
      %v5433 = vsel %vm2206, %v4701, 0
      %v5435 = vsel %vm2206, %v4703, 0
      %v5437 = vsel %vm2206, %v4705, 0
      %v5439 = vsel %vm2206, %v4707, 0
      %v5441 = vsel %vm2206, %v4709, 0
      %v5443 = vsel %vm2206, %v4711, 0
      %v5445 = vsel %vm2206, %v4713, 0
      %v5447 = vsel %vm2206, %v4715, 0
      %v5450 = vsel %vm2239, %v5415, 0
      %5452 = vmatprep.subr.bf16.mxu0 0
      %5453 = vmatpush1.bf16.msra.mxu0 %v5414
      %5454 = vmatprep.subr.bf16.mxu0 0
      %5455 = vmatpush1.bf16.msra.mxu0 %v5450
      %5456 = vmatprep.subr.bf16.mxu0 0
      %5457 = vmatpush1.bf16.msra.mxu0 0
      %5458 = vmatprep.subr.bf16.mxu0 0
      %5459 = vmatpush1.bf16.msra.mxu0 0
      %5460 = vmatprep.subr.bf16.mxu0 0
      %5461 = vmatpush1.bf16.msra.mxu0 0
      %5462 = vmatprep.subr.bf16.mxu0 0
      %5463 = vmatpush1.bf16.msra.mxu0 0
      %5464 = vmatprep.subr.bf16.mxu0 0
      %5465 = vmatpush1.bf16.msra.mxu0 0
      %5466 = vmatprep.subr.bf16.mxu0 0
      %5467 = vmatpush1.bf16.msra.mxu0 0
      %5468 = vmatprep.subr.bf16.mxu0 0
      %5469 = vmatpush1.bf16.msra.mxu0 0
      %5470 = vmatprep.subr.bf16.mxu0 0
      %5471 = vmatpush1.bf16.msra.mxu0 0
      %5472 = vmatprep.subr.bf16.mxu0 0
      %5473 = vmatpush1.bf16.msra.mxu0 0
      %5474 = vmatprep.subr.bf16.mxu0 0
      %5475 = vmatpush1.bf16.msra.mxu0 0
      %5476 = vmatprep.subr.bf16.mxu0 0
      %5477 = vmatpush1.bf16.msra.mxu0 0
      %5478 = vmatprep.subr.bf16.mxu0 0
      %5479 = vmatpush1.bf16.msra.mxu0 0
      %5480 = vmatprep.subr.bf16.mxu0 0
      %5481 = vmatpush1.bf16.msra.mxu0 0
      %5482 = vmatprep.subr.bf16.mxu0 0
      %5483 = vmatpush1.bf16.msra.mxu0 0
      %5484 = vmatprep.mubr.bf16.mxu0 0
      %5485 = vmatmul.mubr.bf16.gmra.mrb[0].mxu0 %v5417
      %v5486 = vpop.f32.mrb[0].mxu0
      %v5487 = vadd.f32 %v5282, %v5486
      %v5488 = vpop.f32.mrb[0].mxu0
      %v5489 = vpop.f32.mrb[0].mxu0
      %v5490 = vadd.f32 %v5285, %v5489
      %v5491 = vpop.f32.mrb[0].mxu0
      %5492 = vmatprep.mubr.bf16.mxu0 0
      %5493 = vmatmul.mubr.bf16.gmra.mrb[0].mxu0 %v5419
      %v5494 = vpop.f32.mrb[0].mxu0
      %v5495 = vadd.f32 %v5290, %v5494
      %v5496 = vpop.f32.mrb[0].mxu0
      %v5497 = vpop.f32.mrb[0].mxu0
      %v5498 = vadd.f32 %v5293, %v5497
      %v5499 = vpop.f32.mrb[0].mxu0
      %5500 = vmatprep.mubr.bf16.mxu0 0
      %5501 = vmatmul.mubr.bf16.gmra.mrb[0].mxu0 %v5421
      %v5502 = vpop.f32.mrb[0].mxu0
      %v5503 = vadd.f32 %v5298, %v5502
      %v5504 = vpop.f32.mrb[0].mxu0
      %v5505 = vpop.f32.mrb[0].mxu0
      %v5506 = vadd.f32 %v5301, %v5505
      %v5507 = vpop.f32.mrb[0].mxu0
      %5508 = vmatprep.mubr.bf16.mxu0 0
      %5509 = vmatmul.mubr.bf16.gmra.mrb[0].mxu0 %v5423
      %v5510 = vpop.f32.mrb[0].mxu0
      %v5511 = vadd.f32 %v5306, %v5510
      %v5512 = vpop.f32.mrb[0].mxu0
      %v5513 = vpop.f32.mrb[0].mxu0
      %v5514 = vadd.f32 %v5309, %v5513
      %v5515 = vpop.f32.mrb[0].mxu0
      %5516 = vmatprep.mubr.bf16.mxu0 0
      %5517 = vmatmul.mubr.bf16.gmra.mrb[0].mxu0 %v5425
      %v5518 = vpop.f32.mrb[0].mxu0
      %v5519 = vadd.f32 %v5314, %v5518
      %v5520 = vpop.f32.mrb[0].mxu0
      %v5521 = vpop.f32.mrb[0].mxu0
      %v5522 = vadd.f32 %v5317, %v5521
      %v5523 = vpop.f32.mrb[0].mxu0
      %5524 = vmatprep.mubr.bf16.mxu0 0
      %5525 = vmatmul.mubr.bf16.gmra.mrb[0].mxu0 %v5427
      %v5526 = vpop.f32.mrb[0].mxu0
      %v5527 = vadd.f32 %v5322, %v5526
      %v5528 = vpop.f32.mrb[0].mxu0
      %v5529 = vpop.f32.mrb[0].mxu0
      %v5530 = vadd.f32 %v5325, %v5529
      %v5531 = vpop.f32.mrb[0].mxu0
      %5532 = vmatprep.mubr.bf16.mxu0 0
      %5533 = vmatmul.mubr.bf16.gmra.mrb[0].mxu0 %v5429
      %v5534 = vpop.f32.mrb[0].mxu0
      %v5535 = vadd.f32 %v5330, %v5534
      %v5536 = vpop.f32.mrb[0].mxu0
      %v5537 = vpop.f32.mrb[0].mxu0
      %v5538 = vadd.f32 %v5333, %v5537
      %v5539 = vpop.f32.mrb[0].mxu0
      %5540 = vmatprep.mubr.bf16.mxu0 0
      %5541 = vmatmul.mubr.bf16.gmra.mrb[0].mxu0 %v5431
      %v5542 = vpop.f32.mrb[0].mxu0
      %v5543 = vadd.f32 %v5338, %v5542
      %v5544 = vpop.f32.mrb[0].mxu0
      %v5545 = vpop.f32.mrb[0].mxu0
      %v5546 = vadd.f32 %v5341, %v5545
      %v5547 = vpop.f32.mrb[0].mxu0
      %5548 = vmatprep.mubr.bf16.mxu0 0
      %5549 = vmatmul.mubr.bf16.gmra.mrb[0].mxu0 %v5433
      %v5550 = vpop.f32.mrb[0].mxu0
      %v5551 = vadd.f32 %v5346, %v5550
      %v5552 = vpop.f32.mrb[0].mxu0
      %v5553 = vpop.f32.mrb[0].mxu0
      %v5554 = vadd.f32 %v5349, %v5553
      %v5555 = vpop.f32.mrb[0].mxu0
      %5556 = vmatprep.mubr.bf16.mxu0 0
      %5557 = vmatmul.mubr.bf16.gmra.mrb[0].mxu0 %v5435
      %v5558 = vpop.f32.mrb[0].mxu0
      %v5559 = vadd.f32 %v5354, %v5558
      %v5560 = vpop.f32.mrb[0].mxu0
      %v5561 = vpop.f32.mrb[0].mxu0
      %v5562 = vadd.f32 %v5357, %v5561
      %v5563 = vpop.f32.mrb[0].mxu0
      %5564 = vmatprep.mubr.bf16.mxu0 0
      %5565 = vmatmul.mubr.bf16.gmra.mrb[0].mxu0 %v5437
      %v5566 = vpop.f32.mrb[0].mxu0
      %v5567 = vadd.f32 %v5362, %v5566
      %v5568 = vpop.f32.mrb[0].mxu0
      %v5569 = vpop.f32.mrb[0].mxu0
      %v5570 = vadd.f32 %v5365, %v5569
      %v5571 = vpop.f32.mrb[0].mxu0
      %5572 = vmatprep.mubr.bf16.mxu0 0
      %5573 = vmatmul.mubr.bf16.gmra.mrb[0].mxu0 %v5439
      %v5574 = vpop.f32.mrb[0].mxu0
      %v5575 = vadd.f32 %v5370, %v5574
      %v5576 = vpop.f32.mrb[0].mxu0
      %v5577 = vpop.f32.mrb[0].mxu0
      %v5578 = vadd.f32 %v5373, %v5577
      %v5579 = vpop.f32.mrb[0].mxu0
      %5580 = vmatprep.mubr.bf16.mxu0 0
      %5581 = vmatmul.mubr.bf16.gmra.mrb[0].mxu0 %v5441
      %v5582 = vpop.f32.mrb[0].mxu0
      %v5583 = vadd.f32 %v5378, %v5582
      %v5584 = vpop.f32.mrb[0].mxu0
      %v5585 = vpop.f32.mrb[0].mxu0
      %v5586 = vadd.f32 %v5381, %v5585
      %v5587 = vpop.f32.mrb[0].mxu0
      %5588 = vmatprep.mubr.bf16.mxu0 0
      %5589 = vmatmul.mubr.bf16.gmra.mrb[0].mxu0 %v5443
      %v5590 = vpop.f32.mrb[0].mxu0
      %v5591 = vadd.f32 %v5386, %v5590
      %v5592 = vpop.f32.mrb[0].mxu0
      %v5593 = vpop.f32.mrb[0].mxu0
      %v5594 = vadd.f32 %v5389, %v5593
      %v5595 = vpop.f32.mrb[0].mxu0
      %5596 = vmatprep.mubr.bf16.mxu0 0
      %5597 = vmatmul.mubr.bf16.gmra.mrb[0].mxu0 %v5445
      %v5598 = vpop.f32.mrb[0].mxu0
      %v5599 = vadd.f32 %v5394, %v5598
      %v5600 = vpop.f32.mrb[0].mxu0
      %v5601 = vpop.f32.mrb[0].mxu0
      %v5602 = vadd.f32 %v5397, %v5601
      %v5603 = vpop.f32.mrb[0].mxu0
      %5604 = vmatprep.mubr.bf16.mxu0 0
      %5605 = vmatmul.mubr.bf16.gmra.mrb[0].mxu0 %v5447
      %v5606 = vpop.f32.mrb[0].mxu0
      %v5607 = vadd.f32 %v5402, %v5606
      %v5608 = vpop.f32.mrb[0].mxu0
      %v5609 = vpop.f32.mrb[0].mxu0
      %v5610 = vadd.f32 %v5405, %v5609
      %v5611 = vpop.f32.mrb[0].mxu0
      %5612 = vdwg.mxu0
      %v5613 = vld [vmem:[%s2609] sm:$0xf]
      %v5614 = vld [vmem:[%s2609 + $0x4] sm:$0xf]
      %v5615 = vld [vmem:[%s2609 + $0xc] sm:$0xf]
      %v5616 = vld [vmem:[%s2609 + $0x10] sm:$0xf]
      %v5617 = vld [vmem:[%s2609 + $0x18] sm:$0xf]
      %v5618 = vld [vmem:[%s2609 + $0x1c] sm:$0xf]
      %v5619 = vld [vmem:[%s2609 + $0x24] sm:$0xf]
      %v5620 = vld [vmem:[%s2609 + $0x28] sm:$0xf]
      %v5621 = vld [vmem:[%s2609 + $0x30] sm:$0xf]
      %v5622 = vld [vmem:[%s2609 + $0x34] sm:$0xf]
      %v5623 = vld [vmem:[%s2609 + $0x3c] sm:$0xf]
      %v5624 = vld [vmem:[%s2609 + $0x40] sm:$0xf]
      %v5625 = vld [vmem:[%s2609 + $0x48] sm:$0xf]
      %v5626 = vld [vmem:[%s2609 + $0x4c] sm:$0xf]
      %v5627 = vld [vmem:[%s2609 + $0x54] sm:$0xf]
      %v5628 = vld [vmem:[%s2609 + $0x58] sm:$0xf]
      %v5629 = vld [vmem:[%s2609 + $0x60] sm:$0xf]
      %v5630 = vld [vmem:[%s2609 + $0x64] sm:$0xf]
      %v5631 = vld [vmem:[%s2609 + $0x6c] sm:$0xf]
      %v5632 = vld [vmem:[%s2609 + $0x70] sm:$0xf]
      %v5633 = vld [vmem:[%s2609 + $0x78] sm:$0xf]
      %v5634 = vld [vmem:[%s2609 + $0x7c] sm:$0xf]
      %v5635 = vld [vmem:[%s2609 + $0x84] sm:$0xf]
      %v5636 = vld [vmem:[%s2609 + $0x88] sm:$0xf]
      %v5637 = vld [vmem:[%s2609 + $0x90] sm:$0xf]
      %v5638 = vld [vmem:[%s2609 + $0x94] sm:$0xf]
      %v5639 = vld [vmem:[%s2609 + $0x9c] sm:$0xf]
      %v5640 = vld [vmem:[%s2609 + $0xa0] sm:$0xf]
      %v5641 = vld [vmem:[%s2609 + $0xa8] sm:$0xf]
      %v5642 = vld [vmem:[%s2609 + $0xac] sm:$0xf]
      %v5643 = vld [vmem:[%s2609 + $0xb4] sm:$0xf]
      %v5644 = vld [vmem:[%s2609 + $0xb8] sm:$0xf]
      %v5645 = vld [vmem:[%s2642] sm:$0xf]
      %v5646 = vld [vmem:[%s2642 + $0x4] sm:$0xf]
      %v5647 = vld [vmem:[%s2642 + $0xc] sm:$0xf]
      %v5648 = vld [vmem:[%s2642 + $0x10] sm:$0xf]
      %v5649 = vld [vmem:[%s2642 + $0x18] sm:$0xf]
      %v5650 = vld [vmem:[%s2642 + $0x1c] sm:$0xf]
      %v5651 = vld [vmem:[%s2642 + $0x24] sm:$0xf]
      %v5652 = vld [vmem:[%s2642 + $0x28] sm:$0xf]
      %v5653 = vld [vmem:[%s2642 + $0x30] sm:$0xf]
      %v5654 = vld [vmem:[%s2642 + $0x34] sm:$0xf]
      %v5655 = vld [vmem:[%s2642 + $0x3c] sm:$0xf]
      %v5656 = vld [vmem:[%s2642 + $0x40] sm:$0xf]
      %v5657 = vld [vmem:[%s2642 + $0x48] sm:$0xf]
      %v5658 = vld [vmem:[%s2642 + $0x4c] sm:$0xf]
      %v5659 = vld [vmem:[%s2642 + $0x54] sm:$0xf]
      %v5660 = vld [vmem:[%s2642 + $0x58] sm:$0xf]
      %v5661 = vld [vmem:[%s2642 + $0x60] sm:$0xf]
      %v5662 = vld [vmem:[%s2642 + $0x64] sm:$0xf]
      %v5663 = vld [vmem:[%s2642 + $0x6c] sm:$0xf]
      %v5664 = vld [vmem:[%s2642 + $0x70] sm:$0xf]
      %v5665 = vld [vmem:[%s2642 + $0x78] sm:$0xf]
      %v5666 = vld [vmem:[%s2642 + $0x7c] sm:$0xf]
      %v5667 = vld [vmem:[%s2642 + $0x84] sm:$0xf]
      %v5668 = vld [vmem:[%s2642 + $0x88] sm:$0xf]
      %v5669 = vld [vmem:[%s2642 + $0x90] sm:$0xf]
      %v5670 = vld [vmem:[%s2642 + $0x94] sm:$0xf]
      %v5671 = vld [vmem:[%s2642 + $0x9c] sm:$0xf]
      %v5672 = vld [vmem:[%s2642 + $0xa0] sm:$0xf]
      %v5673 = vld [vmem:[%s2642 + $0xa8] sm:$0xf]
      %v5674 = vld [vmem:[%s2642 + $0xac] sm:$0xf]
      %v5675 = vld [vmem:[%s2642 + $0xb4] sm:$0xf]
      %v5676 = vld [vmem:[%s2642 + $0xb8] sm:$0xf]
      %v5677 = vld [vmem:[%s2675] sm:$0xf]
      %v5678 = vld [vmem:[%s2675 + $0x4] sm:$0xf]
      %v5679 = vld [vmem:[%s2675 + $0xc] sm:$0xf]
      %v5680 = vld [vmem:[%s2675 + $0x10] sm:$0xf]
      %v5681 = vld [vmem:[%s2675 + $0x18] sm:$0xf]
      %v5682 = vld [vmem:[%s2675 + $0x1c] sm:$0xf]
      %v5683 = vld [vmem:[%s2675 + $0x24] sm:$0xf]
      %v5684 = vld [vmem:[%s2675 + $0x28] sm:$0xf]
      %v5685 = vld [vmem:[%s2675 + $0x30] sm:$0xf]
      %v5686 = vld [vmem:[%s2675 + $0x34] sm:$0xf]
      %v5687 = vld [vmem:[%s2675 + $0x3c] sm:$0xf]
      %v5688 = vld [vmem:[%s2675 + $0x40] sm:$0xf]
      %v5689 = vld [vmem:[%s2675 + $0x48] sm:$0xf]
      %v5690 = vld [vmem:[%s2675 + $0x4c] sm:$0xf]
      %v5691 = vld [vmem:[%s2675 + $0x54] sm:$0xf]
      %v5692 = vld [vmem:[%s2675 + $0x58] sm:$0xf]
      %v5693 = vld [vmem:[%s2675 + $0x60] sm:$0xf]
      %v5694 = vld [vmem:[%s2675 + $0x64] sm:$0xf]
      %v5695 = vld [vmem:[%s2675 + $0x6c] sm:$0xf]
      %v5696 = vld [vmem:[%s2675 + $0x70] sm:$0xf]
      %v5697 = vld [vmem:[%s2675 + $0x78] sm:$0xf]
      %v5698 = vld [vmem:[%s2675 + $0x7c] sm:$0xf]
      %v5699 = vld [vmem:[%s2675 + $0x84] sm:$0xf]
      %v5700 = vld [vmem:[%s2675 + $0x88] sm:$0xf]
      %v5701 = vld [vmem:[%s2675 + $0x90] sm:$0xf]
      %v5702 = vld [vmem:[%s2675 + $0x94] sm:$0xf]
      %v5703 = vld [vmem:[%s2675 + $0x9c] sm:$0xf]
      %v5704 = vld [vmem:[%s2675 + $0xa0] sm:$0xf]
      %v5705 = vld [vmem:[%s2675 + $0xa8] sm:$0xf]
      %v5706 = vld [vmem:[%s2675 + $0xac] sm:$0xf]
      %v5707 = vld [vmem:[%s2675 + $0xb4] sm:$0xf]
      %v5708 = vld [vmem:[%s2675 + $0xb8] sm:$0xf]
      %v5741 = vunpack.c.l.b16 %v5613
      %v5742 = vunpack.c.l.b16 %v5614
      %v5743 = vunpack.c.l.b16 %v5615
      %v5744 = vunpack.c.l.b16 %v5616
      %v5745 = vunpack.c.l.b16 %v5617
      %v5746 = vunpack.c.l.b16 %v5618
      %v5747 = vunpack.c.l.b16 %v5619
      %v5748 = vunpack.c.l.b16 %v5620
      %v5749 = vunpack.c.l.b16 %v5621
      %v5750 = vunpack.c.l.b16 %v5622
      %v5751 = vunpack.c.l.b16 %v5623
      %v5752 = vunpack.c.l.b16 %v5624
      %v5753 = vunpack.c.l.b16 %v5625
      %v5754 = vunpack.c.l.b16 %v5626
      %v5755 = vunpack.c.l.b16 %v5627
      %v5756 = vunpack.c.l.b16 %v5628
      %v5757 = vunpack.c.l.b16 %v5629
      %v5758 = vunpack.c.l.b16 %v5630
      %v5759 = vunpack.c.l.b16 %v5631
      %v5760 = vunpack.c.l.b16 %v5632
      %v5761 = vunpack.c.l.b16 %v5633
      %v5762 = vunpack.c.l.b16 %v5634
      %v5763 = vunpack.c.l.b16 %v5635
      %v5764 = vunpack.c.l.b16 %v5636
      %v5765 = vunpack.c.l.b16 %v5637
      %v5766 = vunpack.c.l.b16 %v5638
      %v5767 = vunpack.c.l.b16 %v5639
      %v5768 = vunpack.c.l.b16 %v5640
      %v5769 = vunpack.c.l.b16 %v5641
      %v5770 = vunpack.c.l.b16 %v5642
      %v5771 = vunpack.c.l.b16 %v5643
      %v5772 = vunpack.c.l.b16 %v5644
      %v5773 = vpack.c.b16 %v5742, %v5741
      %v5774 = vpack.c.b16 %v5744, %v5743
      %v5775 = vpack.c.b16 %v5746, %v5745
      %v5776 = vpack.c.b16 %v5748, %v5747
      %v5777 = vpack.c.b16 %v5750, %v5749
      %v5778 = vpack.c.b16 %v5752, %v5751
      %v5779 = vpack.c.b16 %v5754, %v5753
      %v5780 = vpack.c.b16 %v5756, %v5755
      %v5781 = vpack.c.b16 %v5758, %v5757
      %v5782 = vpack.c.b16 %v5760, %v5759
      %v5783 = vpack.c.b16 %v5762, %v5761
      %v5784 = vpack.c.b16 %v5764, %v5763
      %v5785 = vpack.c.b16 %v5766, %v5765
      %v5786 = vpack.c.b16 %v5768, %v5767
      %v5787 = vpack.c.b16 %v5770, %v5769
      %v5788 = vpack.c.b16 %v5772, %v5771
      %v5821 = vunpack.c.l.b16 %v5645
      %v5822 = vunpack.c.l.b16 %v5646
      %v5823 = vunpack.c.l.b16 %v5647
      %v5824 = vunpack.c.l.b16 %v5648
      %v5825 = vunpack.c.l.b16 %v5649
      %v5826 = vunpack.c.l.b16 %v5650
      %v5827 = vunpack.c.l.b16 %v5651
      %v5828 = vunpack.c.l.b16 %v5652
      %v5829 = vunpack.c.l.b16 %v5653
      %v5830 = vunpack.c.l.b16 %v5654
      %v5831 = vunpack.c.l.b16 %v5655
      %v5832 = vunpack.c.l.b16 %v5656
      %v5833 = vunpack.c.l.b16 %v5657
      %v5834 = vunpack.c.l.b16 %v5658
      %v5835 = vunpack.c.l.b16 %v5659
      %v5836 = vunpack.c.l.b16 %v5660
      %v5837 = vunpack.c.l.b16 %v5661
      %v5838 = vunpack.c.l.b16 %v5662
      %v5839 = vunpack.c.l.b16 %v5663
      %v5840 = vunpack.c.l.b16 %v5664
      %v5841 = vunpack.c.l.b16 %v5665
      %v5842 = vunpack.c.l.b16 %v5666
      %v5843 = vunpack.c.l.b16 %v5667
      %v5844 = vunpack.c.l.b16 %v5668
      %v5845 = vunpack.c.l.b16 %v5669
      %v5846 = vunpack.c.l.b16 %v5670
      %v5847 = vunpack.c.l.b16 %v5671
      %v5848 = vunpack.c.l.b16 %v5672
      %v5849 = vunpack.c.l.b16 %v5673
      %v5850 = vunpack.c.l.b16 %v5674
      %v5851 = vunpack.c.l.b16 %v5675
      %v5852 = vunpack.c.l.b16 %v5676
      %v5853 = vpack.c.b16 %v5822, %v5821
      %v5854 = vpack.c.b16 %v5824, %v5823
      %v5855 = vpack.c.b16 %v5826, %v5825
      %v5856 = vpack.c.b16 %v5828, %v5827
      %v5857 = vpack.c.b16 %v5830, %v5829
      %v5858 = vpack.c.b16 %v5832, %v5831
      %v5859 = vpack.c.b16 %v5834, %v5833
      %v5860 = vpack.c.b16 %v5836, %v5835
      %v5861 = vpack.c.b16 %v5838, %v5837
      %v5862 = vpack.c.b16 %v5840, %v5839
      %v5863 = vpack.c.b16 %v5842, %v5841
      %v5864 = vpack.c.b16 %v5844, %v5843
      %v5865 = vpack.c.b16 %v5846, %v5845
      %v5866 = vpack.c.b16 %v5848, %v5847
      %v5867 = vpack.c.b16 %v5850, %v5849
      %v5868 = vpack.c.b16 %v5852, %v5851
      %5869 = vrot.lane.b32.xlu0 %v5853, 8
      %v5870 = vpop.permute.xlu0 %5869
      %5871 = vrot.lane.b32.xlu0 %v5854, 8
      %v5872 = vpop.permute.xlu0 %5871
      %5873 = vrot.lane.b32.xlu0 %v5855, 8
      %v5874 = vpop.permute.xlu0 %5873
      %5875 = vrot.lane.b32.xlu0 %v5856, 8
      %v5876 = vpop.permute.xlu0 %5875
      %5877 = vrot.lane.b32.xlu0 %v5857, 8
      %v5878 = vpop.permute.xlu0 %5877
      %5879 = vrot.lane.b32.xlu0 %v5858, 8
      %v5880 = vpop.permute.xlu0 %5879
      %5881 = vrot.lane.b32.xlu0 %v5859, 8
      %v5882 = vpop.permute.xlu0 %5881
      %5883 = vrot.lane.b32.xlu0 %v5860, 8
      %v5884 = vpop.permute.xlu0 %5883
      %5885 = vrot.lane.b32.xlu0 %v5861, 8
      %v5886 = vpop.permute.xlu0 %5885
      %5887 = vrot.lane.b32.xlu0 %v5862, 8
      %v5888 = vpop.permute.xlu0 %5887
      %5889 = vrot.lane.b32.xlu0 %v5863, 8
      %v5890 = vpop.permute.xlu0 %5889
      %5891 = vrot.lane.b32.xlu0 %v5864, 8
      %v5892 = vpop.permute.xlu0 %5891
      %5893 = vrot.lane.b32.xlu0 %v5865, 8
      %v5894 = vpop.permute.xlu0 %5893
      %5895 = vrot.lane.b32.xlu0 %v5866, 8
      %v5896 = vpop.permute.xlu0 %5895
      %5897 = vrot.lane.b32.xlu0 %v5867, 8
      %v5898 = vpop.permute.xlu0 %5897
      %5899 = vrot.lane.b32.xlu0 %v5868, 8
      %v5900 = vpop.permute.xlu0 %5899
      %v5933 = vunpack.c.l.b16 %v5677
      %v5934 = vunpack.c.l.b16 %v5678
      %v5935 = vunpack.c.l.b16 %v5679
      %v5936 = vunpack.c.l.b16 %v5680
      %v5937 = vunpack.c.l.b16 %v5681
      %v5938 = vunpack.c.l.b16 %v5682
      %v5939 = vunpack.c.l.b16 %v5683
      %v5940 = vunpack.c.l.b16 %v5684
      %v5941 = vunpack.c.l.b16 %v5685
      %v5942 = vunpack.c.l.b16 %v5686
      %v5943 = vunpack.c.l.b16 %v5687
      %v5944 = vunpack.c.l.b16 %v5688
      %v5945 = vunpack.c.l.b16 %v5689
      %v5946 = vunpack.c.l.b16 %v5690
      %v5947 = vunpack.c.l.b16 %v5691
      %v5948 = vunpack.c.l.b16 %v5692
      %v5949 = vunpack.c.l.b16 %v5693
      %v5950 = vunpack.c.l.b16 %v5694
      %v5951 = vunpack.c.l.b16 %v5695
      %v5952 = vunpack.c.l.b16 %v5696
      %v5953 = vunpack.c.l.b16 %v5697
      %v5954 = vunpack.c.l.b16 %v5698
      %v5955 = vunpack.c.l.b16 %v5699
      %v5956 = vunpack.c.l.b16 %v5700
      %v5957 = vunpack.c.l.b16 %v5701
      %v5958 = vunpack.c.l.b16 %v5702
      %v5959 = vunpack.c.l.b16 %v5703
      %v5960 = vunpack.c.l.b16 %v5704
      %v5961 = vunpack.c.l.b16 %v5705
      %v5962 = vunpack.c.l.b16 %v5706
      %v5963 = vunpack.c.l.b16 %v5707
      %v5964 = vunpack.c.l.b16 %v5708
      %v5965 = vpack.c.b16 %v5934, %v5933
      %v5966 = vpack.c.b16 %v5936, %v5935
      %v5967 = vpack.c.b16 %v5938, %v5937
      %v5968 = vpack.c.b16 %v5940, %v5939
      %v5969 = vpack.c.b16 %v5942, %v5941
      %v5970 = vpack.c.b16 %v5944, %v5943
      %v5971 = vpack.c.b16 %v5946, %v5945
      %v5972 = vpack.c.b16 %v5948, %v5947
      %v5973 = vpack.c.b16 %v5950, %v5949
      %v5974 = vpack.c.b16 %v5952, %v5951
      %v5975 = vpack.c.b16 %v5954, %v5953
      %v5976 = vpack.c.b16 %v5956, %v5955
      %v5977 = vpack.c.b16 %v5958, %v5957
      %v5978 = vpack.c.b16 %v5960, %v5959
      %v5979 = vpack.c.b16 %v5962, %v5961
      %v5980 = vpack.c.b16 %v5964, %v5963
      %5981 = vrot.lane.b32.xlu0 %v5965, 16
      %v5982 = vpop.permute.xlu0 %5981
      %5983 = vrot.lane.b32.xlu0 %v5966, 16
      %v5984 = vpop.permute.xlu0 %5983
      %5985 = vrot.lane.b32.xlu0 %v5967, 16
      %v5986 = vpop.permute.xlu0 %5985
      %5987 = vrot.lane.b32.xlu0 %v5968, 16
      %v5988 = vpop.permute.xlu0 %5987
      %5989 = vrot.lane.b32.xlu0 %v5969, 16
      %v5990 = vpop.permute.xlu0 %5989
      %5991 = vrot.lane.b32.xlu0 %v5970, 16
      %v5992 = vpop.permute.xlu0 %5991
      %5993 = vrot.lane.b32.xlu0 %v5971, 16
      %v5994 = vpop.permute.xlu0 %5993
      %5995 = vrot.lane.b32.xlu0 %v5972, 16
      %v5996 = vpop.permute.xlu0 %5995
      %5997 = vrot.lane.b32.xlu0 %v5973, 16
      %v5998 = vpop.permute.xlu0 %5997
      %5999 = vrot.lane.b32.xlu0 %v5974, 16
      %v6000 = vpop.permute.xlu0 %5999
      %6001 = vrot.lane.b32.xlu0 %v5975, 16
      %v6002 = vpop.permute.xlu0 %6001
      %6003 = vrot.lane.b32.xlu0 %v5976, 16
      %v6004 = vpop.permute.xlu0 %6003
      %6005 = vrot.lane.b32.xlu0 %v5977, 16
      %v6006 = vpop.permute.xlu0 %6005
      %6007 = vrot.lane.b32.xlu0 %v5978, 16
      %v6008 = vpop.permute.xlu0 %6007
      %6009 = vrot.lane.b32.xlu0 %v5979, 16
      %v6010 = vpop.permute.xlu0 %6009
      %6011 = vrot.lane.b32.xlu0 %v5980, 16
      %v6012 = vpop.permute.xlu0 %6011
      %v6015 = vsel %vm1628, %v5773, %v5870
      %v6018 = vsel %vm1628, %v5774, %v5872
      %v6021 = vsel %vm1628, %v5775, %v5874
      %v6024 = vsel %vm1628, %v5776, %v5876
      %v6027 = vsel %vm1628, %v5777, %v5878
      %v6030 = vsel %vm1628, %v5778, %v5880
      %v6033 = vsel %vm1628, %v5779, %v5882
      %v6036 = vsel %vm1628, %v5780, %v5884
      %v6039 = vsel %vm1628, %v5781, %v5886
      %v6042 = vsel %vm1628, %v5782, %v5888
      %v6045 = vsel %vm1628, %v5783, %v5890
      %v6048 = vsel %vm1628, %v5784, %v5892
      %v6051 = vsel %vm1628, %v5785, %v5894
      %v6054 = vsel %vm1628, %v5786, %v5896
      %v6057 = vsel %vm1628, %v5787, %v5898
      %v6060 = vsel %vm1628, %v5788, %v5900
      %v6062 = vsel %vm1677, %v6015, %v5982
      %v6064 = vsel %vm1677, %v6018, %v5984
      %v6066 = vsel %vm1677, %v6021, %v5986
      %v6068 = vsel %vm1677, %v6024, %v5988
      %v6070 = vsel %vm1677, %v6027, %v5990
      %v6072 = vsel %vm1677, %v6030, %v5992
      %v6074 = vsel %vm1677, %v6033, %v5994
      %v6076 = vsel %vm1677, %v6036, %v5996
      %v6078 = vsel %vm1677, %v6039, %v5998
      %v6080 = vsel %vm1677, %v6042, %v6000
      %v6082 = vsel %vm1677, %v6045, %v6002
      %v6084 = vsel %vm1677, %v6048, %v6004
      %v6086 = vsel %vm1677, %v6051, %v6006
      %v6088 = vsel %vm1677, %v6054, %v6008
      %v6090 = vsel %vm1677, %v6057, %v6010
      %v6092 = vsel %vm1677, %v6060, %v6012
      %s6093 = scalar_lea.vmem %s3, 24
      %v6094 = vld [vmem:[%s6093] sm:$0xf]
      %v6095 = vld [vmem:[%s6093 + $0x4] sm:$0xf]
      %v6096 = vld [vmem:[%s6093 + $0x8] sm:$0xf]
      %v6100 = vunpack.c.l.b16 %v6094
      %v6101 = vunpack.c.l.b16 %v6095
      %v6102 = vunpack.c.l.b16 %v6096
      %v6103 = vpack.c.b16 %v6101, %v6100
      %v6104 = vpack.c.b16 %v6102, %v6102
      %v6106 = vsel %vm2206, %v6062, 0
      %v6108 = vsel %vm2206, %v6064, 0
      %v6110 = vsel %vm2206, %v6066, 0
      %v6112 = vsel %vm2206, %v6068, 0
      %v6114 = vsel %vm2206, %v6070, 0
      %v6116 = vsel %vm2206, %v6072, 0
      %v6118 = vsel %vm2206, %v6074, 0
      %v6120 = vsel %vm2206, %v6076, 0
      %v6122 = vsel %vm2206, %v6078, 0
      %v6124 = vsel %vm2206, %v6080, 0
      %v6126 = vsel %vm2206, %v6082, 0
      %v6128 = vsel %vm2206, %v6084, 0
      %v6130 = vsel %vm2206, %v6086, 0
      %v6132 = vsel %vm2206, %v6088, 0
      %v6134 = vsel %vm2206, %v6090, 0
      %v6136 = vsel %vm2206, %v6092, 0
      %v6139 = vsel %vm2239, %v6104, 0
      %6141 = vmatprep.subr.bf16.mxu0 0
      %6142 = vmatpush1.bf16.msra.mxu0 %v6103
      %6143 = vmatprep.subr.bf16.mxu0 0
      %6144 = vmatpush1.bf16.msra.mxu0 %v6139
      %6145 = vmatprep.subr.bf16.mxu0 0
      %6146 = vmatpush1.bf16.msra.mxu0 0
      %6147 = vmatprep.subr.bf16.mxu0 0
      %6148 = vmatpush1.bf16.msra.mxu0 0
      %6149 = vmatprep.subr.bf16.mxu0 0
      %6150 = vmatpush1.bf16.msra.mxu0 0
      %6151 = vmatprep.subr.bf16.mxu0 0
      %6152 = vmatpush1.bf16.msra.mxu0 0
      %6153 = vmatprep.subr.bf16.mxu0 0
      %6154 = vmatpush1.bf16.msra.mxu0 0
      %6155 = vmatprep.subr.bf16.mxu0 0
      %6156 = vmatpush1.bf16.msra.mxu0 0
      %6157 = vmatprep.subr.bf16.mxu0 0
      %6158 = vmatpush1.bf16.msra.mxu0 0
      %6159 = vmatprep.subr.bf16.mxu0 0
      %6160 = vmatpush1.bf16.msra.mxu0 0
      %6161 = vmatprep.subr.bf16.mxu0 0
      %6162 = vmatpush1.bf16.msra.mxu0 0
      %6163 = vmatprep.subr.bf16.mxu0 0
      %6164 = vmatpush1.bf16.msra.mxu0 0
      %6165 = vmatprep.subr.bf16.mxu0 0
      %6166 = vmatpush1.bf16.msra.mxu0 0
      %6167 = vmatprep.subr.bf16.mxu0 0
      %6168 = vmatpush1.bf16.msra.mxu0 0
      %6169 = vmatprep.subr.bf16.mxu0 0
      %6170 = vmatpush1.bf16.msra.mxu0 0
      %6171 = vmatprep.subr.bf16.mxu0 0
      %6172 = vmatpush1.bf16.msra.mxu0 0
      %6173 = vmatprep.mubr.bf16.mxu0 0
      %6174 = vmatmul.mubr.bf16.gmra.mrb[0].mxu0 %v6106
      %v6175 = vpop.f32.mrb[0].mxu0
      %v6176 = vadd.f32 0.0, %v6175
      %v6177 = vpop.f32.mrb[0].mxu0
      %v6178 = vpop.f32.mrb[0].mxu0
      %v6179 = vadd.f32 0.0, %v6178
      %v6180 = vpop.f32.mrb[0].mxu0
      %6181 = vmatprep.mubr.bf16.mxu0 0
      %6182 = vmatmul.mubr.bf16.gmra.mrb[0].mxu0 %v6108
      %v6183 = vpop.f32.mrb[0].mxu0
      %v6184 = vadd.f32 0.0, %v6183
      %v6185 = vpop.f32.mrb[0].mxu0
      %v6186 = vpop.f32.mrb[0].mxu0
      %v6187 = vadd.f32 0.0, %v6186
      %v6188 = vpop.f32.mrb[0].mxu0
      %6189 = vmatprep.mubr.bf16.mxu0 0
      %6190 = vmatmul.mubr.bf16.gmra.mrb[0].mxu0 %v6110
      %v6191 = vpop.f32.mrb[0].mxu0
      %v6192 = vadd.f32 0.0, %v6191
      %v6193 = vpop.f32.mrb[0].mxu0
      %v6194 = vpop.f32.mrb[0].mxu0
      %v6195 = vadd.f32 0.0, %v6194
      %v6196 = vpop.f32.mrb[0].mxu0
      %6197 = vmatprep.mubr.bf16.mxu0 0
      %6198 = vmatmul.mubr.bf16.gmra.mrb[0].mxu0 %v6112
      %v6199 = vpop.f32.mrb[0].mxu0
      %v6200 = vadd.f32 0.0, %v6199
      %v6201 = vpop.f32.mrb[0].mxu0
      %v6202 = vpop.f32.mrb[0].mxu0
      %v6203 = vadd.f32 0.0, %v6202
      %v6204 = vpop.f32.mrb[0].mxu0
      %6205 = vmatprep.mubr.bf16.mxu0 0
      %6206 = vmatmul.mubr.bf16.gmra.mrb[0].mxu0 %v6114
      %v6207 = vpop.f32.mrb[0].mxu0
      %v6208 = vadd.f32 0.0, %v6207
      %v6209 = vpop.f32.mrb[0].mxu0
      %v6210 = vpop.f32.mrb[0].mxu0
      %v6211 = vadd.f32 0.0, %v6210
      %v6212 = vpop.f32.mrb[0].mxu0
      %6213 = vmatprep.mubr.bf16.mxu0 0
      %6214 = vmatmul.mubr.bf16.gmra.mrb[0].mxu0 %v6116
      %v6215 = vpop.f32.mrb[0].mxu0
      %v6216 = vadd.f32 0.0, %v6215
      %v6217 = vpop.f32.mrb[0].mxu0
      %v6218 = vpop.f32.mrb[0].mxu0
      %v6219 = vadd.f32 0.0, %v6218
      %v6220 = vpop.f32.mrb[0].mxu0
      %6221 = vmatprep.mubr.bf16.mxu0 0
      %6222 = vmatmul.mubr.bf16.gmra.mrb[0].mxu0 %v6118
      %v6223 = vpop.f32.mrb[0].mxu0
      %v6224 = vadd.f32 0.0, %v6223
      %v6225 = vpop.f32.mrb[0].mxu0
      %v6226 = vpop.f32.mrb[0].mxu0
      %v6227 = vadd.f32 0.0, %v6226
      %v6228 = vpop.f32.mrb[0].mxu0
      %6229 = vmatprep.mubr.bf16.mxu0 0
      %6230 = vmatmul.mubr.bf16.gmra.mrb[0].mxu0 %v6120
      %v6231 = vpop.f32.mrb[0].mxu0
      %v6232 = vadd.f32 0.0, %v6231
      %v6233 = vpop.f32.mrb[0].mxu0
      %v6234 = vpop.f32.mrb[0].mxu0
      %v6235 = vadd.f32 0.0, %v6234
      %v6236 = vpop.f32.mrb[0].mxu0
      %6237 = vmatprep.mubr.bf16.mxu0 0
      %6238 = vmatmul.mubr.bf16.gmra.mrb[0].mxu0 %v6122
      %v6239 = vpop.f32.mrb[0].mxu0
      %v6240 = vadd.f32 0.0, %v6239
      %v6241 = vpop.f32.mrb[0].mxu0
      %v6242 = vpop.f32.mrb[0].mxu0
      %v6243 = vadd.f32 0.0, %v6242
      %v6244 = vpop.f32.mrb[0].mxu0
      %6245 = vmatprep.mubr.bf16.mxu0 0
      %6246 = vmatmul.mubr.bf16.gmra.mrb[0].mxu0 %v6124
      %v6247 = vpop.f32.mrb[0].mxu0
      %v6248 = vadd.f32 0.0, %v6247
      %v6249 = vpop.f32.mrb[0].mxu0
      %v6250 = vpop.f32.mrb[0].mxu0
      %v6251 = vadd.f32 0.0, %v6250
      %v6252 = vpop.f32.mrb[0].mxu0
      %6253 = vmatprep.mubr.bf16.mxu0 0
      %6254 = vmatmul.mubr.bf16.gmra.mrb[0].mxu0 %v6126
      %v6255 = vpop.f32.mrb[0].mxu0
      %v6256 = vadd.f32 0.0, %v6255
      %v6257 = vpop.f32.mrb[0].mxu0
      %v6258 = vpop.f32.mrb[0].mxu0
      %v6259 = vadd.f32 0.0, %v6258
      %v6260 = vpop.f32.mrb[0].mxu0
      %6261 = vmatprep.mubr.bf16.mxu0 0
      %6262 = vmatmul.mubr.bf16.gmra.mrb[0].mxu0 %v6128
      %v6263 = vpop.f32.mrb[0].mxu0
      %v6264 = vadd.f32 0.0, %v6263
      %v6265 = vpop.f32.mrb[0].mxu0
      %v6266 = vpop.f32.mrb[0].mxu0
      %v6267 = vadd.f32 0.0, %v6266
      %v6268 = vpop.f32.mrb[0].mxu0
      %6269 = vmatprep.mubr.bf16.mxu0 0
      %6270 = vmatmul.mubr.bf16.gmra.mrb[0].mxu0 %v6130
      %v6271 = vpop.f32.mrb[0].mxu0
      %v6272 = vadd.f32 0.0, %v6271
      %v6273 = vpop.f32.mrb[0].mxu0
      %v6274 = vpop.f32.mrb[0].mxu0
      %v6275 = vadd.f32 0.0, %v6274
      %v6276 = vpop.f32.mrb[0].mxu0
      %6277 = vmatprep.mubr.bf16.mxu0 0
      %6278 = vmatmul.mubr.bf16.gmra.mrb[0].mxu0 %v6132
      %v6279 = vpop.f32.mrb[0].mxu0
      %v6280 = vadd.f32 0.0, %v6279
      %v6281 = vpop.f32.mrb[0].mxu0
      %v6282 = vpop.f32.mrb[0].mxu0
      %v6283 = vadd.f32 0.0, %v6282
      %v6284 = vpop.f32.mrb[0].mxu0
      %6285 = vmatprep.mubr.bf16.mxu0 0
      %6286 = vmatmul.mubr.bf16.gmra.mrb[0].mxu0 %v6134
      %v6287 = vpop.f32.mrb[0].mxu0
      %v6288 = vadd.f32 0.0, %v6287
      %v6289 = vpop.f32.mrb[0].mxu0
      %v6290 = vpop.f32.mrb[0].mxu0
      %v6291 = vadd.f32 0.0, %v6290
      %v6292 = vpop.f32.mrb[0].mxu0
      %6293 = vmatprep.mubr.bf16.mxu0 0
      %6294 = vmatmul.mubr.bf16.gmra.mrb[0].mxu0 %v6136
      %v6295 = vpop.f32.mrb[0].mxu0
      %v6296 = vadd.f32 0.0, %v6295
      %v6297 = vpop.f32.mrb[0].mxu0
      %v6298 = vpop.f32.mrb[0].mxu0
      %v6299 = vadd.f32 0.0, %v6298
      %v6300 = vpop.f32.mrb[0].mxu0
      %6301 = vdwg.mxu0
      %v6302 = vadd.f32 %v5487, %v6176
      %v6303 = vadd.f32 %v5490, %v6179
      %v6304 = vadd.f32 %v5495, %v6184
      %v6305 = vadd.f32 %v5498, %v6187
      %v6306 = vadd.f32 %v5503, %v6192
      %v6307 = vadd.f32 %v5506, %v6195
      %v6308 = vadd.f32 %v5511, %v6200
      %v6309 = vadd.f32 %v5514, %v6203
      %v6310 = vadd.f32 %v5519, %v6208
      %v6311 = vadd.f32 %v5522, %v6211
      %v6312 = vadd.f32 %v5527, %v6216
      %v6313 = vadd.f32 %v5530, %v6219
      %v6314 = vadd.f32 %v5535, %v6224
      %v6315 = vadd.f32 %v5538, %v6227
      %v6316 = vadd.f32 %v5543, %v6232
      %v6317 = vadd.f32 %v5546, %v6235
      %v6318 = vadd.f32 %v5551, %v6240
      %v6319 = vadd.f32 %v5554, %v6243
      %v6320 = vadd.f32 %v5559, %v6248
      %v6321 = vadd.f32 %v5562, %v6251
      %v6322 = vadd.f32 %v5567, %v6256
      %v6323 = vadd.f32 %v5570, %v6259
      %v6324 = vadd.f32 %v5575, %v6264
      %v6325 = vadd.f32 %v5578, %v6267
      %v6326 = vadd.f32 %v5583, %v6272
      %v6327 = vadd.f32 %v5586, %v6275
      %v6328 = vadd.f32 %v5591, %v6280
      %v6329 = vadd.f32 %v5594, %v6283
      %v6330 = vadd.f32 %v5599, %v6288
      %v6331 = vadd.f32 %v5602, %v6291
      %v6332 = vadd.f32 %v5607, %v6296
      %v6333 = vadd.f32 %v5610, %v6299
      %v6334 = vld [vmem:[%s4] sm:$0x1]
      %v6336 = vlaneseq
      %v6337 = vshrl.u32 %v6336, 7
      %v6338 = vsub.s32 0, %v6337
      %v6339 = vrot.slane %v6334, %v6338
      %v6341 = vadd.f32 %v6302, %v6339
      %v6342 = vadd.f32 %v6303, %v6339
      %v6343 = vadd.f32 %v6304, %v6339
      %v6344 = vadd.f32 %v6305, %v6339
      %v6345 = vadd.f32 %v6306, %v6339
      %v6346 = vadd.f32 %v6307, %v6339
      %v6347 = vadd.f32 %v6308, %v6339
      %v6348 = vadd.f32 %v6309, %v6339
      %v6349 = vadd.f32 %v6310, %v6339
      %v6350 = vadd.f32 %v6311, %v6339
      %v6351 = vadd.f32 %v6312, %v6339
      %v6352 = vadd.f32 %v6313, %v6339
      %v6353 = vadd.f32 %v6314, %v6339
      %v6354 = vadd.f32 %v6315, %v6339
      %v6355 = vadd.f32 %v6316, %v6339
      %v6356 = vadd.f32 %v6317, %v6339
      %v6357 = vadd.f32 %v6318, %v6339
      %v6358 = vadd.f32 %v6319, %v6339
      %v6359 = vadd.f32 %v6320, %v6339
      %v6360 = vadd.f32 %v6321, %v6339
      %v6361 = vadd.f32 %v6322, %v6339
      %v6362 = vadd.f32 %v6323, %v6339
      %v6363 = vadd.f32 %v6324, %v6339
      %v6364 = vadd.f32 %v6325, %v6339
      %v6365 = vadd.f32 %v6326, %v6339
      %v6366 = vadd.f32 %v6327, %v6339
      %v6367 = vadd.f32 %v6328, %v6339
      %v6368 = vadd.f32 %v6329, %v6339
      %v6369 = vadd.f32 %v6330, %v6339
      %v6370 = vadd.f32 %v6331, %v6339
      %v6371 = vadd.f32 %v6332, %v6339
      %v6372 = vadd.f32 %v6333, %v6339
      %v6373 = vadd.f32 %v6341, %v354
      %v6374 = vadd.f32 %v6342, %v355
      %v6375 = vadd.f32 %v6343, %v356
      %v6376 = vadd.f32 %v6344, %v357
      %v6377 = vadd.f32 %v6345, %v358
      %v6378 = vadd.f32 %v6346, %v359
      %v6379 = vadd.f32 %v6347, %v360
      %v6380 = vadd.f32 %v6348, %v361
      %v6381 = vadd.f32 %v6349, %v362
      %v6382 = vadd.f32 %v6350, %v363
      %v6383 = vadd.f32 %v6351, %v364
      %v6384 = vadd.f32 %v6352, %v365
      %v6385 = vadd.f32 %v6353, %v366
      %v6386 = vadd.f32 %v6354, %v367
      %v6387 = vadd.f32 %v6355, %v368
      %v6388 = vadd.f32 %v6356, %v369
      %v6389 = vadd.f32 %v6357, %v370
      %v6390 = vadd.f32 %v6358, %v371
      %v6391 = vadd.f32 %v6359, %v372
      %v6392 = vadd.f32 %v6360, %v373
      %v6393 = vadd.f32 %v6361, %v374
      %v6394 = vadd.f32 %v6362, %v375
      %v6395 = vadd.f32 %v6363, %v376
      %v6396 = vadd.f32 %v6364, %v377
      %v6397 = vadd.f32 %v6365, %v378
      %v6398 = vadd.f32 %v6366, %v379
      %v6399 = vadd.f32 %v6367, %v380
      %v6400 = vadd.f32 %v6368, %v381
      %v6401 = vadd.f32 %v6369, %v382
      %v6402 = vadd.f32 %v6370, %v383
      %v6403 = vadd.f32 %v6371, %v384
      %v6404 = vadd.f32 %v6372, %v385
      %v6405 = vmax.f32 %v6373, 0.0
      %v6406 = vmax.f32 %v6374, 0.0
      %v6407 = vmax.f32 %v6375, 0.0
      %v6408 = vmax.f32 %v6376, 0.0
      %v6409 = vmax.f32 %v6377, 0.0
      %v6410 = vmax.f32 %v6378, 0.0
      %v6411 = vmax.f32 %v6379, 0.0
      %v6412 = vmax.f32 %v6380, 0.0
      %v6413 = vmax.f32 %v6381, 0.0
      %v6414 = vmax.f32 %v6382, 0.0
      %v6415 = vmax.f32 %v6383, 0.0
      %v6416 = vmax.f32 %v6384, 0.0
      %v6417 = vmax.f32 %v6385, 0.0
      %v6418 = vmax.f32 %v6386, 0.0
      %v6419 = vmax.f32 %v6387, 0.0
      %v6420 = vmax.f32 %v6388, 0.0
      %v6421 = vmax.f32 %v6389, 0.0
      %v6422 = vmax.f32 %v6390, 0.0
      %v6423 = vmax.f32 %v6391, 0.0
      %v6424 = vmax.f32 %v6392, 0.0
      %v6425 = vmax.f32 %v6393, 0.0
      %v6426 = vmax.f32 %v6394, 0.0
      %v6427 = vmax.f32 %v6395, 0.0
      %v6428 = vmax.f32 %v6396, 0.0
      %v6429 = vmax.f32 %v6397, 0.0
      %v6430 = vmax.f32 %v6398, 0.0
      %v6431 = vmax.f32 %v6399, 0.0
      %v6432 = vmax.f32 %v6400, 0.0
      %v6433 = vmax.f32 %v6401, 0.0
      %v6434 = vmax.f32 %v6402, 0.0
      %v6435 = vmax.f32 %v6403, 0.0
      %v6436 = vmax.f32 %v6404, 0.0
      %6437 = vst.msk [vmem:[%s224] sm:$0xff] %vm1628, %v6405
      %6438 = vst.msk [vmem:[%s224 + $0x8] sm:$0xff] %vm1628, %v6406
      %6439 = vst.msk [vmem:[%s224 + $0x10] sm:$0xff] %vm1628, %v6407
      %6440 = vst.msk [vmem:[%s224 + $0x18] sm:$0xff] %vm1628, %v6408
      %6441 = vst.msk [vmem:[%s224 + $0x20] sm:$0xff] %vm1628, %v6409
      %6442 = vst.msk [vmem:[%s224 + $0x28] sm:$0xff] %vm1628, %v6410
      %6443 = vst.msk [vmem:[%s224 + $0x30] sm:$0xff] %vm1628, %v6411
      %6444 = vst.msk [vmem:[%s224 + $0x38] sm:$0xff] %vm1628, %v6412
      %6445 = vst.msk [vmem:[%s224 + $0x40] sm:$0xff] %vm1628, %v6413
      %6446 = vst.msk [vmem:[%s224 + $0x48] sm:$0xff] %vm1628, %v6414
      %6447 = vst.msk [vmem:[%s224 + $0x50] sm:$0xff] %vm1628, %v6415
      %6448 = vst.msk [vmem:[%s224 + $0x58] sm:$0xff] %vm1628, %v6416
      %6449 = vst.msk [vmem:[%s224 + $0x60] sm:$0xff] %vm1628, %v6417
      %6450 = vst.msk [vmem:[%s224 + $0x68] sm:$0xff] %vm1628, %v6418
      %6451 = vst.msk [vmem:[%s224 + $0x70] sm:$0xff] %vm1628, %v6419
      %6452 = vst.msk [vmem:[%s224 + $0x78] sm:$0xff] %vm1628, %v6420
      %6453 = vst.msk [vmem:[%s224 + $0x80] sm:$0xff] %vm1628, %v6421
      %6454 = vst.msk [vmem:[%s224 + $0x88] sm:$0xff] %vm1628, %v6422
      %6455 = vst.msk [vmem:[%s224 + $0x90] sm:$0xff] %vm1628, %v6423
      %6456 = vst.msk [vmem:[%s224 + $0x98] sm:$0xff] %vm1628, %v6424
      %6457 = vst.msk [vmem:[%s224 + $0xa0] sm:$0xff] %vm1628, %v6425
      %6458 = vst.msk [vmem:[%s224 + $0xa8] sm:$0xff] %vm1628, %v6426
      %6459 = vst.msk [vmem:[%s224 + $0xb0] sm:$0xff] %vm1628, %v6427
      %6460 = vst.msk [vmem:[%s224 + $0xb8] sm:$0xff] %vm1628, %v6428
      %6461 = vst.msk [vmem:[%s224 + $0xc0] sm:$0xff] %vm1628, %v6429
      %6462 = vst.msk [vmem:[%s224 + $0xc8] sm:$0xff] %vm1628, %v6430
      %6463 = vst.msk [vmem:[%s224 + $0xd0] sm:$0xff] %vm1628, %v6431
      %6464 = vst.msk [vmem:[%s224 + $0xd8] sm:$0xff] %vm1628, %v6432
      %6465 = vst.msk [vmem:[%s224 + $0xe0] sm:$0xff] %vm1628, %v6433
      %6466 = vst.msk [vmem:[%s224 + $0xe8] sm:$0xff] %vm1628, %v6434
      %6467 = vst.msk [vmem:[%s224 + $0xf0] sm:$0xff] %vm1628, %v6435
      %6468 = vst.msk [vmem:[%s224 + $0xf8] sm:$0xff] %vm1628, %v6436
      %p6469 = scmp.lt.s32.totalorder %s16, 1
      %s6470 = scalar_select %p6469, %s16, 1
      %s6471 = smul.addr %s6470, 32
      %s6472 = smul.addr %s6471, 8
      %s6473 = scalar_lea.vmem %s5, %s6472
      // Predicated region
      $region41: #{basic_block.1} parent=39 // pred_check
        %p6474 = pneg %p144
      $region42: #{basic_block.1} parent=39 // pred_check_branch
        %6476 = sbr.rel (%p6474) target = $region44
      $region43: #{basic_block.1} parent=39 // pred_region
        _
      $region44: #{basic_block.1} parent=39 // pred_fallthru
        _
    $region40: #{basic_block.1} parent=5 // pred_fallthru
      _
    %p6477 = scmp.le.s32.totalorder 2, %s11
    // Predicated region
    $region45: #{basic_block.1} parent=5 // pred_check
      %p6478 = pneg %p6477
    $region46: #{basic_block.1} parent=5 // pred_check_branch
      %6480 = sbr.rel (%p6478) target = $region48
    $region47: #{basic_block.1} parent=5 // pred_region
      %s6481 = ssub.s32 %s11, 2
      // Predicated region
      $region49: #{basic_block.1} parent=47 // pred_check
        %p6482 = pneg %p150
      $region50: #{basic_block.1} parent=47 // pred_check_branch
        %6484 = sbr.rel (%p6482) target = $region52
      $region51: #{basic_block.1} parent=47 // pred_region
        %p6485 = scmp.lt.s32.totalorder %s17, 1
        %s6486 = scalar_select %p6485, %s17, 1
        %s6487 = smul.addr %s6486, 32
        %s6488 = smul.addr %s6487, 8
        %s6489 = scalar_lea.vmem %s5, %s6488
      $region52: #{basic_block.1} parent=47 // pred_fallthru
        _
    $region48: #{basic_block.1} parent=5 // pred_fallthru
      _
  $region6: #{basic_block.1} parent=0 // loop_footer
    %s15 = sadd.s32 1, %s11
  $region7: #{basic_block.1} parent=0 // loop_footer_branch
    %10 = sbr.rel target = $region3
  $region8: #{basic_block.1} parent=0 // loop_exit
    _

</llo_original>
